<compile_context>
chip_gen: v6e
topology: v6e:2x2x1
jax: 0.10.0
libtpu: 0.0.40
codegen_flags: <defaults>
</compile_context>

<pallas_src>
import numpy as np
import jax
import jax.numpy as jnp
from jax.experimental import pallas as pl
from jax.experimental.pallas import tpu as pltpu

DOF = 6
G = 9.81
TB = 128  # time steps per grid iteration (lane-dense block width)

# ------------------------- angle helpers -------------------------
def pipi_np(x):
    return (x + np.pi) % (2.0 * np.pi) - np.pi

def pipi_jnp(x):
    return (x + jnp.pi) % (2.0 * jnp.pi) - jnp.pi

def to_positive_angle_jnp(x):
    return jnp.where(x < 0, x + 2.0 * jnp.pi, x)

# ------------------------- parameter build (setup glue, numpy) -------------------------
def build_params(N=16, n_cfg_freqs=12, n_headings=36):
    key = jax.random.PRNGKey(0)
    k1, k2, k3, k4, k5, k6 = jax.random.split(key, 6)

    wave_amps = np.asarray(jax.random.uniform(k1, (N,), minval=0.1, maxval=1.0), np.float32)
    freqs = np.linspace(0.3, 1.5, N).astype(np.float32)
    eps = np.asarray(jax.random.uniform(k2, (N,), minval=0.0, maxval=2 * np.pi), np.float32)
    angles = np.asarray(jax.random.uniform(k3, (N,), minval=0.0, maxval=2 * np.pi), np.float32)

    # synthetic "config file" content
    qtf_headings = np.deg2rad(np.arange(0, 360, 360 // n_headings)).astype(np.float32)   # (H,)
    qtf_freqs = np.linspace(0.2, 1.8, n_cfg_freqs).astype(np.float32)                    # (F,)
    drift_amp = np.asarray(jax.random.uniform(k4, (DOF, n_cfg_freqs, n_headings),
                                              minval=-1.0, maxval=1.0), np.float32)
    force_amp = np.asarray(jax.random.uniform(k5, (DOF, n_cfg_freqs, n_headings),
                                              minval=0.0, maxval=2.0), np.float32)
    force_phase = np.asarray(jax.random.uniform(k6, (DOF, n_cfg_freqs, n_headings),
                                                minval=-180.0, maxval=180.0), np.float32) * np.pi / 180.0

    # deep-water dispersion
    k_wave = (freqs ** 2 / G).astype(np.float32)

    # frequency / phase difference matrices
    W = (freqs[:, None] - freqs[None, :]).astype(np.float32)
    P = (eps[:, None] - eps[None, :]).astype(np.float32)

    # ---- _build_qtf_6dof (Newman, interpolate=True, qtf_interp_angles=True) ----
    if freqs[0] < qtf_freqs[0]:
        qtf_freqs_mod = np.concatenate([[0.0], qtf_freqs]).astype(np.float32)
        drift_mod = np.concatenate([np.zeros((DOF, 1, n_headings), np.float32), drift_amp], axis=1)
    else:
        qtf_freqs_mod = qtf_freqs
        drift_mod = drift_amp

    Qdiag = np.zeros((DOF, N, n_headings), np.float32)
    for d in range(DOF):
        for h in range(n_headings):
            Qdiag[d, :, h] = np.interp(freqs, qtf_freqs_mod, drift_mod[d, :, h])

    # NOTE: matches the torch module: linspace includes both endpoints (359 bins of 2pi/359).
    angles_1deg = np.linspace(0.0, 2.0 * np.pi, 360)
    Qdiag2 = np.zeros((DOF, N, 360), np.float32)
    for d in range(DOF):
        for iN in range(N):
            Qdiag2[d, iN] = np.interp(angles_1deg, qtf_headings, Qdiag[d, iN, :])

    Qdf = np.transpose(Qdiag2, (0, 2, 1))                       # (DOF, 360, N)
    Q = 0.5 * (Qdf[:, :, None, :] + Qdf[:, :, :, None])         # Newman approx -> (DOF, 360, N, N)
    Q[5] = Q[2].copy()
    Q[2] = 0.0
    Q = Q.astype(np.float32)

    # ---- _build_force_raos (interpolate=True) ----
    fAmp = np.zeros((DOF, N, n_headings), np.float32)
    fPhase = np.zeros_like(fAmp)
    for d in range(DOF):
        for h in range(n_headings):
            fAmp[d, :, h] = np.interp(freqs, qtf_freqs, force_amp[d, :, h])
            fPhase[d, :, h] = np.interp(freqs, qtf_freqs, force_phase[d, :, h])

    return dict(amp=wave_amps, freqs=freqs, eps=eps, angles=angles, k=k_wave,
                W=W, P=P, Q=Q, forceRAOamp=fAmp, forceRAOphase=fPhase,
                qtf_angles=qtf_headings)

# ------------------------- kernel-side packing (one-time setup, numpy) -------------------------
def pack_kernel_params(raw):
    amp = raw['amp']; freqs = raw['freqs']; eps = raw['eps']
    angles = raw['angles']; kw = raw['k']
    N = amp.shape[0]
    NN = N * N

    # first-order constants, column layout (N, 8): [freqs, k*cos(beta), k*sin(beta), eps, 0...]
    fo_const = np.zeros((N, 8), np.float32)
    fo_const[:, 0] = freqs
    fo_const[:, 1] = kw * np.cos(angles)
    fo_const[:, 2] = kw * np.sin(angles)
    fo_const[:, 3] = eps

    # lane-dense flattened second-order tables (2, NN) = [W.flatten, P.flatten]
    so_const = np.stack([raw['W'].reshape(NN), raw['P'].reshape(NN)], axis=0).astype(np.float32)

    # fold amp_j * amp_k into Q; flatten (N,N) onto lanes; pad DOF->8 sublanes
    q_amp = raw['Q'] * amp[None, None, :, None] * amp[None, None, None, :]             # (DOF, 360, N, N)
    q_flat = q_amp.reshape(DOF, q_amp.shape[1], NN).transpose(1, 0, 2)                 # (360, DOF, NN)
    q_pack = np.zeros((q_flat.shape[0], 8, NN), np.float32)
    q_pack[:, :DOF, :] = q_flat                                                        # (360, 8, NN)

    return dict(
        amp=jnp.asarray(amp), angles=jnp.asarray(angles),
        forceRAOamp=jnp.asarray(raw['forceRAOamp']),
        forceRAOphase=jnp.asarray(raw['forceRAOphase']),
        qtf_angles=jnp.asarray(raw['qtf_angles']),
        fo_const=jnp.asarray(fo_const),
        so_const=jnp.asarray(so_const),
        q_pack=jnp.asarray(q_pack),
    )

# ------------------------- Pallas kernel (one grid step = TB time steps) -------------------------
def wave_load_kernel(hidx_ref, txy_ref, tcol_ref, fo_ref, so_ref,
                     raoc_ref, raos_ref, q_ref, out_ref, o_scr):
    # hidx_ref : (T_pad,)     int32 SMEM  QTF heading bin per step (scalar prefetch)
    # txy_ref  : (8, TB)      f32  VMEM   rows 0..2 = t, x, y (steps on lanes)
    # tcol_ref : (TB, 1)      f32  VMEM   t again, steps on sublanes
    # fo_ref   : (N, 8)       f32  VMEM   cols = [freqs, k*cos(b), k*sin(b), eps, 0..] (resident)
    # so_ref   : (2, NN)      f32  VMEM   rows = [W.flatten, P.flatten]                (resident)
    # raoc_ref : (8, N, TB)   f32  VMEM   amp * |RAO| * cos(raoPhase)   (DOF padded to 8)
    # raos_ref : (8, N, TB)   f32  VMEM   amp * |RAO| * sin(raoPhase)
    # q_ref    : (360, 8, NN) f32  VMEM   QTF table, amp_j*amp_k folded (resident)
    # out_ref  : (8, TB)      f32         DOF on sublanes, steps on lanes (lane-dense)
    # o_scr    : (TB, NN)     f32  VMEM   cos(W*t + P) for every step of this block
    tb = out_ref.shape[1]
    ndof = out_ref.shape[0]
    blk = pl.program_id(0)
    base = blk * tb

    t_row = txy_ref[0:1, :]
    x_row = txy_ref[1:2, :]
    y_row = txy_ref[2:3, :]
    freqs_c = fo_ref[:, 0:1]
    kx_c = fo_ref[:, 1:2]
    ky_c = fo_ref[:, 2:3]
    eps_c = fo_ref[:, 3:4]

    # ---- first-order loads, vectorized across the block (steps on lanes) ----
    # TODO(synk): for very large simulation times t a float32 mod-2pi range reduction
    # of freqs*t (and W*t below) should be done before the trig (kept as-is to match
    # the module's semantics).
    wp = freqs_c * t_row - kx_c * x_row - ky_c * y_row - eps_c        # (N, TB)
    cos_wp = jnp.cos(wp)
    sin_wp = jnp.sin(wp)
    rows = []
    for d in range(ndof):                                             # static unroll over padded DOF
        rows.append(jnp.sum(raoc_ref[d] * cos_wp + raos_ref[d] * sin_wp,
                            axis=0, keepdims=True))                   # (1, TB)
    tau_wf = jnp.concatenate(rows, axis=0)                            # (8, TB)

    # ---- second-order slow drift: cos(W*t + P) for the whole block ----
    # TODO(synk): the exact rank-2 rewrite cos(Wt+P)=cos(th_j)cos(th_k)+sin(th_j)sin(th_k)
    # would cut these NN-wide cosines to 2N per step, but building the flattened outer
    # product needs either MXU expansion matmuls (bf16-pass precision risk) or
    # lane<->sublane relayout reshapes; kept the direct, numerically identical form.
    o_scr[...] = jnp.cos(tcol_ref[...] * so_ref[0:1, :] + so_ref[1:2, :])   # (TB, NN)

    lane_iota = jax.lax.broadcasted_iota(jnp.int32, (1, tb), 1)

    def body(s, acc):
        h = hidx_ref[base + s]                                        # scalar heading bin
        qs = q_ref[h]                                                 # (8, NN) in-VMEM gather
        orow = o_scr[pl.ds(s, 1), :]                                  # (1, NN)
        col = jnp.sum(qs * orow, axis=-1, keepdims=True)              # (8, 1)
        return acc + col * (lane_iota == s).astype(jnp.float32)       # scatter via one-hot

    out_ref[...] = jax.lax.fori_loop(0, tb, body, tau_wf)

# ------------------------- forward wrapper (glue + batched pallas_call) -------------------------
def wave_load_forward(ts, etas, kp):
    """ts: (T,) times, etas: (T, 6) poses -> (T, DOF) wave loads."""
    amp = kp['amp']; angles = kp['angles']
    raoA = kp['forceRAOamp']; raoP = kp['forceRAOphase']
    qtf_angles = kp['qtf_angles']
    fo_const = kp['fo_const']; so_const = kp['so_const']; q_pack = kp['q_pack']

    T = ts.shape[0]
    N = amp.shape[0]
    NN = N * N
    H = qtf_angles.shape[0]
    n_blocks = max(1, -(-T // TB))
    T_pad = n_blocks * TB

    heading = etas[:, 5]                                                                # (T,)
    rel_angle = to_positive_angle_jnp(pipi_jnp(angles[None, :] - heading[:, None]))     # (T, N)

    # --- _rao_interp: direct uniform 10-deg bin math + linear blend, amp folded ---
    rel_deg = rel_angle * (180.0 / jnp.pi)
    lb = jnp.clip(jnp.floor(rel_deg / 10.0).astype(jnp.int32), 0, H - 1)                # (T, N)
    ub = jnp.where(lb < H - 1, lb + 1, 0)
    fidx = jnp.arange(N)[None, :]
    amp_lb = raoA[:, fidx, lb]; amp_ub = raoA[:, fidx, ub]                              # (DOF, T, N)
    ph_lb = raoP[:, fidx, lb];  ph_ub = raoP[:, fidx, ub]
    theta1 = qtf_angles[lb]; theta2 = qtf_angles[ub]                                    # (T, N)
    diff_t = pipi_jnp(theta2 - theta1)
    diff_t = jnp.where(diff_t == 0, 1e-9, diff_t)
    scale = pipi_jnp(rel_angle - theta1) / diff_t                                       # (T, N)
    rao_amp = (amp_lb + (amp_ub - amp_lb) * scale[None]) * amp[None, None, :]           # (DOF, T, N)
    rao_phase = ph_lb + (ph_ub - ph_lb) * scale[None]
    rao_c = rao_amp * jnp.cos(rao_phase)                                                # cos/sin folded
    rao_s = rao_amp * jnp.sin(rao_phase)

    raoc_pack = jnp.zeros((8, N, T_pad), jnp.float32).at[:DOF, :, :T].set(
        jnp.transpose(rao_c, (0, 2, 1)))
    raos_pack = jnp.zeros((8, N, T_pad), jnp.float32).at[:DOF, :, :T].set(
        jnp.transpose(rao_s, (0, 2, 1)))

    # --- QTF heading bin (same semantics as torch: plain mean + linspace(0,2pi,360)) ---
    mean_angle = jnp.mean(rel_angle, axis=-1)                                           # (T,)
    h_idx = jnp.clip(jnp.round(mean_angle * (359.0 / (2.0 * jnp.pi))), 0, 359).astype(jnp.int32)
    # TODO(synk): at very large T the (T_pad,) scalar-prefetch array should be tiled
    # into SMEM blocks instead of living there whole.
    h_idx_pad = jnp.zeros((T_pad,), jnp.int32).at[:T].set(h_idx)

    txy = jnp.zeros((8, T_pad), jnp.float32)
    txy = txy.at[0, :T].set(ts).at[1, :T].set(etas[:, 0]).at[2, :T].set(etas[:, 1])
    t_col = jnp.zeros((T_pad, 1), jnp.float32).at[:T, 0].set(ts)

    grid_spec = pltpu.PrefetchScalarGridSpec(
        num_scalar_prefetch=1,
        grid=(n_blocks,),
        in_specs=[
            pl.BlockSpec((8, TB), lambda i, h: (0, i)),              # txy (steps on lanes)
            pl.BlockSpec((TB, 1), lambda i, h: (i, 0)),              # t column (steps on sublanes)
            pl.BlockSpec((N, 8), lambda i, h: (0, 0)),               # fo_const, resident
            pl.BlockSpec((2, NN), lambda i, h: (0, 0)),              # so_const, resident
            pl.BlockSpec((8, N, TB), lambda i, h: (0, 0, i)),        # rao cos slab
            pl.BlockSpec((8, N, TB), lambda i, h: (0, 0, i)),        # rao sin slab
            pl.BlockSpec((360, 8, NN), lambda i, h: (0, 0, 0)),      # full QTF table, VMEM resident
        ],
        out_specs=pl.BlockSpec((8, TB), lambda i, h: (0, i)),        # lane-dense output slab
        scratch_shapes=[pltpu.VMEM((TB, NN), jnp.float32)],
    )

    out = pl.pallas_call(
        wave_load_kernel,
        out_shape=jax.ShapeDtypeStruct((8, T_pad), jnp.float32),
        grid_spec=grid_spec,
        compiler_params=pltpu.CompilerParams(dimension_semantics=("parallel",)),
    )(h_idx_pad, txy, t_col, fo_const, so_const, raoc_pack, raos_pack, q_pack)

    return out[:DOF, :T].T                                                              # (T, DOF)

# ------------------------- pure numpy reference (per sample) -------------------------
def reference_forward(t, eta_np, p):
    angles = p['angles']; heading = eta_np[-1]
    rel = pipi_np(angles - heading)
    rel = np.where(rel < 0, rel + 2 * np.pi, rel)
    qtf_angles = p['qtf_angles']; H = qtf_angles.shape[0]; N = angles.shape[0]
    qtf_deg = qtf_angles * 180.0 / np.pi
    rel_deg = rel * 180.0 / np.pi
    bc = np.floor(rel_deg / 10.0) * 10.0
    lb = np.argmin(np.abs(qtf_deg[None, :] - bc[:, None]), axis=1)
    ub = np.where(lb < H - 1, lb + 1, 0)
    fidx = np.arange(N)
    A = p['forceRAOamp']; Ph = p['forceRAOphase']
    amp_lb = A[:, fidx, lb]; amp_ub = A[:, fidx, ub]
    ph_lb = Ph[:, fidx, lb]; ph_ub = Ph[:, fidx, ub]
    th1 = qtf_angles[lb]; th2 = qtf_angles[ub]
    dth = pipi_np(th2 - th1); dth = np.where(dth == 0, 1e-9, dth)
    sc = pipi_np(rel - th1) / dth
    rao_amp = amp_lb + (amp_ub - amp_lb) * sc[None]
    rao_ph = ph_lb + (ph_ub - ph_lb) * sc[None]
    x, y = eta_np[0], eta_np[1]
    wave_phase = p['freqs'] * t - p['k'] * x * np.cos(angles) - p['k'] * y * np.sin(angles) - p['eps']
    tau_wf = (rao_amp * np.cos(wave_phase[None] - rao_ph)) @ p['amp']
    mean_angle = np.mean(rel)
    a1deg = np.linspace(0.0, 2.0 * np.pi, 360)
    hidx = int(np.argmin(np.abs(a1deg - mean_angle)))
    Qs = p['Q'][:, hidx]
    exp_term = np.exp(1j * (p['W'] * t + p['P']))
    ampc = p['amp'].astype(np.complex128)
    tau_sv = np.array([np.real(ampc @ (Qs[d] * exp_term) @ ampc) for d in range(DOF)])
    return tau_wf + tau_sv

# ------------------------- main -------------------------
if __name__ == "__main__":
    N = 16
    T = 8
    raw = build_params(N=N)
    kp = pack_kernel_params(raw)

    ts_np = np.linspace(4.0, 36.0, T).astype(np.float32)
    etas_np = np.stack([
        np.linspace(-3.0, 3.0, T),       # x
        np.linspace(2.5, -2.5, T),       # y
        np.zeros(T),
        np.zeros(T),
        np.zeros(T),
        np.linspace(0.1, 2.9, T),        # heading
    ], axis=1).astype(np.float32)

    fwd = jax.jit(lambda tt, ee: wave_load_forward(tt, ee, kp))
    tau = jax.block_until_ready(fwd(jnp.asarray(ts_np), jnp.asarray(etas_np)))   # (T, DOF)

    tau_ref = np.stack([reference_forward(float(ts_np[i]), etas_np[i], raw) for i in range(T)])
    np.testing.assert_allclose(np.asarray(tau), tau_ref.astype(np.float32), rtol=2e-3, atol=2e-3)

    print("KERNEL_OK")
</pallas_src>

<mosaic_0001>
module attributes {stable_mosaic.version = 11 : i64} {
  func.func @wave_load_kernel(%arg0: i32, %arg1: memref<128xi32, #tpu.memory_space<smem>>, %arg2: memref<8x128xf32, #tpu.memory_space<vmem>>, %arg3: memref<128x1xf32, #tpu.memory_space<vmem>>, %arg4: memref<16x8xf32, #tpu.memory_space<vmem>>, %arg5: memref<2x256xf32, #tpu.memory_space<vmem>>, %arg6: memref<8x16x128xf32, #tpu.memory_space<vmem>>, %arg7: memref<8x16x128xf32, #tpu.memory_space<vmem>>, %arg8: memref<360x8x256xf32, #tpu.memory_space<vmem>>, %arg9: memref<8x128xf32, #tpu.memory_space<vmem>>, %arg10: memref<128x256xf32, #tpu.memory_space<vmem>>) attributes {dimension_semantics = [#tpu.dimension_semantics<parallel>], iteration_bounds = array<i64: 1>, scalar_prefetch = 1 : i64, scratch_operands = 1 : i64, tpu.core_type = #tpu.core_type<tc>, window_params = [{transform_indices = @transform_0, window_bounds = array<i64: 8, 128>}, {transform_indices = @transform_1, window_bounds = array<i64: 128, 1>}, {pipeline_mode = #tpu.pipeline_mode<synchronous>, transform_indices = @transform_2, window_bounds = array<i64: 16, 8>}, {pipeline_mode = #tpu.pipeline_mode<synchronous>, transform_indices = @transform_3, window_bounds = array<i64: 2, 256>}, {transform_indices = @transform_4, window_bounds = array<i64: 8, 16, 128>}, {transform_indices = @transform_5, window_bounds = array<i64: 8, 16, 128>}, {pipeline_mode = #tpu.pipeline_mode<synchronous>, transform_indices = @transform_6, window_bounds = array<i64: 360, 8, 256>}, {transform_indices = @transform_7, window_bounds = array<i64: 8, 128>}]} {
    %c128_i32 = arith.constant 128 : i32
    %0 = arith.muli %arg0, %c128_i32 : i32
    %c0 = arith.constant 0 : index
    %c0_0 = arith.constant 0 : index
    %1 = vector.load %arg2[%c0, %c0_0] : memref<8x128xf32, #tpu.memory_space<vmem>>, vector<1x128xf32>
    %c1 = arith.constant 1 : index
    %c0_1 = arith.constant 0 : index
    %2 = vector.load %arg2[%c1, %c0_1] : memref<8x128xf32, #tpu.memory_space<vmem>>, vector<1x128xf32>
    %c2 = arith.constant 2 : index
    %c0_2 = arith.constant 0 : index
    %3 = vector.load %arg2[%c2, %c0_2] : memref<8x128xf32, #tpu.memory_space<vmem>>, vector<1x128xf32>
    %c0_3 = arith.constant 0 : index
    %c0_4 = arith.constant 0 : index
    %4 = vector.load %arg4[%c0_3, %c0_4] : memref<16x8xf32, #tpu.memory_space<vmem>>, vector<16x1xf32>
    %c0_5 = arith.constant 0 : index
    %c1_6 = arith.constant 1 : index
    %5 = vector.load %arg4[%c0_5, %c1_6] : memref<16x8xf32, #tpu.memory_space<vmem>>, vector<16x1xf32>
    %c0_7 = arith.constant 0 : index
    %c2_8 = arith.constant 2 : index
    %6 = vector.load %arg4[%c0_7, %c2_8] : memref<16x8xf32, #tpu.memory_space<vmem>>, vector<16x1xf32>
    %c0_9 = arith.constant 0 : index
    %c3 = arith.constant 3 : index
    %7 = vector.load %arg4[%c0_9, %c3] : memref<16x8xf32, #tpu.memory_space<vmem>>, vector<16x1xf32>
    %8 = vector.broadcast %4 : vector<16x1xf32> to vector<16x128xf32>
    %9 = vector.broadcast %1 : vector<1x128xf32> to vector<16x128xf32>
    %10 = arith.mulf %8, %9 : vector<16x128xf32>
    %11 = vector.broadcast %5 : vector<16x1xf32> to vector<16x128xf32>
    %12 = vector.broadcast %2 : vector<1x128xf32> to vector<16x128xf32>
    %13 = arith.mulf %11, %12 : vector<16x128xf32>
    %14 = arith.subf %10, %13 : vector<16x128xf32>
    %15 = vector.broadcast %6 : vector<16x1xf32> to vector<16x128xf32>
    %16 = vector.broadcast %3 : vector<1x128xf32> to vector<16x128xf32>
    %17 = arith.mulf %15, %16 : vector<16x128xf32>
    %18 = arith.subf %14, %17 : vector<16x128xf32>
    %19 = vector.broadcast %7 : vector<16x1xf32> to vector<16x128xf32>
    %20 = arith.subf %18, %19 : vector<16x128xf32>
    %21 = math.cos %20 : vector<16x128xf32>
    %22 = math.sin %20 : vector<16x128xf32>
    %c0_10 = arith.constant 0 : index
    %c0_11 = arith.constant 0 : index
    %c0_12 = arith.constant 0 : index
    %23 = vector.load %arg6[%c0_10, %c0_11, %c0_12] : memref<8x16x128xf32, #tpu.memory_space<vmem>>, vector<1x16x128xf32>
    %24 = vector.shape_cast %23 : vector<1x16x128xf32> to vector<16x128xf32>
    %25 = arith.mulf %24, %21 : vector<16x128xf32>
    %c0_13 = arith.constant 0 : index
    %c0_14 = arith.constant 0 : index
    %c0_15 = arith.constant 0 : index
    %26 = vector.load %arg7[%c0_13, %c0_14, %c0_15] : memref<8x16x128xf32, #tpu.memory_space<vmem>>, vector<1x16x128xf32>
    %27 = vector.shape_cast %26 : vector<1x16x128xf32> to vector<16x128xf32>
    %28 = arith.mulf %27, %22 : vector<16x128xf32>
    %29 = arith.addf %25, %28 : vector<16x128xf32>
    %cst = arith.constant dense<0.000000e+00> : vector<128xf32>
    %30 = vector.multi_reduction <add>, %29, %cst [0] : vector<16x128xf32> to vector<128xf32>
    %31 = vector.shape_cast %30 : vector<128xf32> to vector<1x128xf32>
    %c1_16 = arith.constant 1 : index
    %c0_17 = arith.constant 0 : index
    %c0_18 = arith.constant 0 : index
    %32 = vector.load %arg6[%c1_16, %c0_17, %c0_18] : memref<8x16x128xf32, #tpu.memory_space<vmem>>, vector<1x16x128xf32>
    %33 = vector.shape_cast %32 : vector<1x16x128xf32> to vector<16x128xf32>
    %34 = arith.mulf %33, %21 : vector<16x128xf32>
    %c1_19 = arith.constant 1 : index
    %c0_20 = arith.constant 0 : index
    %c0_21 = arith.constant 0 : index
    %35 = vector.load %arg7[%c1_19, %c0_20, %c0_21] : memref<8x16x128xf32, #tpu.memory_space<vmem>>, vector<1x16x128xf32>
    %36 = vector.shape_cast %35 : vector<1x16x128xf32> to vector<16x128xf32>
    %37 = arith.mulf %36, %22 : vector<16x128xf32>
    %38 = arith.addf %34, %37 : vector<16x128xf32>
    %cst_22 = arith.constant dense<0.000000e+00> : vector<128xf32>
    %39 = vector.multi_reduction <add>, %38, %cst_22 [0] : vector<16x128xf32> to vector<128xf32>
    %40 = vector.shape_cast %39 : vector<128xf32> to vector<1x128xf32>
    %c2_23 = arith.constant 2 : index
    %c0_24 = arith.constant 0 : index
    %c0_25 = arith.constant 0 : index
    %41 = vector.load %arg6[%c2_23, %c0_24, %c0_25] : memref<8x16x128xf32, #tpu.memory_space<vmem>>, vector<1x16x128xf32>
    %42 = vector.shape_cast %41 : vector<1x16x128xf32> to vector<16x128xf32>
    %43 = arith.mulf %42, %21 : vector<16x128xf32>
    %c2_26 = arith.constant 2 : index
    %c0_27 = arith.constant 0 : index
    %c0_28 = arith.constant 0 : index
    %44 = vector.load %arg7[%c2_26, %c0_27, %c0_28] : memref<8x16x128xf32, #tpu.memory_space<vmem>>, vector<1x16x128xf32>
    %45 = vector.shape_cast %44 : vector<1x16x128xf32> to vector<16x128xf32>
    %46 = arith.mulf %45, %22 : vector<16x128xf32>
    %47 = arith.addf %43, %46 : vector<16x128xf32>
    %cst_29 = arith.constant dense<0.000000e+00> : vector<128xf32>
    %48 = vector.multi_reduction <add>, %47, %cst_29 [0] : vector<16x128xf32> to vector<128xf32>
    %49 = vector.shape_cast %48 : vector<128xf32> to vector<1x128xf32>
    %c3_30 = arith.constant 3 : index
    %c0_31 = arith.constant 0 : index
    %c0_32 = arith.constant 0 : index
    %50 = vector.load %arg6[%c3_30, %c0_31, %c0_32] : memref<8x16x128xf32, #tpu.memory_space<vmem>>, vector<1x16x128xf32>
    %51 = vector.shape_cast %50 : vector<1x16x128xf32> to vector<16x128xf32>
    %52 = arith.mulf %51, %21 : vector<16x128xf32>
    %c3_33 = arith.constant 3 : index
    %c0_34 = arith.constant 0 : index
    %c0_35 = arith.constant 0 : index
    %53 = vector.load %arg7[%c3_33, %c0_34, %c0_35] : memref<8x16x128xf32, #tpu.memory_space<vmem>>, vector<1x16x128xf32>
    %54 = vector.shape_cast %53 : vector<1x16x128xf32> to vector<16x128xf32>
    %55 = arith.mulf %54, %22 : vector<16x128xf32>
    %56 = arith.addf %52, %55 : vector<16x128xf32>
    %cst_36 = arith.constant dense<0.000000e+00> : vector<128xf32>
    %57 = vector.multi_reduction <add>, %56, %cst_36 [0] : vector<16x128xf32> to vector<128xf32>
    %58 = vector.shape_cast %57 : vector<128xf32> to vector<1x128xf32>
    %c4 = arith.constant 4 : index
    %c0_37 = arith.constant 0 : index
    %c0_38 = arith.constant 0 : index
    %59 = vector.load %arg6[%c4, %c0_37, %c0_38] : memref<8x16x128xf32, #tpu.memory_space<vmem>>, vector<1x16x128xf32>
    %60 = vector.shape_cast %59 : vector<1x16x128xf32> to vector<16x128xf32>
    %61 = arith.mulf %60, %21 : vector<16x128xf32>
    %c4_39 = arith.constant 4 : index
    %c0_40 = arith.constant 0 : index
    %c0_41 = arith.constant 0 : index
    %62 = vector.load %arg7[%c4_39, %c0_40, %c0_41] : memref<8x16x128xf32, #tpu.memory_space<vmem>>, vector<1x16x128xf32>
    %63 = vector.shape_cast %62 : vector<1x16x128xf32> to vector<16x128xf32>
    %64 = arith.mulf %63, %22 : vector<16x128xf32>
    %65 = arith.addf %61, %64 : vector<16x128xf32>
    %cst_42 = arith.constant dense<0.000000e+00> : vector<128xf32>
    %66 = vector.multi_reduction <add>, %65, %cst_42 [0] : vector<16x128xf32> to vector<128xf32>
    %67 = vector.shape_cast %66 : vector<128xf32> to vector<1x128xf32>
    %c5 = arith.constant 5 : index
    %c0_43 = arith.constant 0 : index
    %c0_44 = arith.constant 0 : index
    %68 = vector.load %arg6[%c5, %c0_43, %c0_44] : memref<8x16x128xf32, #tpu.memory_space<vmem>>, vector<1x16x128xf32>
    %69 = vector.shape_cast %68 : vector<1x16x128xf32> to vector<16x128xf32>
    %70 = arith.mulf %69, %21 : vector<16x128xf32>
    %c5_45 = arith.constant 5 : index
    %c0_46 = arith.constant 0 : index
    %c0_47 = arith.constant 0 : index
    %71 = vector.load %arg7[%c5_45, %c0_46, %c0_47] : memref<8x16x128xf32, #tpu.memory_space<vmem>>, vector<1x16x128xf32>
    %72 = vector.shape_cast %71 : vector<1x16x128xf32> to vector<16x128xf32>
    %73 = arith.mulf %72, %22 : vector<16x128xf32>
    %74 = arith.addf %70, %73 : vector<16x128xf32>
    %cst_48 = arith.constant dense<0.000000e+00> : vector<128xf32>
    %75 = vector.multi_reduction <add>, %74, %cst_48 [0] : vector<16x128xf32> to vector<128xf32>
    %76 = vector.shape_cast %75 : vector<128xf32> to vector<1x128xf32>
    %c6 = arith.constant 6 : index
    %c0_49 = arith.constant 0 : index
    %c0_50 = arith.constant 0 : index
    %77 = vector.load %arg6[%c6, %c0_49, %c0_50] : memref<8x16x128xf32, #tpu.memory_space<vmem>>, vector<1x16x128xf32>
    %78 = vector.shape_cast %77 : vector<1x16x128xf32> to vector<16x128xf32>
    %79 = arith.mulf %78, %21 : vector<16x128xf32>
    %c6_51 = arith.constant 6 : index
    %c0_52 = arith.constant 0 : index
    %c0_53 = arith.constant 0 : index
    %80 = vector.load %arg7[%c6_51, %c0_52, %c0_53] : memref<8x16x128xf32, #tpu.memory_space<vmem>>, vector<1x16x128xf32>
    %81 = vector.shape_cast %80 : vector<1x16x128xf32> to vector<16x128xf32>
    %82 = arith.mulf %81, %22 : vector<16x128xf32>
    %83 = arith.addf %79, %82 : vector<16x128xf32>
    %cst_54 = arith.constant dense<0.000000e+00> : vector<128xf32>
    %84 = vector.multi_reduction <add>, %83, %cst_54 [0] : vector<16x128xf32> to vector<128xf32>
    %85 = vector.shape_cast %84 : vector<128xf32> to vector<1x128xf32>
    %c7 = arith.constant 7 : index
    %c0_55 = arith.constant 0 : index
    %c0_56 = arith.constant 0 : index
    %86 = vector.load %arg6[%c7, %c0_55, %c0_56] : memref<8x16x128xf32, #tpu.memory_space<vmem>>, vector<1x16x128xf32>
    %87 = vector.shape_cast %86 : vector<1x16x128xf32> to vector<16x128xf32>
    %88 = arith.mulf %87, %21 : vector<16x128xf32>
    %c7_57 = arith.constant 7 : index
    %c0_58 = arith.constant 0 : index
    %c0_59 = arith.constant 0 : index
    %89 = vector.load %arg7[%c7_57, %c0_58, %c0_59] : memref<8x16x128xf32, #tpu.memory_space<vmem>>, vector<1x16x128xf32>
    %90 = vector.shape_cast %89 : vector<1x16x128xf32> to vector<16x128xf32>
    %91 = arith.mulf %90, %22 : vector<16x128xf32>
    %92 = arith.addf %88, %91 : vector<16x128xf32>
    %cst_60 = arith.constant dense<0.000000e+00> : vector<128xf32>
    %93 = vector.multi_reduction <add>, %92, %cst_60 [0] : vector<16x128xf32> to vector<128xf32>
    %94 = vector.shape_cast %93 : vector<128xf32> to vector<1x128xf32>
    %95 = tpu.concatenate %31, %40, %49, %58, %67, %76, %85, %94 in 0 : vector<1x128xf32>, vector<1x128xf32>, vector<1x128xf32>, vector<1x128xf32>, vector<1x128xf32>, vector<1x128xf32>, vector<1x128xf32>, vector<1x128xf32> -> vector<8x128xf32>
    %c0_61 = arith.constant 0 : index
    %c0_62 = arith.constant 0 : index
    %96 = vector.load %arg3[%c0_61, %c0_62] : memref<128x1xf32, #tpu.memory_space<vmem>>, vector<128x1xf32>
    %c0_63 = arith.constant 0 : index
    %c0_64 = arith.constant 0 : index
    %97 = vector.load %arg5[%c0_63, %c0_64] : memref<2x256xf32, #tpu.memory_space<vmem>>, vector<1x256xf32>
    %98 = vector.broadcast %96 : vector<128x1xf32> to vector<128x256xf32>
    %99 = vector.broadcast %97 : vector<1x256xf32> to vector<128x256xf32>
    %100 = arith.mulf %98, %99 : vector<128x256xf32>
    %c1_65 = arith.constant 1 : index
    %c0_66 = arith.constant 0 : index
    %101 = vector.load %arg5[%c1_65, %c0_66] : memref<2x256xf32, #tpu.memory_space<vmem>>, vector<1x256xf32>
    %102 = vector.broadcast %101 : vector<1x256xf32> to vector<128x256xf32>
    %103 = arith.addf %100, %102 : vector<128x256xf32>
    %104 = math.cos %103 : vector<128x256xf32>
    %c0_67 = arith.constant 0 : index
    %c0_68 = arith.constant 0 : index
    %105 = vector.load %arg10[%c0_67, %c0_68] : memref<128x256xf32, #tpu.memory_space<vmem>>, vector<128x256xf32>
    tpu.vector_store %arg10[%c0_67, %c0_68], %104 {strides = array<i32>} : memref<128x256xf32, #tpu.memory_space<vmem>>, vector<128x256xf32>,
    %106 = tpu.iota {dimensions = array<i32: 1>} : vector<1x128xi32>
    %c0_i32 = arith.constant 0 : i32
    %c128_i32_69 = arith.constant 128 : i32
    %107 = arith.addi %c0_i32, %c128_i32_69 : i32
    %c1_i32 = arith.constant 1 : i32
    %108 = scf.for %arg11 = %c0_i32 to %107 step %c1_i32 iter_args(%arg12 = %95) -> (vector<8x128xf32>)  : i32 {
      %110 = arith.addi %0, %arg11 : i32
      %111 = arith.index_cast %110 : i32 to index
      %112 = memref.load %arg1[%111] : memref<128xi32, #tpu.memory_space<smem>>
      %113 = arith.index_cast %112 : i32 to index
      %c0_73 = arith.constant 0 : index
      %c0_74 = arith.constant 0 : index
      %114 = vector.load %arg8[%113, %c0_73, %c0_74] : memref<360x8x256xf32, #tpu.memory_space<vmem>>, vector<1x8x256xf32>
      %115 = vector.shape_cast %114 : vector<1x8x256xf32> to vector<8x256xf32>
      %116 = arith.index_cast %arg11 : i32 to index
      %c0_75 = arith.constant 0 : index
      %117 = vector.load %arg10[%116, %c0_75] : memref<128x256xf32, #tpu.memory_space<vmem>>, vector<1x256xf32>
      %118 = vector.broadcast %117 : vector<1x256xf32> to vector<8x256xf32>
      %119 = arith.mulf %115, %118 : vector<8x256xf32>
      %cst_76 = arith.constant dense<0.000000e+00> : vector<8xf32>
      %120 = vector.multi_reduction <add>, %119, %cst_76 [1] : vector<8x256xf32> to vector<8xf32>
      %121 = vector.shape_cast %120 : vector<8xf32> to vector<8x1xf32>
      %122 = vector.broadcast %arg11 : i32 to vector<1x128xi32>
      %123 = arith.cmpi eq, %106, %122 : vector<1x128xi32>
      %124 = arith.extui %123 : vector<1x128xi1> to vector<1x128xi32>
      %125 = arith.sitofp %124 : vector<1x128xi32> to vector<1x128xf32>
      %126 = vector.broadcast %121 : vector<8x1xf32> to vector<8x128xf32>
      %127 = vector.broadcast %125 : vector<1x128xf32> to vector<8x128xf32>
      %128 = arith.mulf %126, %127 : vector<8x128xf32>
      %129 = arith.addf %arg12, %128 : vector<8x128xf32>
      scf.yield %129 : vector<8x128xf32>
    }
    %c128_i32_70 = arith.constant 128 : i32
    %c0_71 = arith.constant 0 : index
    %c0_72 = arith.constant 0 : index
    %109 = vector.load %arg9[%c0_71, %c0_72] : memref<8x128xf32, #tpu.memory_space<vmem>>, vector<8x128xf32>
    tpu.vector_store %arg9[%c0_71, %c0_72], %108 {strides = array<i32>} : memref<8x128xf32, #tpu.memory_space<vmem>>, vector<8x128xf32>,
    return
  }
  func.func @transform_0(%arg0: i32, %arg1: memref<128xi32, #tpu.memory_space<smem>>) -> (i32, i32) {
    %c0_i32 = arith.constant 0 : i32
    %c0_i32_0 = arith.constant 0 : i32
    return %c0_i32, %arg0 : i32, i32
  }
  func.func @transform_1(%arg0: i32, %arg1: memref<128xi32, #tpu.memory_space<smem>>) -> (i32, i32) {
    %c0_i32 = arith.constant 0 : i32
    %c0_i32_0 = arith.constant 0 : i32
    return %arg0, %c0_i32 : i32, i32
  }
  func.func @transform_2(%arg0: i32, %arg1: memref<128xi32, #tpu.memory_space<smem>>) -> (i32, i32) {
    %c0_i32 = arith.constant 0 : i32
    %c0_i32_0 = arith.constant 0 : i32
    %c0_i32_1 = arith.constant 0 : i32
    return %c0_i32, %c0_i32_0 : i32, i32
  }
  func.func @transform_3(%arg0: i32, %arg1: memref<128xi32, #tpu.memory_space<smem>>) -> (i32, i32) {
    %c0_i32 = arith.constant 0 : i32
    %c0_i32_0 = arith.constant 0 : i32
    %c0_i32_1 = arith.constant 0 : i32
    return %c0_i32, %c0_i32_0 : i32, i32
  }
  func.func @transform_4(%arg0: i32, %arg1: memref<128xi32, #tpu.memory_space<smem>>) -> (i32, i32, i32) {
    %c0_i32 = arith.constant 0 : i32
    %c0_i32_0 = arith.constant 0 : i32
    %c0_i32_1 = arith.constant 0 : i32
    return %c0_i32, %c0_i32_0, %arg0 : i32, i32, i32
  }
  func.func @transform_5(%arg0: i32, %arg1: memref<128xi32, #tpu.memory_space<smem>>) -> (i32, i32, i32) {
    %c0_i32 = arith.constant 0 : i32
    %c0_i32_0 = arith.constant 0 : i32
    %c0_i32_1 = arith.constant 0 : i32
    return %c0_i32, %c0_i32_0, %arg0 : i32, i32, i32
  }
  func.func @transform_6(%arg0: i32, %arg1: memref<128xi32, #tpu.memory_space<smem>>) -> (i32, i32, i32) {
    %c0_i32 = arith.constant 0 : i32
    %c0_i32_0 = arith.constant 0 : i32
    %c0_i32_1 = arith.constant 0 : i32
    %c0_i32_2 = arith.constant 0 : i32
    return %c0_i32, %c0_i32_0, %c0_i32_1 : i32, i32, i32
  }
  func.func @transform_7(%arg0: i32, %arg1: memref<128xi32, #tpu.memory_space<smem>>) -> (i32, i32) {
    %c0_i32 = arith.constant 0 : i32
    %c0_i32_0 = arith.constant 0 : i32
    return %c0_i32, %arg0 : i32, i32
  }
}

</mosaic_0001>

<llo_original>
// kernel: _lambda_.1
$region0: #{_lambda_.1}
  #allocation0 [shape = 'u32[]', space=smem, size = 0x4, offset = 0x4, fixed_abs, tag = 'smem constant byte address 0x4 - core index']
  #allocation1 [shape = 'u32[144,128]{1,0:T(1,128)}', space=vmem, size = 0x12000, scoped, tag = 'internal scratch']
  #allocation2 [shape = 'f32[128,256]{1,0:T(8,128)}', space=vmem, size = 0x20000, scoped, tag = 'scratch operand']
  #allocation3 [shape = 's32[1]{0}', space=sflag, size = 0x4, scoped, tag = 'scoped memory for _lambda_.1']
  #allocation4 [shape = 'u8[512]{0}', space=smem, size = 0x200, scoped, tag = 'prefetched SMEM operand 0']
  %s0 = inlined_call_operand.vmem [shape: s32[128], index: 0, kind: input, shape index: {}]
  %s1 = inlined_call_operand.vmem [shape: f32[8,128], index: 1, kind: input, shape index: {}]
  %s2 = inlined_call_operand.vmem [shape: f32[128,1], index: 2, kind: input, shape index: {}]
  %s3 = inlined_call_operand.vmem [shape: f32[16,8], index: 3, kind: input, shape index: {}]
  %s4 = inlined_call_operand.vmem [shape: f32[2,256], index: 4, kind: input, shape index: {}]
  %s5 = inlined_call_operand.vmem [shape: f32[8,16,128], index: 5, kind: input, shape index: {}]
  %s6 = inlined_call_operand.vmem [shape: f32[8,16,128], index: 6, kind: input, shape index: {}]
  %s7 = inlined_call_operand.vmem [shape: f32[360,8,256], index: 7, kind: input, shape index: {}]
  %s8 = inlined_call_operand.vmem [shape: f32[8,128], index: 8, kind: output, shape index: {}]
  %s9 = sld [smem:[#allocation0]]
  $region45: #{_lambda_.1} parent=0
    _
  %s11 = ssub.s32 1, %s9
  %s12 = scalar_select 0, %s11, %s9
  %s13 = sshll.u32 %s0, 4
  %s14 = int_to_ptr.vmem [resolvable:$true] %s13
  %16 = dma.vmem_to_smem %s14, 16, [#allocation4], [#allocation3]
  %17 = dma.done [#allocation3], 16
  %18 = sfence
  // Predicated region
  $region2: #{_lambda_.1} parent=0 // pred_check
    _
  $region3: #{_lambda_.1} parent=0 // pred_check_branch
    %20 = sbr.rel (0) target = $region5
  $region4: #{_lambda_.1} parent=0 // pred_region
    _
  $region5: #{_lambda_.1} parent=0 // pred_fallthru
    _
  // Predicated region
  $region6: #{_lambda_.1} parent=0 // pred_check
    _
  $region7: #{_lambda_.1} parent=0 // pred_check_branch
    %22 = sbr.rel (0) target = $region9
  $region8: #{_lambda_.1} parent=0 // pred_region
    _
  $region9: #{_lambda_.1} parent=0 // pred_fallthru
    _
  // Predicated region
  $region10: #{_lambda_.1} parent=0 // pred_check
    _
  $region11: #{_lambda_.1} parent=0 // pred_check_branch
    %24 = sbr.rel (0) target = $region13
  $region12: #{_lambda_.1} parent=0 // pred_region
    _
  $region13: #{_lambda_.1} parent=0 // pred_fallthru
    _
  // Predicated region
  $region14: #{_lambda_.1} parent=0 // pred_check
    _
  $region15: #{_lambda_.1} parent=0 // pred_check_branch
    %26 = sbr.rel (0) target = $region17
  $region16: #{_lambda_.1} parent=0 // pred_region
    _
  $region17: #{_lambda_.1} parent=0 // pred_fallthru
    _
  // Predicated region
  $region18: #{_lambda_.1} parent=0 // pred_check
    _
  $region19: #{_lambda_.1} parent=0 // pred_check_branch
    %28 = sbr.rel (0) target = $region21
  $region20: #{_lambda_.1} parent=0 // pred_region
    _
  $region21: #{_lambda_.1} parent=0 // pred_fallthru
    _
  // Predicated region
  $region22: #{_lambda_.1} parent=0 // pred_check
    _
  $region23: #{_lambda_.1} parent=0 // pred_check_branch
    %30 = sbr.rel (0) target = $region25
  $region24: #{_lambda_.1} parent=0 // pred_region
    _
  $region25: #{_lambda_.1} parent=0 // pred_fallthru
    _
  // Predicated region
  $region26: #{_lambda_.1} parent=0 // pred_check
    _
  $region27: #{_lambda_.1} parent=0 // pred_check_branch
    %32 = sbr.rel (0) target = $region29
  $region28: #{_lambda_.1} parent=0 // pred_region
    _
  $region29: #{_lambda_.1} parent=0 // pred_fallthru
    _
  %s33 = smul.u32 0, 128
  %v34 = vld [vmem:[%s1] sm:$0x1]
  %v35 = vld [vmem:[%s1 + $0x1] sm:$0x1]
  %v36 = vld [vmem:[%s1 + $0x2] sm:$0x1]
  %v37 = vld [vmem:[%s3] sm:$0xff]
  %v38 = vld [vmem:[%s3 + $0x8] sm:$0xff]
  %40 = vset.pattern.permute.xlu0 0
  %41 = vperm.xlu0 %40, %v37
  %v42 = vpop.permute.xlu0 %41
  %45 = vset.pattern.permute.xlu0 0
  %46 = vperm.xlu0 %45, %v38
  %v47 = vpop.permute.xlu0 %46
  %v49 = vlaneseq
  %v50 = vshrl.u32 %v49, 7
  %v51 = vsub.s32 0, %v50
  %v52 = vrot.slane %v34, %v51
  %v53 = vmul.f32 %v42, %v52
  %v54 = vmul.f32 %v47, %v52
  %55 = vset.pattern.permute.xlu0 1
  %56 = vperm.xlu0 %55, %v37
  %v57 = vpop.permute.xlu0 %56
  %59 = vset.pattern.permute.xlu0 1
  %60 = vperm.xlu0 %59, %v38
  %v61 = vpop.permute.xlu0 %60
  %v63 = vlaneseq
  %v64 = vshrl.u32 %v63, 7
  %v65 = vsub.s32 0, %v64
  %v66 = vrot.slane %v35, %v65
  %v67 = vmul.f32 %v57, %v66
  %v68 = vmul.f32 %v61, %v66
  %v69 = vsub.f32 %v53, %v67
  %v70 = vsub.f32 %v54, %v68
  %71 = vset.pattern.permute.xlu0 2
  %72 = vperm.xlu0 %71, %v37
  %v73 = vpop.permute.xlu0 %72
  %75 = vset.pattern.permute.xlu0 2
  %76 = vperm.xlu0 %75, %v38
  %v77 = vpop.permute.xlu0 %76
  %v79 = vlaneseq
  %v80 = vshrl.u32 %v79, 7
  %v81 = vsub.s32 0, %v80
  %v82 = vrot.slane %v36, %v81
  %v83 = vmul.f32 %v73, %v82
  %v84 = vmul.f32 %v77, %v82
  %v85 = vsub.f32 %v69, %v83
  %v86 = vsub.f32 %v70, %v84
  %87 = vset.pattern.permute.xlu0 3
  %88 = vperm.xlu0 %87, %v37
  %v89 = vpop.permute.xlu0 %88
  %91 = vset.pattern.permute.xlu0 3
  %92 = vperm.xlu0 %91, %v38
  %v93 = vpop.permute.xlu0 %92
  %v95 = vsub.f32 %v85, %v89
  %v96 = vsub.f32 %v86, %v93
  %v97 = vand.u32 2147483647, %v95
  %vm98 = vcmp.le.f32.partialorder %v97, 0.7853982
  %vm99 = vcmp.lt.s32.totalorder %v95, 0
  %v100 = vand.u32 %v95, 2139095040
  %v101 = vshrl.u32 %v100, 23
  %v102 = vsub.s32 %v101, 127
  %v103 = vand.u32 2147483647, %v95
  %v104 = vand.u32 %v103, 8388607
  %v105 = vor.u32 %v104, 8388608
  %v106 = vsub.s32 0, %v105
  %v107 = vadd.s32 %v102, 1
  %vm108 = vcmp.gt.s32.totalorder %v107, 0
  %v109 = vsel %vm108, %v107, 0
  %v110 = vshrl.u32 %v109, 5
  %v111 = vand.u32 %v109, 31
  %v112 = vsub.s32 32, %v111
  %v113 = vshrl.u32 683565275, %v112
  %v114 = vshll.u32 683565275, %v111
  %v115 = vshrl.u32 2475754826, %v112
  %v116 = vor.u32 %v114, %v115
  %v117 = vshll.u32 2475754826, %v111
  %v118 = vshrl.u32 2131351028, %v112
  %v119 = vor.u32 %v117, %v118
  %v120 = vshll.u32 2131351028, %v111
  %v121 = vshrl.u32 2102212464, %v112
  %v122 = vor.u32 %v120, %v121
  %v123 = vshll.u32 2102212464, %v111
  %v124 = vshrl.u32 920167782, %v112
  %v125 = vor.u32 %v123, %v124
  %v126 = vshll.u32 920167782, %v111
  %v127 = vshrl.u32 1326507024, %v112
  %v128 = vor.u32 %v126, %v127
  %vm129 = vcmp.lt.s32.totalorder %v110, 1
  %vm130 = vcmp.lt.s32.totalorder %v110, 2
  %vm131 = vcmp.lt.s32.totalorder %v110, 3
  %vm132 = vcmp.lt.s32.totalorder %v110, 4
  %v133 = vsel %vm129, %v113, %v116
  %v134 = vsel %vm132, %v122, 2102212464
  %v135 = vsel %vm131, %v119, %v134
  %v136 = vsel %vm130, %v133, %v135
  %v137 = vsel %vm129, %v116, %v119
  %v138 = vsel %vm132, %v125, 920167782
  %v139 = vsel %vm131, %v122, %v138
  %v140 = vsel %vm130, %v137, %v139
  %v141 = vsel %vm129, %v119, %v122
  %v142 = vsel %vm132, %v128, 1326507024
  %v143 = vsel %vm131, %v125, %v142
  %v144 = vsel %vm130, %v141, %v143
  %v145 = vshll.u32 %v105, 8
  %v146 = vmul.u32.u64.compose %v145, %v144
  %v147 = vextract.low.u32 %v146
  %v148 = vextract.high.u32 %v146
  %v149 = vmul.u32.u64.compose %v145, %v140
  %v150 = vextract.low.u32 %v149
  %v151 = vextract.high.u32 %v149
  %v152 = vmul.u32 %v145, %v136
  %v153 = vadd.s32 %v148, %v150
  %vm154 = vc.u32 %v148, %v150
  %v155 = vadd.s32 %v151, 1
  %v156 = vsel %vm154, %v155, %v151
  %v157 = vadd.s32 %v152, %v156
  %v158 = vadd.s32 %v157, 536870912
  %v159 = vshrl.u32 %v158, 30
  %v160 = vshll.u32 %v159, 30
  %v161 = vsub.s32 %v157, %v160
  %vm162 = vcmp.lt.s32.totalorder %v161, 0
  %v163 = vsub.s32 0, %v161
  %v164 = vsel %vm162, %v163, %v161
  %v165 = vclz %v164
  %v166 = vsub.s32 %v165, 2
  %vm167 = vcmp.gt.s32.totalorder 0, %v166
  %v168 = vsel %vm167, 0, %v166
  %v169 = vsub.s32 32, %v168
  %v170 = vshll.u32 %v161, %v168
  %v171 = vshrl.u32 %v153, %v169
  %v172 = vor.u32 %v170, %v171
  %v173 = vsub.s32 4294967266, %v168
  %v174 = vadd.s32 %v173, 127
  %v175 = vshll.u32 %v174, 23
  %v176 = vor.u32 4788187, %v175
  %v177 = vand.u32 2147483647, %v176
  %v179 = vcvt.s32.f32 %v172
  %v180 = vmul.f32 %v179, %v177
  %v181 = vxor.u32 %v180, 2147483648
  %v182 = vsel %vm99, %v181, %v180
  %v183 = vsub.s32 4, %v159
  %v184 = vsel %vm99, %v183, %v159
  %v185 = vsel %vm98, %v95, %v182
  %v186 = vsel %vm98, 0, %v184
  %v187 = vcosq.f32.pop %v185
  %v188 = vsinq.f32.pop %v185
  %vm189 = vweird.f32 %v95
  %v190 = vand.u32 %v186, 3
  %vm191 = vcmp.lt.s32.totalorder %v190, 2
  %vm192 = vcmp.eq.s32.totalorder %v190, 0
  %v193 = vxor.u32 %v188, 2147483648
  %v194 = vsel %vm192, %v187, %v193
  %vm195 = vcmp.eq.s32.totalorder %v190, 2
  %v196 = vxor.u32 %v187, 2147483648
  %v197 = vsel %vm195, %v196, %v188
  %v198 = vsel %vm191, %v194, %v197
  %v199 = vsel %vm189, nan, %v198
  %v200 = vand.u32 2147483647, %v96
  %vm201 = vcmp.le.f32.partialorder %v200, 0.7853982
  %vm202 = vcmp.lt.s32.totalorder %v96, 0
  %v203 = vand.u32 %v96, 2139095040
  %v204 = vshrl.u32 %v203, 23
  %v205 = vsub.s32 %v204, 127
  %v206 = vand.u32 2147483647, %v96
  %v207 = vand.u32 %v206, 8388607
  %v208 = vor.u32 %v207, 8388608
  %v209 = vsub.s32 0, %v208
  %v210 = vadd.s32 %v205, 1
  %vm211 = vcmp.gt.s32.totalorder %v210, 0
  %v212 = vsel %vm211, %v210, 0
  %v213 = vshrl.u32 %v212, 5
  %v214 = vand.u32 %v212, 31
  %v215 = vsub.s32 32, %v214
  %v216 = vshrl.u32 683565275, %v215
  %v217 = vshll.u32 683565275, %v214
  %v218 = vshrl.u32 2475754826, %v215
  %v219 = vor.u32 %v217, %v218
  %v220 = vshll.u32 2475754826, %v214
  %v221 = vshrl.u32 2131351028, %v215
  %v222 = vor.u32 %v220, %v221
  %v223 = vshll.u32 2131351028, %v214
  %v224 = vshrl.u32 2102212464, %v215
  %v225 = vor.u32 %v223, %v224
  %v226 = vshll.u32 2102212464, %v214
  %v227 = vshrl.u32 920167782, %v215
  %v228 = vor.u32 %v226, %v227
  %v229 = vshll.u32 920167782, %v214
  %v230 = vshrl.u32 1326507024, %v215
  %v231 = vor.u32 %v229, %v230
  %vm232 = vcmp.lt.s32.totalorder %v213, 1
  %vm233 = vcmp.lt.s32.totalorder %v213, 2
  %vm234 = vcmp.lt.s32.totalorder %v213, 3
  %vm235 = vcmp.lt.s32.totalorder %v213, 4
  %v236 = vsel %vm232, %v216, %v219
  %v237 = vsel %vm235, %v225, 2102212464
  %v238 = vsel %vm234, %v222, %v237
  %v239 = vsel %vm233, %v236, %v238
  %v240 = vsel %vm232, %v219, %v222
  %v241 = vsel %vm235, %v228, 920167782
  %v242 = vsel %vm234, %v225, %v241
  %v243 = vsel %vm233, %v240, %v242
  %v244 = vsel %vm232, %v222, %v225
  %v245 = vsel %vm235, %v231, 1326507024
  %v246 = vsel %vm234, %v228, %v245
  %v247 = vsel %vm233, %v244, %v246
  %v248 = vshll.u32 %v208, 8
  %v249 = vmul.u32.u64.compose %v248, %v247
  %v250 = vextract.low.u32 %v249
  %v251 = vextract.high.u32 %v249
  %v252 = vmul.u32.u64.compose %v248, %v243
  %v253 = vextract.low.u32 %v252
  %v254 = vextract.high.u32 %v252
  %v255 = vmul.u32 %v248, %v239
  %v256 = vadd.s32 %v251, %v253
  %vm257 = vc.u32 %v251, %v253
  %v258 = vadd.s32 %v254, 1
  %v259 = vsel %vm257, %v258, %v254
  %v260 = vadd.s32 %v255, %v259
  %v261 = vadd.s32 %v260, 536870912
  %v262 = vshrl.u32 %v261, 30
  %v263 = vshll.u32 %v262, 30
  %v264 = vsub.s32 %v260, %v263
  %vm265 = vcmp.lt.s32.totalorder %v264, 0
  %v266 = vsub.s32 0, %v264
  %v267 = vsel %vm265, %v266, %v264
  %v268 = vclz %v267
  %v269 = vsub.s32 %v268, 2
  %vm270 = vcmp.gt.s32.totalorder 0, %v269
  %v271 = vsel %vm270, 0, %v269
  %v272 = vsub.s32 32, %v271
  %v273 = vshll.u32 %v264, %v271
  %v274 = vshrl.u32 %v256, %v272
  %v275 = vor.u32 %v273, %v274
  %v276 = vsub.s32 4294967266, %v271
  %v277 = vadd.s32 %v276, 127
  %v278 = vshll.u32 %v277, 23
  %v279 = vor.u32 4788187, %v278
  %v280 = vand.u32 2147483647, %v279
  %v282 = vcvt.s32.f32 %v275
  %v283 = vmul.f32 %v282, %v280
  %v284 = vxor.u32 %v283, 2147483648
  %v285 = vsel %vm202, %v284, %v283
  %v286 = vsub.s32 4, %v262
  %v287 = vsel %vm202, %v286, %v262
  %v288 = vsel %vm201, %v96, %v285
  %v289 = vsel %vm201, 0, %v287
  %v290 = vcosq.f32.pop %v288
  %v291 = vsinq.f32.pop %v288
  %vm292 = vweird.f32 %v96
  %v293 = vand.u32 %v289, 3
  %vm294 = vcmp.lt.s32.totalorder %v293, 2
  %vm295 = vcmp.eq.s32.totalorder %v293, 0
  %v296 = vxor.u32 %v291, 2147483648
  %v297 = vsel %vm295, %v290, %v296
  %vm298 = vcmp.eq.s32.totalorder %v293, 2
  %v299 = vxor.u32 %v290, 2147483648
  %v300 = vsel %vm298, %v299, %v291
  %v301 = vsel %vm294, %v297, %v300
  %v302 = vsel %vm292, nan, %v301
  %v303 = vand.u32 2147483647, %v95
  %vm304 = vcmp.le.f32.partialorder %v303, 0.7853982
  %vm305 = vcmp.lt.s32.totalorder %v95, 0
  %v306 = vand.u32 %v95, 2139095040
  %v307 = vshrl.u32 %v306, 23
  %v308 = vsub.s32 %v307, 127
  %v309 = vand.u32 2147483647, %v95
  %v310 = vand.u32 %v309, 8388607
  %v311 = vor.u32 %v310, 8388608
  %v312 = vsub.s32 0, %v311
  %v313 = vadd.s32 %v308, 1
  %vm314 = vcmp.gt.s32.totalorder %v313, 0
  %v315 = vsel %vm314, %v313, 0
  %v316 = vshrl.u32 %v315, 5
  %v317 = vand.u32 %v315, 31
  %v318 = vsub.s32 32, %v317
  %v319 = vshrl.u32 683565275, %v318
  %v320 = vshll.u32 683565275, %v317
  %v321 = vshrl.u32 2475754826, %v318
  %v322 = vor.u32 %v320, %v321
  %v323 = vshll.u32 2475754826, %v317
  %v324 = vshrl.u32 2131351028, %v318
  %v325 = vor.u32 %v323, %v324
  %v326 = vshll.u32 2131351028, %v317
  %v327 = vshrl.u32 2102212464, %v318
  %v328 = vor.u32 %v326, %v327
  %v329 = vshll.u32 2102212464, %v317
  %v330 = vshrl.u32 920167782, %v318
  %v331 = vor.u32 %v329, %v330
  %v332 = vshll.u32 920167782, %v317
  %v333 = vshrl.u32 1326507024, %v318
  %v334 = vor.u32 %v332, %v333
  %vm335 = vcmp.lt.s32.totalorder %v316, 1
  %vm336 = vcmp.lt.s32.totalorder %v316, 2
  %vm337 = vcmp.lt.s32.totalorder %v316, 3
  %vm338 = vcmp.lt.s32.totalorder %v316, 4
  %v339 = vsel %vm335, %v319, %v322
  %v340 = vsel %vm338, %v328, 2102212464
  %v341 = vsel %vm337, %v325, %v340
  %v342 = vsel %vm336, %v339, %v341
  %v343 = vsel %vm335, %v322, %v325
  %v344 = vsel %vm338, %v331, 920167782
  %v345 = vsel %vm337, %v328, %v344
  %v346 = vsel %vm336, %v343, %v345
  %v347 = vsel %vm335, %v325, %v328
  %v348 = vsel %vm338, %v334, 1326507024
  %v349 = vsel %vm337, %v331, %v348
  %v350 = vsel %vm336, %v347, %v349
  %v351 = vshll.u32 %v311, 8
  %v352 = vmul.u32.u64.compose %v351, %v350
  %v353 = vextract.low.u32 %v352
  %v354 = vextract.high.u32 %v352
  %v355 = vmul.u32.u64.compose %v351, %v346
  %v356 = vextract.low.u32 %v355
  %v357 = vextract.high.u32 %v355
  %v358 = vmul.u32 %v351, %v342
  %v359 = vadd.s32 %v354, %v356
  %vm360 = vc.u32 %v354, %v356
  %v361 = vadd.s32 %v357, 1
  %v362 = vsel %vm360, %v361, %v357
  %v363 = vadd.s32 %v358, %v362
  %v364 = vadd.s32 %v363, 536870912
  %v365 = vshrl.u32 %v364, 30
  %v366 = vshll.u32 %v365, 30
  %v367 = vsub.s32 %v363, %v366
  %vm368 = vcmp.lt.s32.totalorder %v367, 0
  %v369 = vsub.s32 0, %v367
  %v370 = vsel %vm368, %v369, %v367
  %v371 = vclz %v370
  %v372 = vsub.s32 %v371, 2
  %vm373 = vcmp.gt.s32.totalorder 0, %v372
  %v374 = vsel %vm373, 0, %v372
  %v375 = vsub.s32 32, %v374
  %v376 = vshll.u32 %v367, %v374
  %v377 = vshrl.u32 %v359, %v375
  %v378 = vor.u32 %v376, %v377
  %v379 = vsub.s32 4294967266, %v374
  %v380 = vadd.s32 %v379, 127
  %v381 = vshll.u32 %v380, 23
  %v382 = vor.u32 4788187, %v381
  %v383 = vand.u32 2147483647, %v382
  %v385 = vcvt.s32.f32 %v378
  %v386 = vmul.f32 %v385, %v383
  %v387 = vxor.u32 %v386, 2147483648
  %v388 = vsel %vm305, %v387, %v386
  %v389 = vsub.s32 4, %v365
  %v390 = vsel %vm305, %v389, %v365
  %v391 = vsel %vm304, %v95, %v388
  %v392 = vsel %vm304, 0, %v390
  %v393 = vcosq.f32.pop %v391
  %v394 = vsinq.f32.pop %v391
  %vm395 = vweird.f32 %v95
  %v396 = vadd.s32 %v392, 3
  %v397 = vand.u32 %v396, 3
  %vm398 = vcmp.lt.s32.totalorder %v397, 2
  %vm399 = vcmp.eq.s32.totalorder %v397, 0
  %v400 = vxor.u32 %v394, 2147483648
  %v401 = vsel %vm399, %v393, %v400
  %vm402 = vcmp.eq.s32.totalorder %v397, 2
  %v403 = vxor.u32 %v393, 2147483648
  %v404 = vsel %vm402, %v403, %v394
  %v405 = vsel %vm398, %v401, %v404
  %v406 = vsel %vm395, nan, %v405
  %v407 = vand.u32 2147483647, %v96
  %vm408 = vcmp.le.f32.partialorder %v407, 0.7853982
  %vm409 = vcmp.lt.s32.totalorder %v96, 0
  %v410 = vand.u32 %v96, 2139095040
  %v411 = vshrl.u32 %v410, 23
  %v412 = vsub.s32 %v411, 127
  %v413 = vand.u32 2147483647, %v96
  %v414 = vand.u32 %v413, 8388607
  %v415 = vor.u32 %v414, 8388608
  %v416 = vsub.s32 0, %v415
  %v417 = vadd.s32 %v412, 1
  %vm418 = vcmp.gt.s32.totalorder %v417, 0
  %v419 = vsel %vm418, %v417, 0
  %v420 = vshrl.u32 %v419, 5
  %v421 = vand.u32 %v419, 31
  %v422 = vsub.s32 32, %v421
  %v423 = vshrl.u32 683565275, %v422
  %v424 = vshll.u32 683565275, %v421
  %v425 = vshrl.u32 2475754826, %v422
  %v426 = vor.u32 %v424, %v425
  %v427 = vshll.u32 2475754826, %v421
  %v428 = vshrl.u32 2131351028, %v422
  %v429 = vor.u32 %v427, %v428
  %v430 = vshll.u32 2131351028, %v421
  %v431 = vshrl.u32 2102212464, %v422
  %v432 = vor.u32 %v430, %v431
  %v433 = vshll.u32 2102212464, %v421
  %v434 = vshrl.u32 920167782, %v422
  %v435 = vor.u32 %v433, %v434
  %v436 = vshll.u32 920167782, %v421
  %v437 = vshrl.u32 1326507024, %v422
  %v438 = vor.u32 %v436, %v437
  %vm439 = vcmp.lt.s32.totalorder %v420, 1
  %vm440 = vcmp.lt.s32.totalorder %v420, 2
  %vm441 = vcmp.lt.s32.totalorder %v420, 3
  %vm442 = vcmp.lt.s32.totalorder %v420, 4
  %v443 = vsel %vm439, %v423, %v426
  %v444 = vsel %vm442, %v432, 2102212464
  %v445 = vsel %vm441, %v429, %v444
  %v446 = vsel %vm440, %v443, %v445
  %v447 = vsel %vm439, %v426, %v429
  %v448 = vsel %vm442, %v435, 920167782
  %v449 = vsel %vm441, %v432, %v448
  %v450 = vsel %vm440, %v447, %v449
  %v451 = vsel %vm439, %v429, %v432
  %v452 = vsel %vm442, %v438, 1326507024
  %v453 = vsel %vm441, %v435, %v452
  %v454 = vsel %vm440, %v451, %v453
  %v455 = vshll.u32 %v415, 8
  %v456 = vmul.u32.u64.compose %v455, %v454
  %v457 = vextract.low.u32 %v456
  %v458 = vextract.high.u32 %v456
  %v459 = vmul.u32.u64.compose %v455, %v450
  %v460 = vextract.low.u32 %v459
  %v461 = vextract.high.u32 %v459
  %v462 = vmul.u32 %v455, %v446
  %v463 = vadd.s32 %v458, %v460
  %vm464 = vc.u32 %v458, %v460
  %v465 = vadd.s32 %v461, 1
  %v466 = vsel %vm464, %v465, %v461
  %v467 = vadd.s32 %v462, %v466
  %v468 = vadd.s32 %v467, 536870912
  %v469 = vshrl.u32 %v468, 30
  %v470 = vshll.u32 %v469, 30
  %v471 = vsub.s32 %v467, %v470
  %vm472 = vcmp.lt.s32.totalorder %v471, 0
  %v473 = vsub.s32 0, %v471
  %v474 = vsel %vm472, %v473, %v471
  %v475 = vclz %v474
  %v476 = vsub.s32 %v475, 2
  %vm477 = vcmp.gt.s32.totalorder 0, %v476
  %v478 = vsel %vm477, 0, %v476
  %v479 = vsub.s32 32, %v478
  %v480 = vshll.u32 %v471, %v478
  %v481 = vshrl.u32 %v463, %v479
  %v482 = vor.u32 %v480, %v481
  %v483 = vsub.s32 4294967266, %v478
  %v484 = vadd.s32 %v483, 127
  %v485 = vshll.u32 %v484, 23
  %v486 = vor.u32 4788187, %v485
  %v487 = vand.u32 2147483647, %v486
  %v489 = vcvt.s32.f32 %v482
  %v490 = vmul.f32 %v489, %v487
  %v491 = vxor.u32 %v490, 2147483648
  %v492 = vsel %vm409, %v491, %v490
  %v493 = vsub.s32 4, %v469
  %v494 = vsel %vm409, %v493, %v469
  %v495 = vsel %vm408, %v96, %v492
  %v496 = vsel %vm408, 0, %v494
  %v497 = vcosq.f32.pop %v495
  %v498 = vsinq.f32.pop %v495
  %vm499 = vweird.f32 %v96
  %v500 = vadd.s32 %v496, 3
  %v501 = vand.u32 %v500, 3
  %vm502 = vcmp.lt.s32.totalorder %v501, 2
  %vm503 = vcmp.eq.s32.totalorder %v501, 0
  %v504 = vxor.u32 %v498, 2147483648
  %v505 = vsel %vm503, %v497, %v504
  %vm506 = vcmp.eq.s32.totalorder %v501, 2
  %v507 = vxor.u32 %v497, 2147483648
  %v508 = vsel %vm506, %v507, %v498
  %v509 = vsel %vm502, %v505, %v508
  %v510 = vsel %vm499, nan, %v509
  %v511 = vld [vmem:[%s5] sm:$0xff]
  %v512 = vld [vmem:[%s5 + $0x8] sm:$0xff]
  %v513 = vmul.f32 %v511, %v199
  %v514 = vmul.f32 %v512, %v302
  %v515 = vld [vmem:[%s6] sm:$0xff]
  %v516 = vld [vmem:[%s6 + $0x8] sm:$0xff]
  %v517 = vmul.f32 %v515, %v406
  %v518 = vmul.f32 %v516, %v510
  %v519 = vadd.f32 %v513, %v517
  %v520 = vadd.f32 %v514, %v518
  %v521 = vadd.f32 %v519, %v520
  %v522 = vrot.slane %v521, 4
  %v523 = vadd.f32 %v521, %v522
  %v524 = vrot.slane %v523, 2
  %v525 = vadd.f32 %v523, %v524
  %v526 = vrot.slane %v525, 1
  %v527 = vadd.f32 %v525, %v526
  %s528 = scalar_lea.vmem %s5, 16
  %v529 = vld [vmem:[%s528] sm:$0xff]
  %v530 = vld [vmem:[%s528 + $0x8] sm:$0xff]
  %v531 = vmul.f32 %v529, %v199
  %v532 = vmul.f32 %v530, %v302
  %s533 = scalar_lea.vmem %s6, 16
  %v534 = vld [vmem:[%s533] sm:$0xff]
  %v535 = vld [vmem:[%s533 + $0x8] sm:$0xff]
  %v536 = vmul.f32 %v534, %v406
  %v537 = vmul.f32 %v535, %v510
  %v538 = vadd.f32 %v531, %v536
  %v539 = vadd.f32 %v532, %v537
  %v540 = vadd.f32 %v538, %v539
  %v541 = vrot.slane %v540, 4
  %v542 = vadd.f32 %v540, %v541
  %v543 = vrot.slane %v542, 2
  %v544 = vadd.f32 %v542, %v543
  %v545 = vrot.slane %v544, 1
  %v546 = vadd.f32 %v544, %v545
  %s547 = scalar_lea.vmem %s5, 32
  %v548 = vld [vmem:[%s547] sm:$0xff]
  %v549 = vld [vmem:[%s547 + $0x8] sm:$0xff]
  %v550 = vmul.f32 %v548, %v199
  %v551 = vmul.f32 %v549, %v302
  %s552 = scalar_lea.vmem %s6, 32
  %v553 = vld [vmem:[%s552] sm:$0xff]
  %v554 = vld [vmem:[%s552 + $0x8] sm:$0xff]
  %v555 = vmul.f32 %v553, %v406
  %v556 = vmul.f32 %v554, %v510
  %v557 = vadd.f32 %v550, %v555
  %v558 = vadd.f32 %v551, %v556
  %v559 = vadd.f32 %v557, %v558
  %v560 = vrot.slane %v559, 4
  %v561 = vadd.f32 %v559, %v560
  %v562 = vrot.slane %v561, 2
  %v563 = vadd.f32 %v561, %v562
  %v564 = vrot.slane %v563, 1
  %v565 = vadd.f32 %v563, %v564
  %s566 = scalar_lea.vmem %s5, 48
  %v567 = vld [vmem:[%s566] sm:$0xff]
  %v568 = vld [vmem:[%s566 + $0x8] sm:$0xff]
  %v569 = vmul.f32 %v567, %v199
  %v570 = vmul.f32 %v568, %v302
  %s571 = scalar_lea.vmem %s6, 48
  %v572 = vld [vmem:[%s571] sm:$0xff]
  %v573 = vld [vmem:[%s571 + $0x8] sm:$0xff]
  %v574 = vmul.f32 %v572, %v406
  %v575 = vmul.f32 %v573, %v510
  %v576 = vadd.f32 %v569, %v574
  %v577 = vadd.f32 %v570, %v575
  %v578 = vadd.f32 %v576, %v577
  %v579 = vrot.slane %v578, 4
  %v580 = vadd.f32 %v578, %v579
  %v581 = vrot.slane %v580, 2
  %v582 = vadd.f32 %v580, %v581
  %v583 = vrot.slane %v582, 1
  %v584 = vadd.f32 %v582, %v583
  %s585 = scalar_lea.vmem %s5, 64
  %v586 = vld [vmem:[%s585] sm:$0xff]
  %v587 = vld [vmem:[%s585 + $0x8] sm:$0xff]
  %v588 = vmul.f32 %v586, %v199
  %v589 = vmul.f32 %v587, %v302
  %s590 = scalar_lea.vmem %s6, 64
  %v591 = vld [vmem:[%s590] sm:$0xff]
  %v592 = vld [vmem:[%s590 + $0x8] sm:$0xff]
  %v593 = vmul.f32 %v591, %v406
  %v594 = vmul.f32 %v592, %v510
  %v595 = vadd.f32 %v588, %v593
  %v596 = vadd.f32 %v589, %v594
  %v597 = vadd.f32 %v595, %v596
  %v598 = vrot.slane %v597, 4
  %v599 = vadd.f32 %v597, %v598
  %v600 = vrot.slane %v599, 2
  %v601 = vadd.f32 %v599, %v600
  %v602 = vrot.slane %v601, 1
  %v603 = vadd.f32 %v601, %v602
  %s604 = scalar_lea.vmem %s5, 80
  %v605 = vld [vmem:[%s604] sm:$0xff]
  %v606 = vld [vmem:[%s604 + $0x8] sm:$0xff]
  %v607 = vmul.f32 %v605, %v199
  %v608 = vmul.f32 %v606, %v302
  %s609 = scalar_lea.vmem %s6, 80
  %v610 = vld [vmem:[%s609] sm:$0xff]
  %v611 = vld [vmem:[%s609 + $0x8] sm:$0xff]
  %v612 = vmul.f32 %v610, %v406
  %v613 = vmul.f32 %v611, %v510
  %v614 = vadd.f32 %v607, %v612
  %v615 = vadd.f32 %v608, %v613
  %v616 = vadd.f32 %v614, %v615
  %v617 = vrot.slane %v616, 4
  %v618 = vadd.f32 %v616, %v617
  %v619 = vrot.slane %v618, 2
  %v620 = vadd.f32 %v618, %v619
  %v621 = vrot.slane %v620, 1
  %v622 = vadd.f32 %v620, %v621
  %s623 = scalar_lea.vmem %s5, 96
  %v624 = vld [vmem:[%s623] sm:$0xff]
  %v625 = vld [vmem:[%s623 + $0x8] sm:$0xff]
  %v626 = vmul.f32 %v624, %v199
  %v627 = vmul.f32 %v625, %v302
  %s628 = scalar_lea.vmem %s6, 96
  %v629 = vld [vmem:[%s628] sm:$0xff]
  %v630 = vld [vmem:[%s628 + $0x8] sm:$0xff]
  %v631 = vmul.f32 %v629, %v406
  %v632 = vmul.f32 %v630, %v510
  %v633 = vadd.f32 %v626, %v631
  %v634 = vadd.f32 %v627, %v632
  %v635 = vadd.f32 %v633, %v634
  %v636 = vrot.slane %v635, 4
  %v637 = vadd.f32 %v635, %v636
  %v638 = vrot.slane %v637, 2
  %v639 = vadd.f32 %v637, %v638
  %v640 = vrot.slane %v639, 1
  %v641 = vadd.f32 %v639, %v640
  %s642 = scalar_lea.vmem %s5, 112
  %v643 = vld [vmem:[%s642] sm:$0xff]
  %v644 = vld [vmem:[%s642 + $0x8] sm:$0xff]
  %v645 = vmul.f32 %v643, %v199
  %v646 = vmul.f32 %v644, %v302
  %s647 = scalar_lea.vmem %s6, 112
  %v648 = vld [vmem:[%s647] sm:$0xff]
  %v649 = vld [vmem:[%s647 + $0x8] sm:$0xff]
  %v650 = vmul.f32 %v648, %v406
  %v651 = vmul.f32 %v649, %v510
  %v652 = vadd.f32 %v645, %v650
  %v653 = vadd.f32 %v646, %v651
  %v654 = vadd.f32 %v652, %v653
  %v655 = vrot.slane %v654, 4
  %v656 = vadd.f32 %v654, %v655
  %v657 = vrot.slane %v656, 2
  %v658 = vadd.f32 %v656, %v657
  %v659 = vrot.slane %v658, 1
  %v660 = vadd.f32 %v658, %v659
  %vm661 = vcmask 1040384
  %v662 = vsel %vm661, %v527, %v546
  %vm663 = vcmask 1041408
  %v664 = vsel %vm663, %v662, %v565
  %vm665 = vcmask 1042432
  %v666 = vsel %vm665, %v664, %v584
  %vm667 = vcmask 1043456
  %v668 = vsel %vm667, %v666, %v603
  %vm669 = vcmask 1044480
  %v670 = vsel %vm669, %v668, %v622
  %vm671 = vcmask 1045504
  %v672 = vsel %vm671, %v670, %v641
  %vm673 = vcmask 1046528
  %v674 = vsel %vm673, %v672, %v660
  %v675 = vld [vmem:[%s2] sm:$0xff]
  %v676 = vld [vmem:[%s2 + $0x8] sm:$0xff]
  %v677 = vld [vmem:[%s2 + $0x10] sm:$0xff]
  %v678 = vld [vmem:[%s2 + $0x18] sm:$0xff]
  %v679 = vld [vmem:[%s2 + $0x20] sm:$0xff]
  %v680 = vld [vmem:[%s2 + $0x28] sm:$0xff]
  %v681 = vld [vmem:[%s2 + $0x30] sm:$0xff]
  %v682 = vld [vmem:[%s2 + $0x38] sm:$0xff]
  %v683 = vld [vmem:[%s2 + $0x40] sm:$0xff]
  %v684 = vld [vmem:[%s2 + $0x48] sm:$0xff]
  %v685 = vld [vmem:[%s2 + $0x50] sm:$0xff]
  %v686 = vld [vmem:[%s2 + $0x58] sm:$0xff]
  %v687 = vld [vmem:[%s2 + $0x60] sm:$0xff]
  %v688 = vld [vmem:[%s2 + $0x68] sm:$0xff]
  %v689 = vld [vmem:[%s2 + $0x70] sm:$0xff]
  %v690 = vld [vmem:[%s2 + $0x78] sm:$0xff]
  %v691 = vld [vmem:[%s4] ss:$2 sm:$0x3]
  %693 = vset.pattern.permute.xlu0 0
  %694 = vperm.xlu0 %693, %v675
  %v695 = vpop.permute.xlu0 %694
  %698 = vset.pattern.permute.xlu0 0
  %699 = vperm.xlu0 %698, %v676
  %v700 = vpop.permute.xlu0 %699
  %703 = vset.pattern.permute.xlu0 0
  %704 = vperm.xlu0 %703, %v677
  %v705 = vpop.permute.xlu0 %704
  %708 = vset.pattern.permute.xlu0 0
  %709 = vperm.xlu0 %708, %v678
  %v710 = vpop.permute.xlu0 %709
  %713 = vset.pattern.permute.xlu0 0
  %714 = vperm.xlu0 %713, %v679
  %v715 = vpop.permute.xlu0 %714
  %718 = vset.pattern.permute.xlu0 0
  %719 = vperm.xlu0 %718, %v680
  %v720 = vpop.permute.xlu0 %719
  %723 = vset.pattern.permute.xlu0 0
  %724 = vperm.xlu0 %723, %v681
  %v725 = vpop.permute.xlu0 %724
  %728 = vset.pattern.permute.xlu0 0
  %729 = vperm.xlu0 %728, %v682
  %v730 = vpop.permute.xlu0 %729
  %733 = vset.pattern.permute.xlu0 0
  %734 = vperm.xlu0 %733, %v683
  %v735 = vpop.permute.xlu0 %734
  %738 = vset.pattern.permute.xlu0 0
  %739 = vperm.xlu0 %738, %v684
  %v740 = vpop.permute.xlu0 %739
  %743 = vset.pattern.permute.xlu0 0
  %744 = vperm.xlu0 %743, %v685
  %v745 = vpop.permute.xlu0 %744
  %748 = vset.pattern.permute.xlu0 0
  %749 = vperm.xlu0 %748, %v686
  %v750 = vpop.permute.xlu0 %749
  %753 = vset.pattern.permute.xlu0 0
  %754 = vperm.xlu0 %753, %v687
  %v755 = vpop.permute.xlu0 %754
  %758 = vset.pattern.permute.xlu0 0
  %759 = vperm.xlu0 %758, %v688
  %v760 = vpop.permute.xlu0 %759
  %763 = vset.pattern.permute.xlu0 0
  %764 = vperm.xlu0 %763, %v689
  %v765 = vpop.permute.xlu0 %764
  %768 = vset.pattern.permute.xlu0 0
  %769 = vperm.xlu0 %768, %v690
  %v770 = vpop.permute.xlu0 %769
  %v773 = vlaneseq
  %v774 = vshrl.u32 %v773, 7
  %v775 = vsub.s32 0, %v774
  %v776 = vrot.slane %v691, %v775
  %v777 = vlaneseq
  %v778 = vshrl.u32 %v777, 7
  %v779 = vsub.s32 1, %v778
  %v780 = vrot.slane %v691, %v779
  %v783 = vmul.f32 %v695, %v776
  %v784 = vmul.f32 %v695, %v780
  %v785 = vmul.f32 %v700, %v776
  %v786 = vmul.f32 %v700, %v780
  %v787 = vmul.f32 %v705, %v776
  %v788 = vmul.f32 %v705, %v780
  %v789 = vmul.f32 %v710, %v776
  %v790 = vmul.f32 %v710, %v780
  %v791 = vmul.f32 %v715, %v776
  %v792 = vmul.f32 %v715, %v780
  %v793 = vmul.f32 %v720, %v776
  %v794 = vmul.f32 %v720, %v780
  %v795 = vmul.f32 %v725, %v776
  %v796 = vmul.f32 %v725, %v780
  %v797 = vmul.f32 %v730, %v776
  %v798 = vmul.f32 %v730, %v780
  %v799 = vmul.f32 %v735, %v776
  %v800 = vmul.f32 %v735, %v780
  %v801 = vmul.f32 %v740, %v776
  %v802 = vmul.f32 %v740, %v780
  %v803 = vmul.f32 %v745, %v776
  %v804 = vmul.f32 %v745, %v780
  %v805 = vmul.f32 %v750, %v776
  %v806 = vmul.f32 %v750, %v780
  %v807 = vmul.f32 %v755, %v776
  %v808 = vmul.f32 %v755, %v780
  %v809 = vmul.f32 %v760, %v776
  %v810 = vmul.f32 %v760, %v780
  %v811 = vmul.f32 %v765, %v776
  %v812 = vmul.f32 %v765, %v780
  %v813 = vmul.f32 %v770, %v776
  %v814 = vmul.f32 %v770, %v780
  %s815 = scalar_lea.vmem %s4, 1
  %v816 = vld [vmem:[%s815] ss:$2 sm:$0x3]
  %v818 = vlaneseq
  %v819 = vshrl.u32 %v818, 7
  %v820 = vsub.s32 0, %v819
  %v821 = vrot.slane %v816, %v820
  %v822 = vlaneseq
  %v823 = vshrl.u32 %v822, 7
  %v824 = vsub.s32 1, %v823
  %v825 = vrot.slane %v816, %v824
  %v828 = vadd.f32 %v783, %v821
  %v829 = vadd.f32 %v784, %v825
  %v830 = vadd.f32 %v785, %v821
  %v831 = vadd.f32 %v786, %v825
  %v832 = vadd.f32 %v787, %v821
  %v833 = vadd.f32 %v788, %v825
  %v834 = vadd.f32 %v789, %v821
  %v835 = vadd.f32 %v790, %v825
  %v836 = vadd.f32 %v791, %v821
  %v837 = vadd.f32 %v792, %v825
  %v838 = vadd.f32 %v793, %v821
  %v839 = vadd.f32 %v794, %v825
  %v840 = vadd.f32 %v795, %v821
  %v841 = vadd.f32 %v796, %v825
  %v842 = vadd.f32 %v797, %v821
  %v843 = vadd.f32 %v798, %v825
  %v844 = vadd.f32 %v799, %v821
  %v845 = vadd.f32 %v800, %v825
  %v846 = vadd.f32 %v801, %v821
  %v847 = vadd.f32 %v802, %v825
  %v848 = vadd.f32 %v803, %v821
  %v849 = vadd.f32 %v804, %v825
  %v850 = vadd.f32 %v805, %v821
  %v851 = vadd.f32 %v806, %v825
  %v852 = vadd.f32 %v807, %v821
  %v853 = vadd.f32 %v808, %v825
  %v854 = vadd.f32 %v809, %v821
  %v855 = vadd.f32 %v810, %v825
  %v856 = vadd.f32 %v811, %v821
  %v857 = vadd.f32 %v812, %v825
  %v858 = vadd.f32 %v813, %v821
  %v859 = vadd.f32 %v814, %v825
  %v860 = vand.u32 2147483647, %v828
  %vm861 = vcmp.le.f32.partialorder %v860, 0.7853982
  %vm862 = vcmp.lt.s32.totalorder %v828, 0
  %v863 = vand.u32 %v828, 2139095040
  %v864 = vshrl.u32 %v863, 23
  %v865 = vsub.s32 %v864, 127
  %v866 = vand.u32 2147483647, %v828
  %v867 = vand.u32 %v866, 8388607
  %v868 = vor.u32 %v867, 8388608
  %v869 = vsub.s32 0, %v868
  %v870 = vadd.s32 %v865, 1
  %vm871 = vcmp.gt.s32.totalorder %v870, 0
  %v872 = vsel %vm871, %v870, 0
  %v873 = vshrl.u32 %v872, 5
  %v874 = vand.u32 %v872, 31
  %v875 = vsub.s32 32, %v874
  %v876 = vshrl.u32 683565275, %v875
  %v877 = vshll.u32 683565275, %v874
  %v878 = vshrl.u32 2475754826, %v875
  %v879 = vor.u32 %v877, %v878
  %v880 = vshll.u32 2475754826, %v874
  %v881 = vshrl.u32 2131351028, %v875
  %v882 = vor.u32 %v880, %v881
  %v883 = vshll.u32 2131351028, %v874
  %v884 = vshrl.u32 2102212464, %v875
  %v885 = vor.u32 %v883, %v884
  %v886 = vshll.u32 2102212464, %v874
  %v887 = vshrl.u32 920167782, %v875
  %v888 = vor.u32 %v886, %v887
  %v889 = vshll.u32 920167782, %v874
  %v890 = vshrl.u32 1326507024, %v875
  %v891 = vor.u32 %v889, %v890
  %vm892 = vcmp.lt.s32.totalorder %v873, 1
  %vm893 = vcmp.lt.s32.totalorder %v873, 2
  %vm894 = vcmp.lt.s32.totalorder %v873, 3
  %vm895 = vcmp.lt.s32.totalorder %v873, 4
  %v896 = vsel %vm892, %v876, %v879
  %v897 = vsel %vm895, %v885, 2102212464
  %v898 = vsel %vm894, %v882, %v897
  %v899 = vsel %vm893, %v896, %v898
  %v900 = vsel %vm892, %v879, %v882
  %v901 = vsel %vm895, %v888, 920167782
  %v902 = vsel %vm894, %v885, %v901
  %v903 = vsel %vm893, %v900, %v902
  %v904 = vsel %vm892, %v882, %v885
  %v905 = vsel %vm895, %v891, 1326507024
  %v906 = vsel %vm894, %v888, %v905
  %v907 = vsel %vm893, %v904, %v906
  %v908 = vshll.u32 %v868, 8
  %v909 = vmul.u32.u64.compose %v908, %v907
  %v910 = vextract.low.u32 %v909
  %v911 = vextract.high.u32 %v909
  %v912 = vmul.u32.u64.compose %v908, %v903
  %v913 = vextract.low.u32 %v912
  %v914 = vextract.high.u32 %v912
  %v915 = vmul.u32 %v908, %v899
  %v916 = vadd.s32 %v911, %v913
  %vm917 = vc.u32 %v911, %v913
  %v918 = vadd.s32 %v914, 1
  %v919 = vsel %vm917, %v918, %v914
  %v920 = vadd.s32 %v915, %v919
  %v921 = vadd.s32 %v920, 536870912
  %v922 = vshrl.u32 %v921, 30
  %v923 = vshll.u32 %v922, 30
  %v924 = vsub.s32 %v920, %v923
  %vm925 = vcmp.lt.s32.totalorder %v924, 0
  %v926 = vsub.s32 0, %v924
  %v927 = vsel %vm925, %v926, %v924
  %v928 = vclz %v927
  %v929 = vsub.s32 %v928, 2
  %vm930 = vcmp.gt.s32.totalorder 0, %v929
  %v931 = vsel %vm930, 0, %v929
  %v932 = vsub.s32 32, %v931
  %v933 = vshll.u32 %v924, %v931
  %v934 = vshrl.u32 %v916, %v932
  %v935 = vor.u32 %v933, %v934
  %v936 = vsub.s32 4294967266, %v931
  %v937 = vadd.s32 %v936, 127
  %v938 = vshll.u32 %v937, 23
  %v939 = vor.u32 4788187, %v938
  %v940 = vand.u32 2147483647, %v939
  %v942 = vcvt.s32.f32 %v935
  %v943 = vmul.f32 %v942, %v940
  %v944 = vxor.u32 %v943, 2147483648
  %v945 = vsel %vm862, %v944, %v943
  %v946 = vsub.s32 4, %v922
  %v947 = vsel %vm862, %v946, %v922
  %v948 = vsel %vm861, %v828, %v945
  %v949 = vsel %vm861, 0, %v947
  %v950 = vcosq.f32.pop %v948
  %v951 = vsinq.f32.pop %v948
  %vm952 = vweird.f32 %v828
  %v953 = vand.u32 %v949, 3
  %vm954 = vcmp.lt.s32.totalorder %v953, 2
  %vm955 = vcmp.eq.s32.totalorder %v953, 0
  %v956 = vxor.u32 %v951, 2147483648
  %v957 = vsel %vm955, %v950, %v956
  %vm958 = vcmp.eq.s32.totalorder %v953, 2
  %v959 = vxor.u32 %v950, 2147483648
  %v960 = vsel %vm958, %v959, %v951
  %v961 = vsel %vm954, %v957, %v960
  %v962 = vsel %vm952, nan, %v961
  %v963 = vand.u32 2147483647, %v829
  %vm964 = vcmp.le.f32.partialorder %v963, 0.7853982
  %vm965 = vcmp.lt.s32.totalorder %v829, 0
  %v966 = vand.u32 %v829, 2139095040
  %v967 = vshrl.u32 %v966, 23
  %v968 = vsub.s32 %v967, 127
  %v969 = vand.u32 2147483647, %v829
  %v970 = vand.u32 %v969, 8388607
  %v971 = vor.u32 %v970, 8388608
  %v972 = vsub.s32 0, %v971
  %v973 = vadd.s32 %v968, 1
  %vm974 = vcmp.gt.s32.totalorder %v973, 0
  %v975 = vsel %vm974, %v973, 0
  %v976 = vshrl.u32 %v975, 5
  %v977 = vand.u32 %v975, 31
  %v978 = vsub.s32 32, %v977
  %v979 = vshrl.u32 683565275, %v978
  %v980 = vshll.u32 683565275, %v977
  %v981 = vshrl.u32 2475754826, %v978
  %v982 = vor.u32 %v980, %v981
  %v983 = vshll.u32 2475754826, %v977
  %v984 = vshrl.u32 2131351028, %v978
  %v985 = vor.u32 %v983, %v984
  %v986 = vshll.u32 2131351028, %v977
  %v987 = vshrl.u32 2102212464, %v978
  %v988 = vor.u32 %v986, %v987
  %v989 = vshll.u32 2102212464, %v977
  %v990 = vshrl.u32 920167782, %v978
  %v991 = vor.u32 %v989, %v990
  %v992 = vshll.u32 920167782, %v977
  %v993 = vshrl.u32 1326507024, %v978
  %v994 = vor.u32 %v992, %v993
  %vm995 = vcmp.lt.s32.totalorder %v976, 1
  %vm996 = vcmp.lt.s32.totalorder %v976, 2
  %vm997 = vcmp.lt.s32.totalorder %v976, 3
  %vm998 = vcmp.lt.s32.totalorder %v976, 4
  %v999 = vsel %vm995, %v979, %v982
  %v1000 = vsel %vm998, %v988, 2102212464
  %v1001 = vsel %vm997, %v985, %v1000
  %v1002 = vsel %vm996, %v999, %v1001
  %v1003 = vsel %vm995, %v982, %v985
  %v1004 = vsel %vm998, %v991, 920167782
  %v1005 = vsel %vm997, %v988, %v1004
  %v1006 = vsel %vm996, %v1003, %v1005
  %v1007 = vsel %vm995, %v985, %v988
  %v1008 = vsel %vm998, %v994, 1326507024
  %v1009 = vsel %vm997, %v991, %v1008
  %v1010 = vsel %vm996, %v1007, %v1009
  %v1011 = vshll.u32 %v971, 8
  %v1012 = vmul.u32.u64.compose %v1011, %v1010
  %v1013 = vextract.low.u32 %v1012
  %v1014 = vextract.high.u32 %v1012
  %v1015 = vmul.u32.u64.compose %v1011, %v1006
  %v1016 = vextract.low.u32 %v1015
  %v1017 = vextract.high.u32 %v1015
  %v1018 = vmul.u32 %v1011, %v1002
  %v1019 = vadd.s32 %v1014, %v1016
  %vm1020 = vc.u32 %v1014, %v1016
  %v1021 = vadd.s32 %v1017, 1
  %v1022 = vsel %vm1020, %v1021, %v1017
  %v1023 = vadd.s32 %v1018, %v1022
  %v1024 = vadd.s32 %v1023, 536870912
  %v1025 = vshrl.u32 %v1024, 30
  %v1026 = vshll.u32 %v1025, 30
  %v1027 = vsub.s32 %v1023, %v1026
  %vm1028 = vcmp.lt.s32.totalorder %v1027, 0
  %v1029 = vsub.s32 0, %v1027
  %v1030 = vsel %vm1028, %v1029, %v1027
  %v1031 = vclz %v1030
  %v1032 = vsub.s32 %v1031, 2
  %vm1033 = vcmp.gt.s32.totalorder 0, %v1032
  %v1034 = vsel %vm1033, 0, %v1032
  %v1035 = vsub.s32 32, %v1034
  %v1036 = vshll.u32 %v1027, %v1034
  %v1037 = vshrl.u32 %v1019, %v1035
  %v1038 = vor.u32 %v1036, %v1037
  %v1039 = vsub.s32 4294967266, %v1034
  %v1040 = vadd.s32 %v1039, 127
  %v1041 = vshll.u32 %v1040, 23
  %v1042 = vor.u32 4788187, %v1041
  %v1043 = vand.u32 2147483647, %v1042
  %v1045 = vcvt.s32.f32 %v1038
  %v1046 = vmul.f32 %v1045, %v1043
  %v1047 = vxor.u32 %v1046, 2147483648
  %v1048 = vsel %vm965, %v1047, %v1046
  %v1049 = vsub.s32 4, %v1025
  %v1050 = vsel %vm965, %v1049, %v1025
  %v1051 = vsel %vm964, %v829, %v1048
  %v1052 = vsel %vm964, 0, %v1050
  %v1053 = vcosq.f32.pop %v1051
  %v1054 = vsinq.f32.pop %v1051
  %vm1055 = vweird.f32 %v829
  %v1056 = vand.u32 %v1052, 3
  %vm1057 = vcmp.lt.s32.totalorder %v1056, 2
  %vm1058 = vcmp.eq.s32.totalorder %v1056, 0
  %v1059 = vxor.u32 %v1054, 2147483648
  %v1060 = vsel %vm1058, %v1053, %v1059
  %vm1061 = vcmp.eq.s32.totalorder %v1056, 2
  %v1062 = vxor.u32 %v1053, 2147483648
  %v1063 = vsel %vm1061, %v1062, %v1054
  %v1064 = vsel %vm1057, %v1060, %v1063
  %v1065 = vsel %vm1055, nan, %v1064
  %v1066 = vand.u32 2147483647, %v830
  %vm1067 = vcmp.le.f32.partialorder %v1066, 0.7853982
  %vm1068 = vcmp.lt.s32.totalorder %v830, 0
  %v1069 = vand.u32 %v830, 2139095040
  %v1070 = vshrl.u32 %v1069, 23
  %v1071 = vsub.s32 %v1070, 127
  %v1072 = vand.u32 2147483647, %v830
  %v1073 = vand.u32 %v1072, 8388607
  %v1074 = vor.u32 %v1073, 8388608
  %v1075 = vsub.s32 0, %v1074
  %v1076 = vadd.s32 %v1071, 1
  %vm1077 = vcmp.gt.s32.totalorder %v1076, 0
  %v1078 = vsel %vm1077, %v1076, 0
  %v1079 = vshrl.u32 %v1078, 5
  %v1080 = vand.u32 %v1078, 31
  %v1081 = vsub.s32 32, %v1080
  %v1082 = vshrl.u32 683565275, %v1081
  %v1083 = vshll.u32 683565275, %v1080
  %v1084 = vshrl.u32 2475754826, %v1081
  %v1085 = vor.u32 %v1083, %v1084
  %v1086 = vshll.u32 2475754826, %v1080
  %v1087 = vshrl.u32 2131351028, %v1081
  %v1088 = vor.u32 %v1086, %v1087
  %v1089 = vshll.u32 2131351028, %v1080
  %v1090 = vshrl.u32 2102212464, %v1081
  %v1091 = vor.u32 %v1089, %v1090
  %v1092 = vshll.u32 2102212464, %v1080
  %v1093 = vshrl.u32 920167782, %v1081
  %v1094 = vor.u32 %v1092, %v1093
  %v1095 = vshll.u32 920167782, %v1080
  %v1096 = vshrl.u32 1326507024, %v1081
  %v1097 = vor.u32 %v1095, %v1096
  %vm1098 = vcmp.lt.s32.totalorder %v1079, 1
  %vm1099 = vcmp.lt.s32.totalorder %v1079, 2
  %vm1100 = vcmp.lt.s32.totalorder %v1079, 3
  %vm1101 = vcmp.lt.s32.totalorder %v1079, 4
  %v1102 = vsel %vm1098, %v1082, %v1085
  %v1103 = vsel %vm1101, %v1091, 2102212464
  %v1104 = vsel %vm1100, %v1088, %v1103
  %v1105 = vsel %vm1099, %v1102, %v1104
  %v1106 = vsel %vm1098, %v1085, %v1088
  %v1107 = vsel %vm1101, %v1094, 920167782
  %v1108 = vsel %vm1100, %v1091, %v1107
  %v1109 = vsel %vm1099, %v1106, %v1108
  %v1110 = vsel %vm1098, %v1088, %v1091
  %v1111 = vsel %vm1101, %v1097, 1326507024
  %v1112 = vsel %vm1100, %v1094, %v1111
  %v1113 = vsel %vm1099, %v1110, %v1112
  %v1114 = vshll.u32 %v1074, 8
  %v1115 = vmul.u32.u64.compose %v1114, %v1113
  %v1116 = vextract.low.u32 %v1115
  %v1117 = vextract.high.u32 %v1115
  %v1118 = vmul.u32.u64.compose %v1114, %v1109
  %v1119 = vextract.low.u32 %v1118
  %v1120 = vextract.high.u32 %v1118
  %v1121 = vmul.u32 %v1114, %v1105
  %v1122 = vadd.s32 %v1117, %v1119
  %vm1123 = vc.u32 %v1117, %v1119
  %v1124 = vadd.s32 %v1120, 1
  %v1125 = vsel %vm1123, %v1124, %v1120
  %v1126 = vadd.s32 %v1121, %v1125
  %v1127 = vadd.s32 %v1126, 536870912
  %v1128 = vshrl.u32 %v1127, 30
  %v1129 = vshll.u32 %v1128, 30
  %v1130 = vsub.s32 %v1126, %v1129
  %vm1131 = vcmp.lt.s32.totalorder %v1130, 0
  %v1132 = vsub.s32 0, %v1130
  %v1133 = vsel %vm1131, %v1132, %v1130
  %v1134 = vclz %v1133
  %v1135 = vsub.s32 %v1134, 2
  %vm1136 = vcmp.gt.s32.totalorder 0, %v1135
  %v1137 = vsel %vm1136, 0, %v1135
  %v1138 = vsub.s32 32, %v1137
  %v1139 = vshll.u32 %v1130, %v1137
  %v1140 = vshrl.u32 %v1122, %v1138
  %v1141 = vor.u32 %v1139, %v1140
  %v1142 = vsub.s32 4294967266, %v1137
  %v1143 = vadd.s32 %v1142, 127
  %v1144 = vshll.u32 %v1143, 23
  %v1145 = vor.u32 4788187, %v1144
  %v1146 = vand.u32 2147483647, %v1145
  %v1148 = vcvt.s32.f32 %v1141
  %v1149 = vmul.f32 %v1148, %v1146
  %v1150 = vxor.u32 %v1149, 2147483648
  %v1151 = vsel %vm1068, %v1150, %v1149
  %v1152 = vsub.s32 4, %v1128
  %v1153 = vsel %vm1068, %v1152, %v1128
  %v1154 = vsel %vm1067, %v830, %v1151
  %v1155 = vsel %vm1067, 0, %v1153
  %v1156 = vcosq.f32.pop %v1154
  %v1157 = vsinq.f32.pop %v1154
  %vm1158 = vweird.f32 %v830
  %v1159 = vand.u32 %v1155, 3
  %vm1160 = vcmp.lt.s32.totalorder %v1159, 2
  %vm1161 = vcmp.eq.s32.totalorder %v1159, 0
  %v1162 = vxor.u32 %v1157, 2147483648
  %v1163 = vsel %vm1161, %v1156, %v1162
  %vm1164 = vcmp.eq.s32.totalorder %v1159, 2
  %v1165 = vxor.u32 %v1156, 2147483648
  %v1166 = vsel %vm1164, %v1165, %v1157
  %v1167 = vsel %vm1160, %v1163, %v1166
  %v1168 = vsel %vm1158, nan, %v1167
  %v1169 = vand.u32 2147483647, %v831
  %vm1170 = vcmp.le.f32.partialorder %v1169, 0.7853982
  %vm1171 = vcmp.lt.s32.totalorder %v831, 0
  %v1172 = vand.u32 %v831, 2139095040
  %v1173 = vshrl.u32 %v1172, 23
  %v1174 = vsub.s32 %v1173, 127
  %v1175 = vand.u32 2147483647, %v831
  %v1176 = vand.u32 %v1175, 8388607
  %v1177 = vor.u32 %v1176, 8388608
  %v1178 = vsub.s32 0, %v1177
  %v1179 = vadd.s32 %v1174, 1
  %vm1180 = vcmp.gt.s32.totalorder %v1179, 0
  %v1181 = vsel %vm1180, %v1179, 0
  %v1182 = vshrl.u32 %v1181, 5
  %v1183 = vand.u32 %v1181, 31
  %v1184 = vsub.s32 32, %v1183
  %v1185 = vshrl.u32 683565275, %v1184
  %v1186 = vshll.u32 683565275, %v1183
  %v1187 = vshrl.u32 2475754826, %v1184
  %v1188 = vor.u32 %v1186, %v1187
  %v1189 = vshll.u32 2475754826, %v1183
  %v1190 = vshrl.u32 2131351028, %v1184
  %v1191 = vor.u32 %v1189, %v1190
  %v1192 = vshll.u32 2131351028, %v1183
  %v1193 = vshrl.u32 2102212464, %v1184
  %v1194 = vor.u32 %v1192, %v1193
  %v1195 = vshll.u32 2102212464, %v1183
  %v1196 = vshrl.u32 920167782, %v1184
  %v1197 = vor.u32 %v1195, %v1196
  %v1198 = vshll.u32 920167782, %v1183
  %v1199 = vshrl.u32 1326507024, %v1184
  %v1200 = vor.u32 %v1198, %v1199
  %vm1201 = vcmp.lt.s32.totalorder %v1182, 1
  %vm1202 = vcmp.lt.s32.totalorder %v1182, 2
  %vm1203 = vcmp.lt.s32.totalorder %v1182, 3
  %vm1204 = vcmp.lt.s32.totalorder %v1182, 4
  %v1205 = vsel %vm1201, %v1185, %v1188
  %v1206 = vsel %vm1204, %v1194, 2102212464
  %v1207 = vsel %vm1203, %v1191, %v1206
  %v1208 = vsel %vm1202, %v1205, %v1207
  %v1209 = vsel %vm1201, %v1188, %v1191
  %v1210 = vsel %vm1204, %v1197, 920167782
  %v1211 = vsel %vm1203, %v1194, %v1210
  %v1212 = vsel %vm1202, %v1209, %v1211
  %v1213 = vsel %vm1201, %v1191, %v1194
  %v1214 = vsel %vm1204, %v1200, 1326507024
  %v1215 = vsel %vm1203, %v1197, %v1214
  %v1216 = vsel %vm1202, %v1213, %v1215
  %v1217 = vshll.u32 %v1177, 8
  %v1218 = vmul.u32.u64.compose %v1217, %v1216
  %v1219 = vextract.low.u32 %v1218
  %v1220 = vextract.high.u32 %v1218
  %v1221 = vmul.u32.u64.compose %v1217, %v1212
  %v1222 = vextract.low.u32 %v1221
  %v1223 = vextract.high.u32 %v1221
  %v1224 = vmul.u32 %v1217, %v1208
  %v1225 = vadd.s32 %v1220, %v1222
  %vm1226 = vc.u32 %v1220, %v1222
  %v1227 = vadd.s32 %v1223, 1
  %v1228 = vsel %vm1226, %v1227, %v1223
  %v1229 = vadd.s32 %v1224, %v1228
  %v1230 = vadd.s32 %v1229, 536870912
  %v1231 = vshrl.u32 %v1230, 30
  %v1232 = vshll.u32 %v1231, 30
  %v1233 = vsub.s32 %v1229, %v1232
  %vm1234 = vcmp.lt.s32.totalorder %v1233, 0
  %v1235 = vsub.s32 0, %v1233
  %v1236 = vsel %vm1234, %v1235, %v1233
  %v1237 = vclz %v1236
  %v1238 = vsub.s32 %v1237, 2
  %vm1239 = vcmp.gt.s32.totalorder 0, %v1238
  %v1240 = vsel %vm1239, 0, %v1238
  %v1241 = vsub.s32 32, %v1240
  %v1242 = vshll.u32 %v1233, %v1240
  %v1243 = vshrl.u32 %v1225, %v1241
  %v1244 = vor.u32 %v1242, %v1243
  %v1245 = vsub.s32 4294967266, %v1240
  %v1246 = vadd.s32 %v1245, 127
  %v1247 = vshll.u32 %v1246, 23
  %v1248 = vor.u32 4788187, %v1247
  %v1249 = vand.u32 2147483647, %v1248
  %v1251 = vcvt.s32.f32 %v1244
  %v1252 = vmul.f32 %v1251, %v1249
  %v1253 = vxor.u32 %v1252, 2147483648
  %v1254 = vsel %vm1171, %v1253, %v1252
  %v1255 = vsub.s32 4, %v1231
  %v1256 = vsel %vm1171, %v1255, %v1231
  %v1257 = vsel %vm1170, %v831, %v1254
  %v1258 = vsel %vm1170, 0, %v1256
  %v1259 = vcosq.f32.pop %v1257
  %v1260 = vsinq.f32.pop %v1257
  %vm1261 = vweird.f32 %v831
  %v1262 = vand.u32 %v1258, 3
  %vm1263 = vcmp.lt.s32.totalorder %v1262, 2
  %vm1264 = vcmp.eq.s32.totalorder %v1262, 0
  %v1265 = vxor.u32 %v1260, 2147483648
  %v1266 = vsel %vm1264, %v1259, %v1265
  %vm1267 = vcmp.eq.s32.totalorder %v1262, 2
  %v1268 = vxor.u32 %v1259, 2147483648
  %v1269 = vsel %vm1267, %v1268, %v1260
  %v1270 = vsel %vm1263, %v1266, %v1269
  %v1271 = vsel %vm1261, nan, %v1270
  %v1272 = vand.u32 2147483647, %v832
  %vm1273 = vcmp.le.f32.partialorder %v1272, 0.7853982
  %vm1274 = vcmp.lt.s32.totalorder %v832, 0
  %v1275 = vand.u32 %v832, 2139095040
  %v1276 = vshrl.u32 %v1275, 23
  %v1277 = vsub.s32 %v1276, 127
  %v1278 = vand.u32 2147483647, %v832
  %v1279 = vand.u32 %v1278, 8388607
  %v1280 = vor.u32 %v1279, 8388608
  %v1281 = vsub.s32 0, %v1280
  %v1282 = vadd.s32 %v1277, 1
  %vm1283 = vcmp.gt.s32.totalorder %v1282, 0
  %v1284 = vsel %vm1283, %v1282, 0
  %v1285 = vshrl.u32 %v1284, 5
  %v1286 = vand.u32 %v1284, 31
  %v1287 = vsub.s32 32, %v1286
  %v1288 = vshrl.u32 683565275, %v1287
  %v1289 = vshll.u32 683565275, %v1286
  %v1290 = vshrl.u32 2475754826, %v1287
  %v1291 = vor.u32 %v1289, %v1290
  %v1292 = vshll.u32 2475754826, %v1286
  %v1293 = vshrl.u32 2131351028, %v1287
  %v1294 = vor.u32 %v1292, %v1293
  %v1295 = vshll.u32 2131351028, %v1286
  %v1296 = vshrl.u32 2102212464, %v1287
  %v1297 = vor.u32 %v1295, %v1296
  %v1298 = vshll.u32 2102212464, %v1286
  %v1299 = vshrl.u32 920167782, %v1287
  %v1300 = vor.u32 %v1298, %v1299
  %v1301 = vshll.u32 920167782, %v1286
  %v1302 = vshrl.u32 1326507024, %v1287
  %v1303 = vor.u32 %v1301, %v1302
  %vm1304 = vcmp.lt.s32.totalorder %v1285, 1
  %vm1305 = vcmp.lt.s32.totalorder %v1285, 2
  %vm1306 = vcmp.lt.s32.totalorder %v1285, 3
  %vm1307 = vcmp.lt.s32.totalorder %v1285, 4
  %v1308 = vsel %vm1304, %v1288, %v1291
  %v1309 = vsel %vm1307, %v1297, 2102212464
  %v1310 = vsel %vm1306, %v1294, %v1309
  %v1311 = vsel %vm1305, %v1308, %v1310
  %v1312 = vsel %vm1304, %v1291, %v1294
  %v1313 = vsel %vm1307, %v1300, 920167782
  %v1314 = vsel %vm1306, %v1297, %v1313
  %v1315 = vsel %vm1305, %v1312, %v1314
  %v1316 = vsel %vm1304, %v1294, %v1297
  %v1317 = vsel %vm1307, %v1303, 1326507024
  %v1318 = vsel %vm1306, %v1300, %v1317
  %v1319 = vsel %vm1305, %v1316, %v1318
  %v1320 = vshll.u32 %v1280, 8
  %v1321 = vmul.u32.u64.compose %v1320, %v1319
  %v1322 = vextract.low.u32 %v1321
  %v1323 = vextract.high.u32 %v1321
  %v1324 = vmul.u32.u64.compose %v1320, %v1315
  %v1325 = vextract.low.u32 %v1324
  %v1326 = vextract.high.u32 %v1324
  %v1327 = vmul.u32 %v1320, %v1311
  %v1328 = vadd.s32 %v1323, %v1325
  %vm1329 = vc.u32 %v1323, %v1325
  %v1330 = vadd.s32 %v1326, 1
  %v1331 = vsel %vm1329, %v1330, %v1326
  %v1332 = vadd.s32 %v1327, %v1331
  %v1333 = vadd.s32 %v1332, 536870912
  %v1334 = vshrl.u32 %v1333, 30
  %v1335 = vshll.u32 %v1334, 30
  %v1336 = vsub.s32 %v1332, %v1335
  %vm1337 = vcmp.lt.s32.totalorder %v1336, 0
  %v1338 = vsub.s32 0, %v1336
  %v1339 = vsel %vm1337, %v1338, %v1336
  %v1340 = vclz %v1339
  %v1341 = vsub.s32 %v1340, 2
  %vm1342 = vcmp.gt.s32.totalorder 0, %v1341
  %v1343 = vsel %vm1342, 0, %v1341
  %v1344 = vsub.s32 32, %v1343
  %v1345 = vshll.u32 %v1336, %v1343
  %v1346 = vshrl.u32 %v1328, %v1344
  %v1347 = vor.u32 %v1345, %v1346
  %v1348 = vsub.s32 4294967266, %v1343
  %v1349 = vadd.s32 %v1348, 127
  %v1350 = vshll.u32 %v1349, 23
  %v1351 = vor.u32 4788187, %v1350
  %v1352 = vand.u32 2147483647, %v1351
  %v1354 = vcvt.s32.f32 %v1347
  %v1355 = vmul.f32 %v1354, %v1352
  %v1356 = vxor.u32 %v1355, 2147483648
  %v1357 = vsel %vm1274, %v1356, %v1355
  %v1358 = vsub.s32 4, %v1334
  %v1359 = vsel %vm1274, %v1358, %v1334
  %v1360 = vsel %vm1273, %v832, %v1357
  %v1361 = vsel %vm1273, 0, %v1359
  %v1362 = vcosq.f32.pop %v1360
  %v1363 = vsinq.f32.pop %v1360
  %vm1364 = vweird.f32 %v832
  %v1365 = vand.u32 %v1361, 3
  %vm1366 = vcmp.lt.s32.totalorder %v1365, 2
  %vm1367 = vcmp.eq.s32.totalorder %v1365, 0
  %v1368 = vxor.u32 %v1363, 2147483648
  %v1369 = vsel %vm1367, %v1362, %v1368
  %vm1370 = vcmp.eq.s32.totalorder %v1365, 2
  %v1371 = vxor.u32 %v1362, 2147483648
  %v1372 = vsel %vm1370, %v1371, %v1363
  %v1373 = vsel %vm1366, %v1369, %v1372
  %v1374 = vsel %vm1364, nan, %v1373
  %v1375 = vand.u32 2147483647, %v833
  %vm1376 = vcmp.le.f32.partialorder %v1375, 0.7853982
  %vm1377 = vcmp.lt.s32.totalorder %v833, 0
  %v1378 = vand.u32 %v833, 2139095040
  %v1379 = vshrl.u32 %v1378, 23
  %v1380 = vsub.s32 %v1379, 127
  %v1381 = vand.u32 2147483647, %v833
  %v1382 = vand.u32 %v1381, 8388607
  %v1383 = vor.u32 %v1382, 8388608
  %v1384 = vsub.s32 0, %v1383
  %v1385 = vadd.s32 %v1380, 1
  %vm1386 = vcmp.gt.s32.totalorder %v1385, 0
  %v1387 = vsel %vm1386, %v1385, 0
  %v1388 = vshrl.u32 %v1387, 5
  %v1389 = vand.u32 %v1387, 31
  %v1390 = vsub.s32 32, %v1389
  %v1391 = vshrl.u32 683565275, %v1390
  %v1392 = vshll.u32 683565275, %v1389
  %v1393 = vshrl.u32 2475754826, %v1390
  %v1394 = vor.u32 %v1392, %v1393
  %v1395 = vshll.u32 2475754826, %v1389
  %v1396 = vshrl.u32 2131351028, %v1390
  %v1397 = vor.u32 %v1395, %v1396
  %v1398 = vshll.u32 2131351028, %v1389
  %v1399 = vshrl.u32 2102212464, %v1390
  %v1400 = vor.u32 %v1398, %v1399
  %v1401 = vshll.u32 2102212464, %v1389
  %v1402 = vshrl.u32 920167782, %v1390
  %v1403 = vor.u32 %v1401, %v1402
  %v1404 = vshll.u32 920167782, %v1389
  %v1405 = vshrl.u32 1326507024, %v1390
  %v1406 = vor.u32 %v1404, %v1405
  %vm1407 = vcmp.lt.s32.totalorder %v1388, 1
  %vm1408 = vcmp.lt.s32.totalorder %v1388, 2
  %vm1409 = vcmp.lt.s32.totalorder %v1388, 3
  %vm1410 = vcmp.lt.s32.totalorder %v1388, 4
  %v1411 = vsel %vm1407, %v1391, %v1394
  %v1412 = vsel %vm1410, %v1400, 2102212464
  %v1413 = vsel %vm1409, %v1397, %v1412
  %v1414 = vsel %vm1408, %v1411, %v1413
  %v1415 = vsel %vm1407, %v1394, %v1397
  %v1416 = vsel %vm1410, %v1403, 920167782
  %v1417 = vsel %vm1409, %v1400, %v1416
  %v1418 = vsel %vm1408, %v1415, %v1417
  %v1419 = vsel %vm1407, %v1397, %v1400
  %v1420 = vsel %vm1410, %v1406, 1326507024
  %v1421 = vsel %vm1409, %v1403, %v1420
  %v1422 = vsel %vm1408, %v1419, %v1421
  %v1423 = vshll.u32 %v1383, 8
  %v1424 = vmul.u32.u64.compose %v1423, %v1422
  %v1425 = vextract.low.u32 %v1424
  %v1426 = vextract.high.u32 %v1424
  %v1427 = vmul.u32.u64.compose %v1423, %v1418
  %v1428 = vextract.low.u32 %v1427
  %v1429 = vextract.high.u32 %v1427
  %v1430 = vmul.u32 %v1423, %v1414
  %v1431 = vadd.s32 %v1426, %v1428
  %vm1432 = vc.u32 %v1426, %v1428
  %v1433 = vadd.s32 %v1429, 1
  %v1434 = vsel %vm1432, %v1433, %v1429
  %v1435 = vadd.s32 %v1430, %v1434
  %v1436 = vadd.s32 %v1435, 536870912
  %v1437 = vshrl.u32 %v1436, 30
  %v1438 = vshll.u32 %v1437, 30
  %v1439 = vsub.s32 %v1435, %v1438
  %vm1440 = vcmp.lt.s32.totalorder %v1439, 0
  %v1441 = vsub.s32 0, %v1439
  %v1442 = vsel %vm1440, %v1441, %v1439
  %v1443 = vclz %v1442
  %v1444 = vsub.s32 %v1443, 2
  %vm1445 = vcmp.gt.s32.totalorder 0, %v1444
  %v1446 = vsel %vm1445, 0, %v1444
  %v1447 = vsub.s32 32, %v1446
  %v1448 = vshll.u32 %v1439, %v1446
  %v1449 = vshrl.u32 %v1431, %v1447
  %v1450 = vor.u32 %v1448, %v1449
  %v1451 = vsub.s32 4294967266, %v1446
  %v1452 = vadd.s32 %v1451, 127
  %v1453 = vshll.u32 %v1452, 23
  %v1454 = vor.u32 4788187, %v1453
  %v1455 = vand.u32 2147483647, %v1454
  %v1457 = vcvt.s32.f32 %v1450
  %v1458 = vmul.f32 %v1457, %v1455
  %v1459 = vxor.u32 %v1458, 2147483648
  %v1460 = vsel %vm1377, %v1459, %v1458
  %v1461 = vsub.s32 4, %v1437
  %v1462 = vsel %vm1377, %v1461, %v1437
  %v1463 = vsel %vm1376, %v833, %v1460
  %v1464 = vsel %vm1376, 0, %v1462
  %v1465 = vcosq.f32.pop %v1463
  %v1466 = vsinq.f32.pop %v1463
  %vm1467 = vweird.f32 %v833
  %v1468 = vand.u32 %v1464, 3
  %vm1469 = vcmp.lt.s32.totalorder %v1468, 2
  %vm1470 = vcmp.eq.s32.totalorder %v1468, 0
  %v1471 = vxor.u32 %v1466, 2147483648
  %v1472 = vsel %vm1470, %v1465, %v1471
  %vm1473 = vcmp.eq.s32.totalorder %v1468, 2
  %v1474 = vxor.u32 %v1465, 2147483648
  %v1475 = vsel %vm1473, %v1474, %v1466
  %v1476 = vsel %vm1469, %v1472, %v1475
  %v1477 = vsel %vm1467, nan, %v1476
  %v1478 = vand.u32 2147483647, %v834
  %vm1479 = vcmp.le.f32.partialorder %v1478, 0.7853982
  %vm1480 = vcmp.lt.s32.totalorder %v834, 0
  %v1481 = vand.u32 %v834, 2139095040
  %v1482 = vshrl.u32 %v1481, 23
  %v1483 = vsub.s32 %v1482, 127
  %v1484 = vand.u32 2147483647, %v834
  %v1485 = vand.u32 %v1484, 8388607
  %v1486 = vor.u32 %v1485, 8388608
  %v1487 = vsub.s32 0, %v1486
  %v1488 = vadd.s32 %v1483, 1
  %vm1489 = vcmp.gt.s32.totalorder %v1488, 0
  %v1490 = vsel %vm1489, %v1488, 0
  %v1491 = vshrl.u32 %v1490, 5
  %v1492 = vand.u32 %v1490, 31
  %v1493 = vsub.s32 32, %v1492
  %v1494 = vshrl.u32 683565275, %v1493
  %v1495 = vshll.u32 683565275, %v1492
  %v1496 = vshrl.u32 2475754826, %v1493
  %v1497 = vor.u32 %v1495, %v1496
  %v1498 = vshll.u32 2475754826, %v1492
  %v1499 = vshrl.u32 2131351028, %v1493
  %v1500 = vor.u32 %v1498, %v1499
  %v1501 = vshll.u32 2131351028, %v1492
  %v1502 = vshrl.u32 2102212464, %v1493
  %v1503 = vor.u32 %v1501, %v1502
  %v1504 = vshll.u32 2102212464, %v1492
  %v1505 = vshrl.u32 920167782, %v1493
  %v1506 = vor.u32 %v1504, %v1505
  %v1507 = vshll.u32 920167782, %v1492
  %v1508 = vshrl.u32 1326507024, %v1493
  %v1509 = vor.u32 %v1507, %v1508
  %vm1510 = vcmp.lt.s32.totalorder %v1491, 1
  %vm1511 = vcmp.lt.s32.totalorder %v1491, 2
  %vm1512 = vcmp.lt.s32.totalorder %v1491, 3
  %vm1513 = vcmp.lt.s32.totalorder %v1491, 4
  %v1514 = vsel %vm1510, %v1494, %v1497
  %v1515 = vsel %vm1513, %v1503, 2102212464
  %v1516 = vsel %vm1512, %v1500, %v1515
  %v1517 = vsel %vm1511, %v1514, %v1516
  %v1518 = vsel %vm1510, %v1497, %v1500
  %v1519 = vsel %vm1513, %v1506, 920167782
  %v1520 = vsel %vm1512, %v1503, %v1519
  %v1521 = vsel %vm1511, %v1518, %v1520
  %v1522 = vsel %vm1510, %v1500, %v1503
  %v1523 = vsel %vm1513, %v1509, 1326507024
  %v1524 = vsel %vm1512, %v1506, %v1523
  %v1525 = vsel %vm1511, %v1522, %v1524
  %v1526 = vshll.u32 %v1486, 8
  %v1527 = vmul.u32.u64.compose %v1526, %v1525
  %v1528 = vextract.low.u32 %v1527
  %v1529 = vextract.high.u32 %v1527
  %v1530 = vmul.u32.u64.compose %v1526, %v1521
  %v1531 = vextract.low.u32 %v1530
  %v1532 = vextract.high.u32 %v1530
  %v1533 = vmul.u32 %v1526, %v1517
  %v1534 = vadd.s32 %v1529, %v1531
  %vm1535 = vc.u32 %v1529, %v1531
  %v1536 = vadd.s32 %v1532, 1
  %v1537 = vsel %vm1535, %v1536, %v1532
  %v1538 = vadd.s32 %v1533, %v1537
  %v1539 = vadd.s32 %v1538, 536870912
  %v1540 = vshrl.u32 %v1539, 30
  %v1541 = vshll.u32 %v1540, 30
  %v1542 = vsub.s32 %v1538, %v1541
  %vm1543 = vcmp.lt.s32.totalorder %v1542, 0
  %v1544 = vsub.s32 0, %v1542
  %v1545 = vsel %vm1543, %v1544, %v1542
  %v1546 = vclz %v1545
  %v1547 = vsub.s32 %v1546, 2
  %vm1548 = vcmp.gt.s32.totalorder 0, %v1547
  %v1549 = vsel %vm1548, 0, %v1547
  %v1550 = vsub.s32 32, %v1549
  %v1551 = vshll.u32 %v1542, %v1549
  %v1552 = vshrl.u32 %v1534, %v1550
  %v1553 = vor.u32 %v1551, %v1552
  %v1554 = vsub.s32 4294967266, %v1549
  %v1555 = vadd.s32 %v1554, 127
  %v1556 = vshll.u32 %v1555, 23
  %v1557 = vor.u32 4788187, %v1556
  %v1558 = vand.u32 2147483647, %v1557
  %v1560 = vcvt.s32.f32 %v1553
  %v1561 = vmul.f32 %v1560, %v1558
  %v1562 = vxor.u32 %v1561, 2147483648
  %v1563 = vsel %vm1480, %v1562, %v1561
  %v1564 = vsub.s32 4, %v1540
  %v1565 = vsel %vm1480, %v1564, %v1540
  %v1566 = vsel %vm1479, %v834, %v1563
  %v1567 = vsel %vm1479, 0, %v1565
  %v1568 = vcosq.f32.pop %v1566
  %v1569 = vsinq.f32.pop %v1566
  %vm1570 = vweird.f32 %v834
  %v1571 = vand.u32 %v1567, 3
  %vm1572 = vcmp.lt.s32.totalorder %v1571, 2
  %vm1573 = vcmp.eq.s32.totalorder %v1571, 0
  %v1574 = vxor.u32 %v1569, 2147483648
  %v1575 = vsel %vm1573, %v1568, %v1574
  %vm1576 = vcmp.eq.s32.totalorder %v1571, 2
  %v1577 = vxor.u32 %v1568, 2147483648
  %v1578 = vsel %vm1576, %v1577, %v1569
  %v1579 = vsel %vm1572, %v1575, %v1578
  %v1580 = vsel %vm1570, nan, %v1579
  %v1581 = vand.u32 2147483647, %v835
  %vm1582 = vcmp.le.f32.partialorder %v1581, 0.7853982
  %vm1583 = vcmp.lt.s32.totalorder %v835, 0
  %v1584 = vand.u32 %v835, 2139095040
  %v1585 = vshrl.u32 %v1584, 23
  %v1586 = vsub.s32 %v1585, 127
  %v1587 = vand.u32 2147483647, %v835
  %v1588 = vand.u32 %v1587, 8388607
  %v1589 = vor.u32 %v1588, 8388608
  %v1590 = vsub.s32 0, %v1589
  %v1591 = vadd.s32 %v1586, 1
  %vm1592 = vcmp.gt.s32.totalorder %v1591, 0
  %v1593 = vsel %vm1592, %v1591, 0
  %v1594 = vshrl.u32 %v1593, 5
  %v1595 = vand.u32 %v1593, 31
  %v1596 = vsub.s32 32, %v1595
  %v1597 = vshrl.u32 683565275, %v1596
  %v1598 = vshll.u32 683565275, %v1595
  %v1599 = vshrl.u32 2475754826, %v1596
  %v1600 = vor.u32 %v1598, %v1599
  %v1601 = vshll.u32 2475754826, %v1595
  %v1602 = vshrl.u32 2131351028, %v1596
  %v1603 = vor.u32 %v1601, %v1602
  %v1604 = vshll.u32 2131351028, %v1595
  %v1605 = vshrl.u32 2102212464, %v1596
  %v1606 = vor.u32 %v1604, %v1605
  %v1607 = vshll.u32 2102212464, %v1595
  %v1608 = vshrl.u32 920167782, %v1596
  %v1609 = vor.u32 %v1607, %v1608
  %v1610 = vshll.u32 920167782, %v1595
  %v1611 = vshrl.u32 1326507024, %v1596
  %v1612 = vor.u32 %v1610, %v1611
  %vm1613 = vcmp.lt.s32.totalorder %v1594, 1
  %vm1614 = vcmp.lt.s32.totalorder %v1594, 2
  %vm1615 = vcmp.lt.s32.totalorder %v1594, 3
  %vm1616 = vcmp.lt.s32.totalorder %v1594, 4
  %v1617 = vsel %vm1613, %v1597, %v1600
  %v1618 = vsel %vm1616, %v1606, 2102212464
  %v1619 = vsel %vm1615, %v1603, %v1618
  %v1620 = vsel %vm1614, %v1617, %v1619
  %v1621 = vsel %vm1613, %v1600, %v1603
  %v1622 = vsel %vm1616, %v1609, 920167782
  %v1623 = vsel %vm1615, %v1606, %v1622
  %v1624 = vsel %vm1614, %v1621, %v1623
  %v1625 = vsel %vm1613, %v1603, %v1606
  %v1626 = vsel %vm1616, %v1612, 1326507024
  %v1627 = vsel %vm1615, %v1609, %v1626
  %v1628 = vsel %vm1614, %v1625, %v1627
  %v1629 = vshll.u32 %v1589, 8
  %v1630 = vmul.u32.u64.compose %v1629, %v1628
  %v1631 = vextract.low.u32 %v1630
  %v1632 = vextract.high.u32 %v1630
  %v1633 = vmul.u32.u64.compose %v1629, %v1624
  %v1634 = vextract.low.u32 %v1633
  %v1635 = vextract.high.u32 %v1633
  %v1636 = vmul.u32 %v1629, %v1620
  %v1637 = vadd.s32 %v1632, %v1634
  %vm1638 = vc.u32 %v1632, %v1634
  %v1639 = vadd.s32 %v1635, 1
  %v1640 = vsel %vm1638, %v1639, %v1635
  %v1641 = vadd.s32 %v1636, %v1640
  %v1642 = vadd.s32 %v1641, 536870912
  %v1643 = vshrl.u32 %v1642, 30
  %v1644 = vshll.u32 %v1643, 30
  %v1645 = vsub.s32 %v1641, %v1644
  %vm1646 = vcmp.lt.s32.totalorder %v1645, 0
  %v1647 = vsub.s32 0, %v1645
  %v1648 = vsel %vm1646, %v1647, %v1645
  %v1649 = vclz %v1648
  %v1650 = vsub.s32 %v1649, 2
  %vm1651 = vcmp.gt.s32.totalorder 0, %v1650
  %v1652 = vsel %vm1651, 0, %v1650
  %v1653 = vsub.s32 32, %v1652
  %v1654 = vshll.u32 %v1645, %v1652
  %v1655 = vshrl.u32 %v1637, %v1653
  %v1656 = vor.u32 %v1654, %v1655
  %v1657 = vsub.s32 4294967266, %v1652
  %v1658 = vadd.s32 %v1657, 127
  %v1659 = vshll.u32 %v1658, 23
  %v1660 = vor.u32 4788187, %v1659
  %v1661 = vand.u32 2147483647, %v1660
  %v1663 = vcvt.s32.f32 %v1656
  %v1664 = vmul.f32 %v1663, %v1661
  %v1665 = vxor.u32 %v1664, 2147483648
  %v1666 = vsel %vm1583, %v1665, %v1664
  %v1667 = vsub.s32 4, %v1643
  %v1668 = vsel %vm1583, %v1667, %v1643
  %v1669 = vsel %vm1582, %v835, %v1666
  %v1670 = vsel %vm1582, 0, %v1668
  %v1671 = vcosq.f32.pop %v1669
  %v1672 = vsinq.f32.pop %v1669
  %vm1673 = vweird.f32 %v835
  %v1674 = vand.u32 %v1670, 3
  %vm1675 = vcmp.lt.s32.totalorder %v1674, 2
  %vm1676 = vcmp.eq.s32.totalorder %v1674, 0
  %v1677 = vxor.u32 %v1672, 2147483648
  %v1678 = vsel %vm1676, %v1671, %v1677
  %vm1679 = vcmp.eq.s32.totalorder %v1674, 2
  %v1680 = vxor.u32 %v1671, 2147483648
  %v1681 = vsel %vm1679, %v1680, %v1672
  %v1682 = vsel %vm1675, %v1678, %v1681
  %v1683 = vsel %vm1673, nan, %v1682
  %v1684 = vand.u32 2147483647, %v836
  %vm1685 = vcmp.le.f32.partialorder %v1684, 0.7853982
  %vm1686 = vcmp.lt.s32.totalorder %v836, 0
  %v1687 = vand.u32 %v836, 2139095040
  %v1688 = vshrl.u32 %v1687, 23
  %v1689 = vsub.s32 %v1688, 127
  %v1690 = vand.u32 2147483647, %v836
  %v1691 = vand.u32 %v1690, 8388607
  %v1692 = vor.u32 %v1691, 8388608
  %v1693 = vsub.s32 0, %v1692
  %v1694 = vadd.s32 %v1689, 1
  %vm1695 = vcmp.gt.s32.totalorder %v1694, 0
  %v1696 = vsel %vm1695, %v1694, 0
  %v1697 = vshrl.u32 %v1696, 5
  %v1698 = vand.u32 %v1696, 31
  %v1699 = vsub.s32 32, %v1698
  %v1700 = vshrl.u32 683565275, %v1699
  %v1701 = vshll.u32 683565275, %v1698
  %v1702 = vshrl.u32 2475754826, %v1699
  %v1703 = vor.u32 %v1701, %v1702
  %v1704 = vshll.u32 2475754826, %v1698
  %v1705 = vshrl.u32 2131351028, %v1699
  %v1706 = vor.u32 %v1704, %v1705
  %v1707 = vshll.u32 2131351028, %v1698
  %v1708 = vshrl.u32 2102212464, %v1699
  %v1709 = vor.u32 %v1707, %v1708
  %v1710 = vshll.u32 2102212464, %v1698
  %v1711 = vshrl.u32 920167782, %v1699
  %v1712 = vor.u32 %v1710, %v1711
  %v1713 = vshll.u32 920167782, %v1698
  %v1714 = vshrl.u32 1326507024, %v1699
  %v1715 = vor.u32 %v1713, %v1714
  %vm1716 = vcmp.lt.s32.totalorder %v1697, 1
  %vm1717 = vcmp.lt.s32.totalorder %v1697, 2
  %vm1718 = vcmp.lt.s32.totalorder %v1697, 3
  %vm1719 = vcmp.lt.s32.totalorder %v1697, 4
  %v1720 = vsel %vm1716, %v1700, %v1703
  %v1721 = vsel %vm1719, %v1709, 2102212464
  %v1722 = vsel %vm1718, %v1706, %v1721
  %v1723 = vsel %vm1717, %v1720, %v1722
  %v1724 = vsel %vm1716, %v1703, %v1706
  %v1725 = vsel %vm1719, %v1712, 920167782
  %v1726 = vsel %vm1718, %v1709, %v1725
  %v1727 = vsel %vm1717, %v1724, %v1726
  %v1728 = vsel %vm1716, %v1706, %v1709
  %v1729 = vsel %vm1719, %v1715, 1326507024
  %v1730 = vsel %vm1718, %v1712, %v1729
  %v1731 = vsel %vm1717, %v1728, %v1730
  %v1732 = vshll.u32 %v1692, 8
  %v1733 = vmul.u32.u64.compose %v1732, %v1731
  %v1734 = vextract.low.u32 %v1733
  %v1735 = vextract.high.u32 %v1733
  %v1736 = vmul.u32.u64.compose %v1732, %v1727
  %v1737 = vextract.low.u32 %v1736
  %v1738 = vextract.high.u32 %v1736
  %v1739 = vmul.u32 %v1732, %v1723
  %v1740 = vadd.s32 %v1735, %v1737
  %vm1741 = vc.u32 %v1735, %v1737
  %v1742 = vadd.s32 %v1738, 1
  %v1743 = vsel %vm1741, %v1742, %v1738
  %v1744 = vadd.s32 %v1739, %v1743
  %v1745 = vadd.s32 %v1744, 536870912
  %v1746 = vshrl.u32 %v1745, 30
  %v1747 = vshll.u32 %v1746, 30
  %v1748 = vsub.s32 %v1744, %v1747
  %vm1749 = vcmp.lt.s32.totalorder %v1748, 0
  %v1750 = vsub.s32 0, %v1748
  %v1751 = vsel %vm1749, %v1750, %v1748
  %v1752 = vclz %v1751
  %v1753 = vsub.s32 %v1752, 2
  %vm1754 = vcmp.gt.s32.totalorder 0, %v1753
  %v1755 = vsel %vm1754, 0, %v1753
  %v1756 = vsub.s32 32, %v1755
  %v1757 = vshll.u32 %v1748, %v1755
  %v1758 = vshrl.u32 %v1740, %v1756
  %v1759 = vor.u32 %v1757, %v1758
  %v1760 = vsub.s32 4294967266, %v1755
  %v1761 = vadd.s32 %v1760, 127
  %v1762 = vshll.u32 %v1761, 23
  %v1763 = vor.u32 4788187, %v1762
  %v1764 = vand.u32 2147483647, %v1763
  %v1766 = vcvt.s32.f32 %v1759
  %v1767 = vmul.f32 %v1766, %v1764
  %v1768 = vxor.u32 %v1767, 2147483648
  %v1769 = vsel %vm1686, %v1768, %v1767
  %v1770 = vsub.s32 4, %v1746
  %v1771 = vsel %vm1686, %v1770, %v1746
  %v1772 = vsel %vm1685, %v836, %v1769
  %v1773 = vsel %vm1685, 0, %v1771
  %v1774 = vcosq.f32.pop %v1772
  %v1775 = vsinq.f32.pop %v1772
  %vm1776 = vweird.f32 %v836
  %v1777 = vand.u32 %v1773, 3
  %vm1778 = vcmp.lt.s32.totalorder %v1777, 2
  %vm1779 = vcmp.eq.s32.totalorder %v1777, 0
  %v1780 = vxor.u32 %v1775, 2147483648
  %v1781 = vsel %vm1779, %v1774, %v1780
  %vm1782 = vcmp.eq.s32.totalorder %v1777, 2
  %v1783 = vxor.u32 %v1774, 2147483648
  %v1784 = vsel %vm1782, %v1783, %v1775
  %v1785 = vsel %vm1778, %v1781, %v1784
  %v1786 = vsel %vm1776, nan, %v1785
  %v1787 = vand.u32 2147483647, %v837
  %vm1788 = vcmp.le.f32.partialorder %v1787, 0.7853982
  %vm1789 = vcmp.lt.s32.totalorder %v837, 0
  %v1790 = vand.u32 %v837, 2139095040
  %v1791 = vshrl.u32 %v1790, 23
  %v1792 = vsub.s32 %v1791, 127
  %v1793 = vand.u32 2147483647, %v837
  %v1794 = vand.u32 %v1793, 8388607
  %v1795 = vor.u32 %v1794, 8388608
  %v1796 = vsub.s32 0, %v1795
  %v1797 = vadd.s32 %v1792, 1
  %vm1798 = vcmp.gt.s32.totalorder %v1797, 0
  %v1799 = vsel %vm1798, %v1797, 0
  %v1800 = vshrl.u32 %v1799, 5
  %v1801 = vand.u32 %v1799, 31
  %v1802 = vsub.s32 32, %v1801
  %v1803 = vshrl.u32 683565275, %v1802
  %v1804 = vshll.u32 683565275, %v1801
  %v1805 = vshrl.u32 2475754826, %v1802
  %v1806 = vor.u32 %v1804, %v1805
  %v1807 = vshll.u32 2475754826, %v1801
  %v1808 = vshrl.u32 2131351028, %v1802
  %v1809 = vor.u32 %v1807, %v1808
  %v1810 = vshll.u32 2131351028, %v1801
  %v1811 = vshrl.u32 2102212464, %v1802
  %v1812 = vor.u32 %v1810, %v1811
  %v1813 = vshll.u32 2102212464, %v1801
  %v1814 = vshrl.u32 920167782, %v1802
  %v1815 = vor.u32 %v1813, %v1814
  %v1816 = vshll.u32 920167782, %v1801
  %v1817 = vshrl.u32 1326507024, %v1802
  %v1818 = vor.u32 %v1816, %v1817
  %vm1819 = vcmp.lt.s32.totalorder %v1800, 1
  %vm1820 = vcmp.lt.s32.totalorder %v1800, 2
  %vm1821 = vcmp.lt.s32.totalorder %v1800, 3
  %vm1822 = vcmp.lt.s32.totalorder %v1800, 4
  %v1823 = vsel %vm1819, %v1803, %v1806
  %v1824 = vsel %vm1822, %v1812, 2102212464
  %v1825 = vsel %vm1821, %v1809, %v1824
  %v1826 = vsel %vm1820, %v1823, %v1825
  %v1827 = vsel %vm1819, %v1806, %v1809
  %v1828 = vsel %vm1822, %v1815, 920167782
  %v1829 = vsel %vm1821, %v1812, %v1828
  %v1830 = vsel %vm1820, %v1827, %v1829
  %v1831 = vsel %vm1819, %v1809, %v1812
  %v1832 = vsel %vm1822, %v1818, 1326507024
  %v1833 = vsel %vm1821, %v1815, %v1832
  %v1834 = vsel %vm1820, %v1831, %v1833
  %v1835 = vshll.u32 %v1795, 8
  %v1836 = vmul.u32.u64.compose %v1835, %v1834
  %v1837 = vextract.low.u32 %v1836
  %v1838 = vextract.high.u32 %v1836
  %v1839 = vmul.u32.u64.compose %v1835, %v1830
  %v1840 = vextract.low.u32 %v1839
  %v1841 = vextract.high.u32 %v1839
  %v1842 = vmul.u32 %v1835, %v1826
  %v1843 = vadd.s32 %v1838, %v1840
  %vm1844 = vc.u32 %v1838, %v1840
  %v1845 = vadd.s32 %v1841, 1
  %v1846 = vsel %vm1844, %v1845, %v1841
  %v1847 = vadd.s32 %v1842, %v1846
  %v1848 = vadd.s32 %v1847, 536870912
  %v1849 = vshrl.u32 %v1848, 30
  %v1850 = vshll.u32 %v1849, 30
  %v1851 = vsub.s32 %v1847, %v1850
  %vm1852 = vcmp.lt.s32.totalorder %v1851, 0
  %v1853 = vsub.s32 0, %v1851
  %v1854 = vsel %vm1852, %v1853, %v1851
  %v1855 = vclz %v1854
  %v1856 = vsub.s32 %v1855, 2
  %vm1857 = vcmp.gt.s32.totalorder 0, %v1856
  %v1858 = vsel %vm1857, 0, %v1856
  %v1859 = vsub.s32 32, %v1858
  %v1860 = vshll.u32 %v1851, %v1858
  %v1861 = vshrl.u32 %v1843, %v1859
  %v1862 = vor.u32 %v1860, %v1861
  %v1863 = vsub.s32 4294967266, %v1858
  %v1864 = vadd.s32 %v1863, 127
  %v1865 = vshll.u32 %v1864, 23
  %v1866 = vor.u32 4788187, %v1865
  %v1867 = vand.u32 2147483647, %v1866
  %v1869 = vcvt.s32.f32 %v1862
  %v1870 = vmul.f32 %v1869, %v1867
  %v1871 = vxor.u32 %v1870, 2147483648
  %v1872 = vsel %vm1789, %v1871, %v1870
  %v1873 = vsub.s32 4, %v1849
  %v1874 = vsel %vm1789, %v1873, %v1849
  %v1875 = vsel %vm1788, %v837, %v1872
  %v1876 = vsel %vm1788, 0, %v1874
  %v1877 = vcosq.f32.pop %v1875
  %v1878 = vsinq.f32.pop %v1875
  %vm1879 = vweird.f32 %v837
  %v1880 = vand.u32 %v1876, 3
  %vm1881 = vcmp.lt.s32.totalorder %v1880, 2
  %vm1882 = vcmp.eq.s32.totalorder %v1880, 0
  %v1883 = vxor.u32 %v1878, 2147483648
  %v1884 = vsel %vm1882, %v1877, %v1883
  %vm1885 = vcmp.eq.s32.totalorder %v1880, 2
  %v1886 = vxor.u32 %v1877, 2147483648
  %v1887 = vsel %vm1885, %v1886, %v1878
  %v1888 = vsel %vm1881, %v1884, %v1887
  %v1889 = vsel %vm1879, nan, %v1888
  %v1890 = vand.u32 2147483647, %v838
  %vm1891 = vcmp.le.f32.partialorder %v1890, 0.7853982
  %vm1892 = vcmp.lt.s32.totalorder %v838, 0
  %v1893 = vand.u32 %v838, 2139095040
  %v1894 = vshrl.u32 %v1893, 23
  %v1895 = vsub.s32 %v1894, 127
  %v1896 = vand.u32 2147483647, %v838
  %v1897 = vand.u32 %v1896, 8388607
  %v1898 = vor.u32 %v1897, 8388608
  %v1899 = vsub.s32 0, %v1898
  %v1900 = vadd.s32 %v1895, 1
  %vm1901 = vcmp.gt.s32.totalorder %v1900, 0
  %v1902 = vsel %vm1901, %v1900, 0
  %v1903 = vshrl.u32 %v1902, 5
  %v1904 = vand.u32 %v1902, 31
  %v1905 = vsub.s32 32, %v1904
  %v1906 = vshrl.u32 683565275, %v1905
  %v1907 = vshll.u32 683565275, %v1904
  %v1908 = vshrl.u32 2475754826, %v1905
  %v1909 = vor.u32 %v1907, %v1908
  %v1910 = vshll.u32 2475754826, %v1904
  %v1911 = vshrl.u32 2131351028, %v1905
  %v1912 = vor.u32 %v1910, %v1911
  %v1913 = vshll.u32 2131351028, %v1904
  %v1914 = vshrl.u32 2102212464, %v1905
  %v1915 = vor.u32 %v1913, %v1914
  %v1916 = vshll.u32 2102212464, %v1904
  %v1917 = vshrl.u32 920167782, %v1905
  %v1918 = vor.u32 %v1916, %v1917
  %v1919 = vshll.u32 920167782, %v1904
  %v1920 = vshrl.u32 1326507024, %v1905
  %v1921 = vor.u32 %v1919, %v1920
  %vm1922 = vcmp.lt.s32.totalorder %v1903, 1
  %vm1923 = vcmp.lt.s32.totalorder %v1903, 2
  %vm1924 = vcmp.lt.s32.totalorder %v1903, 3
  %vm1925 = vcmp.lt.s32.totalorder %v1903, 4
  %v1926 = vsel %vm1922, %v1906, %v1909
  %v1927 = vsel %vm1925, %v1915, 2102212464
  %v1928 = vsel %vm1924, %v1912, %v1927
  %v1929 = vsel %vm1923, %v1926, %v1928
  %v1930 = vsel %vm1922, %v1909, %v1912
  %v1931 = vsel %vm1925, %v1918, 920167782
  %v1932 = vsel %vm1924, %v1915, %v1931
  %v1933 = vsel %vm1923, %v1930, %v1932
  %v1934 = vsel %vm1922, %v1912, %v1915
  %v1935 = vsel %vm1925, %v1921, 1326507024
  %v1936 = vsel %vm1924, %v1918, %v1935
  %v1937 = vsel %vm1923, %v1934, %v1936
  %v1938 = vshll.u32 %v1898, 8
  %v1939 = vmul.u32.u64.compose %v1938, %v1937
  %v1940 = vextract.low.u32 %v1939
  %v1941 = vextract.high.u32 %v1939
  %v1942 = vmul.u32.u64.compose %v1938, %v1933
  %v1943 = vextract.low.u32 %v1942
  %v1944 = vextract.high.u32 %v1942
  %v1945 = vmul.u32 %v1938, %v1929
  %v1946 = vadd.s32 %v1941, %v1943
  %vm1947 = vc.u32 %v1941, %v1943
  %v1948 = vadd.s32 %v1944, 1
  %v1949 = vsel %vm1947, %v1948, %v1944
  %v1950 = vadd.s32 %v1945, %v1949
  %v1951 = vadd.s32 %v1950, 536870912
  %v1952 = vshrl.u32 %v1951, 30
  %v1953 = vshll.u32 %v1952, 30
  %v1954 = vsub.s32 %v1950, %v1953
  %vm1955 = vcmp.lt.s32.totalorder %v1954, 0
  %v1956 = vsub.s32 0, %v1954
  %v1957 = vsel %vm1955, %v1956, %v1954
  %v1958 = vclz %v1957
  %v1959 = vsub.s32 %v1958, 2
  %vm1960 = vcmp.gt.s32.totalorder 0, %v1959
  %v1961 = vsel %vm1960, 0, %v1959
  %v1962 = vsub.s32 32, %v1961
  %v1963 = vshll.u32 %v1954, %v1961
  %v1964 = vshrl.u32 %v1946, %v1962
  %v1965 = vor.u32 %v1963, %v1964
  %v1966 = vsub.s32 4294967266, %v1961
  %v1967 = vadd.s32 %v1966, 127
  %v1968 = vshll.u32 %v1967, 23
  %v1969 = vor.u32 4788187, %v1968
  %v1970 = vand.u32 2147483647, %v1969
  %v1972 = vcvt.s32.f32 %v1965
  %v1973 = vmul.f32 %v1972, %v1970
  %v1974 = vxor.u32 %v1973, 2147483648
  %v1975 = vsel %vm1892, %v1974, %v1973
  %v1976 = vsub.s32 4, %v1952
  %v1977 = vsel %vm1892, %v1976, %v1952
  %v1978 = vsel %vm1891, %v838, %v1975
  %v1979 = vsel %vm1891, 0, %v1977
  %v1980 = vcosq.f32.pop %v1978
  %v1981 = vsinq.f32.pop %v1978
  %vm1982 = vweird.f32 %v838
  %v1983 = vand.u32 %v1979, 3
  %vm1984 = vcmp.lt.s32.totalorder %v1983, 2
  %vm1985 = vcmp.eq.s32.totalorder %v1983, 0
  %v1986 = vxor.u32 %v1981, 2147483648
  %v1987 = vsel %vm1985, %v1980, %v1986
  %vm1988 = vcmp.eq.s32.totalorder %v1983, 2
  %v1989 = vxor.u32 %v1980, 2147483648
  %v1990 = vsel %vm1988, %v1989, %v1981
  %v1991 = vsel %vm1984, %v1987, %v1990
  %v1992 = vsel %vm1982, nan, %v1991
  %v1993 = vand.u32 2147483647, %v839
  %vm1994 = vcmp.le.f32.partialorder %v1993, 0.7853982
  %vm1995 = vcmp.lt.s32.totalorder %v839, 0
  %v1996 = vand.u32 %v839, 2139095040
  %v1997 = vshrl.u32 %v1996, 23
  %v1998 = vsub.s32 %v1997, 127
  %v1999 = vand.u32 2147483647, %v839
  %v2000 = vand.u32 %v1999, 8388607
  %v2001 = vor.u32 %v2000, 8388608
  %v2002 = vsub.s32 0, %v2001
  %v2003 = vadd.s32 %v1998, 1
  %vm2004 = vcmp.gt.s32.totalorder %v2003, 0
  %v2005 = vsel %vm2004, %v2003, 0
  %v2006 = vshrl.u32 %v2005, 5
  %v2007 = vand.u32 %v2005, 31
  %v2008 = vsub.s32 32, %v2007
  %v2009 = vshrl.u32 683565275, %v2008
  %v2010 = vshll.u32 683565275, %v2007
  %v2011 = vshrl.u32 2475754826, %v2008
  %v2012 = vor.u32 %v2010, %v2011
  %v2013 = vshll.u32 2475754826, %v2007
  %v2014 = vshrl.u32 2131351028, %v2008
  %v2015 = vor.u32 %v2013, %v2014
  %v2016 = vshll.u32 2131351028, %v2007
  %v2017 = vshrl.u32 2102212464, %v2008
  %v2018 = vor.u32 %v2016, %v2017
  %v2019 = vshll.u32 2102212464, %v2007
  %v2020 = vshrl.u32 920167782, %v2008
  %v2021 = vor.u32 %v2019, %v2020
  %v2022 = vshll.u32 920167782, %v2007
  %v2023 = vshrl.u32 1326507024, %v2008
  %v2024 = vor.u32 %v2022, %v2023
  %vm2025 = vcmp.lt.s32.totalorder %v2006, 1
  %vm2026 = vcmp.lt.s32.totalorder %v2006, 2
  %vm2027 = vcmp.lt.s32.totalorder %v2006, 3
  %vm2028 = vcmp.lt.s32.totalorder %v2006, 4
  %v2029 = vsel %vm2025, %v2009, %v2012
  %v2030 = vsel %vm2028, %v2018, 2102212464
  %v2031 = vsel %vm2027, %v2015, %v2030
  %v2032 = vsel %vm2026, %v2029, %v2031
  %v2033 = vsel %vm2025, %v2012, %v2015
  %v2034 = vsel %vm2028, %v2021, 920167782
  %v2035 = vsel %vm2027, %v2018, %v2034
  %v2036 = vsel %vm2026, %v2033, %v2035
  %v2037 = vsel %vm2025, %v2015, %v2018
  %v2038 = vsel %vm2028, %v2024, 1326507024
  %v2039 = vsel %vm2027, %v2021, %v2038
  %v2040 = vsel %vm2026, %v2037, %v2039
  %v2041 = vshll.u32 %v2001, 8
  %v2042 = vmul.u32.u64.compose %v2041, %v2040
  %v2043 = vextract.low.u32 %v2042
  %v2044 = vextract.high.u32 %v2042
  %v2045 = vmul.u32.u64.compose %v2041, %v2036
  %v2046 = vextract.low.u32 %v2045
  %v2047 = vextract.high.u32 %v2045
  %v2048 = vmul.u32 %v2041, %v2032
  %v2049 = vadd.s32 %v2044, %v2046
  %vm2050 = vc.u32 %v2044, %v2046
  %v2051 = vadd.s32 %v2047, 1
  %v2052 = vsel %vm2050, %v2051, %v2047
  %v2053 = vadd.s32 %v2048, %v2052
  %v2054 = vadd.s32 %v2053, 536870912
  %v2055 = vshrl.u32 %v2054, 30
  %v2056 = vshll.u32 %v2055, 30
  %v2057 = vsub.s32 %v2053, %v2056
  %vm2058 = vcmp.lt.s32.totalorder %v2057, 0
  %v2059 = vsub.s32 0, %v2057
  %v2060 = vsel %vm2058, %v2059, %v2057
  %v2061 = vclz %v2060
  %v2062 = vsub.s32 %v2061, 2
  %vm2063 = vcmp.gt.s32.totalorder 0, %v2062
  %v2064 = vsel %vm2063, 0, %v2062
  %v2065 = vsub.s32 32, %v2064
  %v2066 = vshll.u32 %v2057, %v2064
  %v2067 = vshrl.u32 %v2049, %v2065
  %v2068 = vor.u32 %v2066, %v2067
  %v2069 = vsub.s32 4294967266, %v2064
  %v2070 = vadd.s32 %v2069, 127
  %v2071 = vshll.u32 %v2070, 23
  %v2072 = vor.u32 4788187, %v2071
  %v2073 = vand.u32 2147483647, %v2072
  %v2075 = vcvt.s32.f32 %v2068
  %v2076 = vmul.f32 %v2075, %v2073
  %v2077 = vxor.u32 %v2076, 2147483648
  %v2078 = vsel %vm1995, %v2077, %v2076
  %v2079 = vsub.s32 4, %v2055
  %v2080 = vsel %vm1995, %v2079, %v2055
  %v2081 = vsel %vm1994, %v839, %v2078
  %v2082 = vsel %vm1994, 0, %v2080
  %v2083 = vcosq.f32.pop %v2081
  %v2084 = vsinq.f32.pop %v2081
  %vm2085 = vweird.f32 %v839
  %v2086 = vand.u32 %v2082, 3
  %vm2087 = vcmp.lt.s32.totalorder %v2086, 2
  %vm2088 = vcmp.eq.s32.totalorder %v2086, 0
  %v2089 = vxor.u32 %v2084, 2147483648
  %v2090 = vsel %vm2088, %v2083, %v2089
  %vm2091 = vcmp.eq.s32.totalorder %v2086, 2
  %v2092 = vxor.u32 %v2083, 2147483648
  %v2093 = vsel %vm2091, %v2092, %v2084
  %v2094 = vsel %vm2087, %v2090, %v2093
  %v2095 = vsel %vm2085, nan, %v2094
  %v2096 = vand.u32 2147483647, %v840
  %vm2097 = vcmp.le.f32.partialorder %v2096, 0.7853982
  %vm2098 = vcmp.lt.s32.totalorder %v840, 0
  %v2099 = vand.u32 %v840, 2139095040
  %v2100 = vshrl.u32 %v2099, 23
  %v2101 = vsub.s32 %v2100, 127
  %v2102 = vand.u32 2147483647, %v840
  %v2103 = vand.u32 %v2102, 8388607
  %v2104 = vor.u32 %v2103, 8388608
  %v2105 = vsub.s32 0, %v2104
  %v2106 = vadd.s32 %v2101, 1
  %vm2107 = vcmp.gt.s32.totalorder %v2106, 0
  %v2108 = vsel %vm2107, %v2106, 0
  %v2109 = vshrl.u32 %v2108, 5
  %v2110 = vand.u32 %v2108, 31
  %v2111 = vsub.s32 32, %v2110
  %v2112 = vshrl.u32 683565275, %v2111
  %v2113 = vshll.u32 683565275, %v2110
  %v2114 = vshrl.u32 2475754826, %v2111
  %v2115 = vor.u32 %v2113, %v2114
  %v2116 = vshll.u32 2475754826, %v2110
  %v2117 = vshrl.u32 2131351028, %v2111
  %v2118 = vor.u32 %v2116, %v2117
  %v2119 = vshll.u32 2131351028, %v2110
  %v2120 = vshrl.u32 2102212464, %v2111
  %v2121 = vor.u32 %v2119, %v2120
  %v2122 = vshll.u32 2102212464, %v2110
  %v2123 = vshrl.u32 920167782, %v2111
  %v2124 = vor.u32 %v2122, %v2123
  %v2125 = vshll.u32 920167782, %v2110
  %v2126 = vshrl.u32 1326507024, %v2111
  %v2127 = vor.u32 %v2125, %v2126
  %vm2128 = vcmp.lt.s32.totalorder %v2109, 1
  %vm2129 = vcmp.lt.s32.totalorder %v2109, 2
  %vm2130 = vcmp.lt.s32.totalorder %v2109, 3
  %vm2131 = vcmp.lt.s32.totalorder %v2109, 4
  %v2132 = vsel %vm2128, %v2112, %v2115
  %v2133 = vsel %vm2131, %v2121, 2102212464
  %v2134 = vsel %vm2130, %v2118, %v2133
  %v2135 = vsel %vm2129, %v2132, %v2134
  %v2136 = vsel %vm2128, %v2115, %v2118
  %v2137 = vsel %vm2131, %v2124, 920167782
  %v2138 = vsel %vm2130, %v2121, %v2137
  %v2139 = vsel %vm2129, %v2136, %v2138
  %v2140 = vsel %vm2128, %v2118, %v2121
  %v2141 = vsel %vm2131, %v2127, 1326507024
  %v2142 = vsel %vm2130, %v2124, %v2141
  %v2143 = vsel %vm2129, %v2140, %v2142
  %v2144 = vshll.u32 %v2104, 8
  %v2145 = vmul.u32.u64.compose %v2144, %v2143
  %v2146 = vextract.low.u32 %v2145
  %v2147 = vextract.high.u32 %v2145
  %v2148 = vmul.u32.u64.compose %v2144, %v2139
  %v2149 = vextract.low.u32 %v2148
  %v2150 = vextract.high.u32 %v2148
  %v2151 = vmul.u32 %v2144, %v2135
  %v2152 = vadd.s32 %v2147, %v2149
  %vm2153 = vc.u32 %v2147, %v2149
  %v2154 = vadd.s32 %v2150, 1
  %v2155 = vsel %vm2153, %v2154, %v2150
  %v2156 = vadd.s32 %v2151, %v2155
  %v2157 = vadd.s32 %v2156, 536870912
  %v2158 = vshrl.u32 %v2157, 30
  %v2159 = vshll.u32 %v2158, 30
  %v2160 = vsub.s32 %v2156, %v2159
  %vm2161 = vcmp.lt.s32.totalorder %v2160, 0
  %v2162 = vsub.s32 0, %v2160
  %v2163 = vsel %vm2161, %v2162, %v2160
  %v2164 = vclz %v2163
  %v2165 = vsub.s32 %v2164, 2
  %vm2166 = vcmp.gt.s32.totalorder 0, %v2165
  %v2167 = vsel %vm2166, 0, %v2165
  %v2168 = vsub.s32 32, %v2167
  %v2169 = vshll.u32 %v2160, %v2167
  %v2170 = vshrl.u32 %v2152, %v2168
  %v2171 = vor.u32 %v2169, %v2170
  %v2172 = vsub.s32 4294967266, %v2167
  %v2173 = vadd.s32 %v2172, 127
  %v2174 = vshll.u32 %v2173, 23
  %v2175 = vor.u32 4788187, %v2174
  %v2176 = vand.u32 2147483647, %v2175
  %v2178 = vcvt.s32.f32 %v2171
  %v2179 = vmul.f32 %v2178, %v2176
  %v2180 = vxor.u32 %v2179, 2147483648
  %v2181 = vsel %vm2098, %v2180, %v2179
  %v2182 = vsub.s32 4, %v2158
  %v2183 = vsel %vm2098, %v2182, %v2158
  %v2184 = vsel %vm2097, %v840, %v2181
  %v2185 = vsel %vm2097, 0, %v2183
  %v2186 = vcosq.f32.pop %v2184
  %v2187 = vsinq.f32.pop %v2184
  %vm2188 = vweird.f32 %v840
  %v2189 = vand.u32 %v2185, 3
  %vm2190 = vcmp.lt.s32.totalorder %v2189, 2
  %vm2191 = vcmp.eq.s32.totalorder %v2189, 0
  %v2192 = vxor.u32 %v2187, 2147483648
  %v2193 = vsel %vm2191, %v2186, %v2192
  %vm2194 = vcmp.eq.s32.totalorder %v2189, 2
  %v2195 = vxor.u32 %v2186, 2147483648
  %v2196 = vsel %vm2194, %v2195, %v2187
  %v2197 = vsel %vm2190, %v2193, %v2196
  %v2198 = vsel %vm2188, nan, %v2197
  %v2199 = vand.u32 2147483647, %v841
  %vm2200 = vcmp.le.f32.partialorder %v2199, 0.7853982
  %vm2201 = vcmp.lt.s32.totalorder %v841, 0
  %v2202 = vand.u32 %v841, 2139095040
  %v2203 = vshrl.u32 %v2202, 23
  %v2204 = vsub.s32 %v2203, 127
  %v2205 = vand.u32 2147483647, %v841
  %v2206 = vand.u32 %v2205, 8388607
  %v2207 = vor.u32 %v2206, 8388608
  %v2208 = vsub.s32 0, %v2207
  %v2209 = vadd.s32 %v2204, 1
  %vm2210 = vcmp.gt.s32.totalorder %v2209, 0
  %v2211 = vsel %vm2210, %v2209, 0
  %v2212 = vshrl.u32 %v2211, 5
  %v2213 = vand.u32 %v2211, 31
  %v2214 = vsub.s32 32, %v2213
  %v2215 = vshrl.u32 683565275, %v2214
  %v2216 = vshll.u32 683565275, %v2213
  %v2217 = vshrl.u32 2475754826, %v2214
  %v2218 = vor.u32 %v2216, %v2217
  %v2219 = vshll.u32 2475754826, %v2213
  %v2220 = vshrl.u32 2131351028, %v2214
  %v2221 = vor.u32 %v2219, %v2220
  %v2222 = vshll.u32 2131351028, %v2213
  %v2223 = vshrl.u32 2102212464, %v2214
  %v2224 = vor.u32 %v2222, %v2223
  %v2225 = vshll.u32 2102212464, %v2213
  %v2226 = vshrl.u32 920167782, %v2214
  %v2227 = vor.u32 %v2225, %v2226
  %v2228 = vshll.u32 920167782, %v2213
  %v2229 = vshrl.u32 1326507024, %v2214
  %v2230 = vor.u32 %v2228, %v2229
  %vm2231 = vcmp.lt.s32.totalorder %v2212, 1
  %vm2232 = vcmp.lt.s32.totalorder %v2212, 2
  %vm2233 = vcmp.lt.s32.totalorder %v2212, 3
  %vm2234 = vcmp.lt.s32.totalorder %v2212, 4
  %v2235 = vsel %vm2231, %v2215, %v2218
  %v2236 = vsel %vm2234, %v2224, 2102212464
  %v2237 = vsel %vm2233, %v2221, %v2236
  %v2238 = vsel %vm2232, %v2235, %v2237
  %v2239 = vsel %vm2231, %v2218, %v2221
  %v2240 = vsel %vm2234, %v2227, 920167782
  %v2241 = vsel %vm2233, %v2224, %v2240
  %v2242 = vsel %vm2232, %v2239, %v2241
  %v2243 = vsel %vm2231, %v2221, %v2224
  %v2244 = vsel %vm2234, %v2230, 1326507024
  %v2245 = vsel %vm2233, %v2227, %v2244
  %v2246 = vsel %vm2232, %v2243, %v2245
  %v2247 = vshll.u32 %v2207, 8
  %v2248 = vmul.u32.u64.compose %v2247, %v2246
  %v2249 = vextract.low.u32 %v2248
  %v2250 = vextract.high.u32 %v2248
  %v2251 = vmul.u32.u64.compose %v2247, %v2242
  %v2252 = vextract.low.u32 %v2251
  %v2253 = vextract.high.u32 %v2251
  %v2254 = vmul.u32 %v2247, %v2238
  %v2255 = vadd.s32 %v2250, %v2252
  %vm2256 = vc.u32 %v2250, %v2252
  %v2257 = vadd.s32 %v2253, 1
  %v2258 = vsel %vm2256, %v2257, %v2253
  %v2259 = vadd.s32 %v2254, %v2258
  %v2260 = vadd.s32 %v2259, 536870912
  %v2261 = vshrl.u32 %v2260, 30
  %v2262 = vshll.u32 %v2261, 30
  %v2263 = vsub.s32 %v2259, %v2262
  %vm2264 = vcmp.lt.s32.totalorder %v2263, 0
  %v2265 = vsub.s32 0, %v2263
  %v2266 = vsel %vm2264, %v2265, %v2263
  %v2267 = vclz %v2266
  %v2268 = vsub.s32 %v2267, 2
  %vm2269 = vcmp.gt.s32.totalorder 0, %v2268
  %v2270 = vsel %vm2269, 0, %v2268
  %v2271 = vsub.s32 32, %v2270
  %v2272 = vshll.u32 %v2263, %v2270
  %v2273 = vshrl.u32 %v2255, %v2271
  %v2274 = vor.u32 %v2272, %v2273
  %v2275 = vsub.s32 4294967266, %v2270
  %v2276 = vadd.s32 %v2275, 127
  %v2277 = vshll.u32 %v2276, 23
  %v2278 = vor.u32 4788187, %v2277
  %v2279 = vand.u32 2147483647, %v2278
  %v2281 = vcvt.s32.f32 %v2274
  %v2282 = vmul.f32 %v2281, %v2279
  %v2283 = vxor.u32 %v2282, 2147483648
  %v2284 = vsel %vm2201, %v2283, %v2282
  %v2285 = vsub.s32 4, %v2261
  %v2286 = vsel %vm2201, %v2285, %v2261
  %v2287 = vsel %vm2200, %v841, %v2284
  %v2288 = vsel %vm2200, 0, %v2286
  %v2289 = vcosq.f32.pop %v2287
  %v2290 = vsinq.f32.pop %v2287
  %vm2291 = vweird.f32 %v841
  %v2292 = vand.u32 %v2288, 3
  %vm2293 = vcmp.lt.s32.totalorder %v2292, 2
  %vm2294 = vcmp.eq.s32.totalorder %v2292, 0
  %v2295 = vxor.u32 %v2290, 2147483648
  %v2296 = vsel %vm2294, %v2289, %v2295
  %vm2297 = vcmp.eq.s32.totalorder %v2292, 2
  %v2298 = vxor.u32 %v2289, 2147483648
  %v2299 = vsel %vm2297, %v2298, %v2290
  %v2300 = vsel %vm2293, %v2296, %v2299
  %v2301 = vsel %vm2291, nan, %v2300
  %v2302 = vand.u32 2147483647, %v842
  %vm2303 = vcmp.le.f32.partialorder %v2302, 0.7853982
  %vm2304 = vcmp.lt.s32.totalorder %v842, 0
  %v2305 = vand.u32 %v842, 2139095040
  %v2306 = vshrl.u32 %v2305, 23
  %v2307 = vsub.s32 %v2306, 127
  %v2308 = vand.u32 2147483647, %v842
  %v2309 = vand.u32 %v2308, 8388607
  %v2310 = vor.u32 %v2309, 8388608
  %v2311 = vsub.s32 0, %v2310
  %v2312 = vadd.s32 %v2307, 1
  %vm2313 = vcmp.gt.s32.totalorder %v2312, 0
  %v2314 = vsel %vm2313, %v2312, 0
  %v2315 = vshrl.u32 %v2314, 5
  %v2316 = vand.u32 %v2314, 31
  %v2317 = vsub.s32 32, %v2316
  %v2318 = vshrl.u32 683565275, %v2317
  %v2319 = vshll.u32 683565275, %v2316
  %v2320 = vshrl.u32 2475754826, %v2317
  %v2321 = vor.u32 %v2319, %v2320
  %v2322 = vshll.u32 2475754826, %v2316
  %v2323 = vshrl.u32 2131351028, %v2317
  %v2324 = vor.u32 %v2322, %v2323
  %v2325 = vshll.u32 2131351028, %v2316
  %v2326 = vshrl.u32 2102212464, %v2317
  %v2327 = vor.u32 %v2325, %v2326
  %v2328 = vshll.u32 2102212464, %v2316
  %v2329 = vshrl.u32 920167782, %v2317
  %v2330 = vor.u32 %v2328, %v2329
  %v2331 = vshll.u32 920167782, %v2316
  %v2332 = vshrl.u32 1326507024, %v2317
  %v2333 = vor.u32 %v2331, %v2332
  %vm2334 = vcmp.lt.s32.totalorder %v2315, 1
  %vm2335 = vcmp.lt.s32.totalorder %v2315, 2
  %vm2336 = vcmp.lt.s32.totalorder %v2315, 3
  %vm2337 = vcmp.lt.s32.totalorder %v2315, 4
  %v2338 = vsel %vm2334, %v2318, %v2321
  %v2339 = vsel %vm2337, %v2327, 2102212464
  %v2340 = vsel %vm2336, %v2324, %v2339
  %v2341 = vsel %vm2335, %v2338, %v2340
  %v2342 = vsel %vm2334, %v2321, %v2324
  %v2343 = vsel %vm2337, %v2330, 920167782
  %v2344 = vsel %vm2336, %v2327, %v2343
  %v2345 = vsel %vm2335, %v2342, %v2344
  %v2346 = vsel %vm2334, %v2324, %v2327
  %v2347 = vsel %vm2337, %v2333, 1326507024
  %v2348 = vsel %vm2336, %v2330, %v2347
  %v2349 = vsel %vm2335, %v2346, %v2348
  %v2350 = vshll.u32 %v2310, 8
  %v2351 = vmul.u32.u64.compose %v2350, %v2349
  %v2352 = vextract.low.u32 %v2351
  %v2353 = vextract.high.u32 %v2351
  %v2354 = vmul.u32.u64.compose %v2350, %v2345
  %v2355 = vextract.low.u32 %v2354
  %v2356 = vextract.high.u32 %v2354
  %v2357 = vmul.u32 %v2350, %v2341
  %v2358 = vadd.s32 %v2353, %v2355
  %vm2359 = vc.u32 %v2353, %v2355
  %v2360 = vadd.s32 %v2356, 1
  %v2361 = vsel %vm2359, %v2360, %v2356
  %v2362 = vadd.s32 %v2357, %v2361
  %v2363 = vadd.s32 %v2362, 536870912
  %v2364 = vshrl.u32 %v2363, 30
  %v2365 = vshll.u32 %v2364, 30
  %v2366 = vsub.s32 %v2362, %v2365
  %vm2367 = vcmp.lt.s32.totalorder %v2366, 0
  %v2368 = vsub.s32 0, %v2366
  %v2369 = vsel %vm2367, %v2368, %v2366
  %v2370 = vclz %v2369
  %v2371 = vsub.s32 %v2370, 2
  %vm2372 = vcmp.gt.s32.totalorder 0, %v2371
  %v2373 = vsel %vm2372, 0, %v2371
  %v2374 = vsub.s32 32, %v2373
  %v2375 = vshll.u32 %v2366, %v2373
  %v2376 = vshrl.u32 %v2358, %v2374
  %v2377 = vor.u32 %v2375, %v2376
  %v2378 = vsub.s32 4294967266, %v2373
  %v2379 = vadd.s32 %v2378, 127
  %v2380 = vshll.u32 %v2379, 23
  %v2381 = vor.u32 4788187, %v2380
  %v2382 = vand.u32 2147483647, %v2381
  %v2384 = vcvt.s32.f32 %v2377
  %v2385 = vmul.f32 %v2384, %v2382
  %v2386 = vxor.u32 %v2385, 2147483648
  %v2387 = vsel %vm2304, %v2386, %v2385
  %v2388 = vsub.s32 4, %v2364
  %v2389 = vsel %vm2304, %v2388, %v2364
  %v2390 = vsel %vm2303, %v842, %v2387
  %v2391 = vsel %vm2303, 0, %v2389
  %v2392 = vcosq.f32.pop %v2390
  %v2393 = vsinq.f32.pop %v2390
  %vm2394 = vweird.f32 %v842
  %v2395 = vand.u32 %v2391, 3
  %vm2396 = vcmp.lt.s32.totalorder %v2395, 2
  %vm2397 = vcmp.eq.s32.totalorder %v2395, 0
  %v2398 = vxor.u32 %v2393, 2147483648
  %v2399 = vsel %vm2397, %v2392, %v2398
  %vm2400 = vcmp.eq.s32.totalorder %v2395, 2
  %v2401 = vxor.u32 %v2392, 2147483648
  %v2402 = vsel %vm2400, %v2401, %v2393
  %v2403 = vsel %vm2396, %v2399, %v2402
  %v2404 = vsel %vm2394, nan, %v2403
  %v2405 = vand.u32 2147483647, %v843
  %vm2406 = vcmp.le.f32.partialorder %v2405, 0.7853982
  %vm2407 = vcmp.lt.s32.totalorder %v843, 0
  %v2408 = vand.u32 %v843, 2139095040
  %v2409 = vshrl.u32 %v2408, 23
  %v2410 = vsub.s32 %v2409, 127
  %v2411 = vand.u32 2147483647, %v843
  %v2412 = vand.u32 %v2411, 8388607
  %v2413 = vor.u32 %v2412, 8388608
  %v2414 = vsub.s32 0, %v2413
  %v2415 = vadd.s32 %v2410, 1
  %vm2416 = vcmp.gt.s32.totalorder %v2415, 0
  %v2417 = vsel %vm2416, %v2415, 0
  %v2418 = vshrl.u32 %v2417, 5
  %v2419 = vand.u32 %v2417, 31
  %v2420 = vsub.s32 32, %v2419
  %v2421 = vshrl.u32 683565275, %v2420
  %v2422 = vshll.u32 683565275, %v2419
  %v2423 = vshrl.u32 2475754826, %v2420
  %v2424 = vor.u32 %v2422, %v2423
  %v2425 = vshll.u32 2475754826, %v2419
  %v2426 = vshrl.u32 2131351028, %v2420
  %v2427 = vor.u32 %v2425, %v2426
  %v2428 = vshll.u32 2131351028, %v2419
  %v2429 = vshrl.u32 2102212464, %v2420
  %v2430 = vor.u32 %v2428, %v2429
  %v2431 = vshll.u32 2102212464, %v2419
  %v2432 = vshrl.u32 920167782, %v2420
  %v2433 = vor.u32 %v2431, %v2432
  %v2434 = vshll.u32 920167782, %v2419
  %v2435 = vshrl.u32 1326507024, %v2420
  %v2436 = vor.u32 %v2434, %v2435
  %vm2437 = vcmp.lt.s32.totalorder %v2418, 1
  %vm2438 = vcmp.lt.s32.totalorder %v2418, 2
  %vm2439 = vcmp.lt.s32.totalorder %v2418, 3
  %vm2440 = vcmp.lt.s32.totalorder %v2418, 4
  %v2441 = vsel %vm2437, %v2421, %v2424
  %v2442 = vsel %vm2440, %v2430, 2102212464
  %v2443 = vsel %vm2439, %v2427, %v2442
  %v2444 = vsel %vm2438, %v2441, %v2443
  %v2445 = vsel %vm2437, %v2424, %v2427
  %v2446 = vsel %vm2440, %v2433, 920167782
  %v2447 = vsel %vm2439, %v2430, %v2446
  %v2448 = vsel %vm2438, %v2445, %v2447
  %v2449 = vsel %vm2437, %v2427, %v2430
  %v2450 = vsel %vm2440, %v2436, 1326507024
  %v2451 = vsel %vm2439, %v2433, %v2450
  %v2452 = vsel %vm2438, %v2449, %v2451
  %v2453 = vshll.u32 %v2413, 8
  %v2454 = vmul.u32.u64.compose %v2453, %v2452
  %v2455 = vextract.low.u32 %v2454
  %v2456 = vextract.high.u32 %v2454
  %v2457 = vmul.u32.u64.compose %v2453, %v2448
  %v2458 = vextract.low.u32 %v2457
  %v2459 = vextract.high.u32 %v2457
  %v2460 = vmul.u32 %v2453, %v2444
  %v2461 = vadd.s32 %v2456, %v2458
  %vm2462 = vc.u32 %v2456, %v2458
  %v2463 = vadd.s32 %v2459, 1
  %v2464 = vsel %vm2462, %v2463, %v2459
  %v2465 = vadd.s32 %v2460, %v2464
  %v2466 = vadd.s32 %v2465, 536870912
  %v2467 = vshrl.u32 %v2466, 30
  %v2468 = vshll.u32 %v2467, 30
  %v2469 = vsub.s32 %v2465, %v2468
  %vm2470 = vcmp.lt.s32.totalorder %v2469, 0
  %v2471 = vsub.s32 0, %v2469
  %v2472 = vsel %vm2470, %v2471, %v2469
  %v2473 = vclz %v2472
  %v2474 = vsub.s32 %v2473, 2
  %vm2475 = vcmp.gt.s32.totalorder 0, %v2474
  %v2476 = vsel %vm2475, 0, %v2474
  %v2477 = vsub.s32 32, %v2476
  %v2478 = vshll.u32 %v2469, %v2476
  %v2479 = vshrl.u32 %v2461, %v2477
  %v2480 = vor.u32 %v2478, %v2479
  %v2481 = vsub.s32 4294967266, %v2476
  %v2482 = vadd.s32 %v2481, 127
  %v2483 = vshll.u32 %v2482, 23
  %v2484 = vor.u32 4788187, %v2483
  %v2485 = vand.u32 2147483647, %v2484
  %v2487 = vcvt.s32.f32 %v2480
  %v2488 = vmul.f32 %v2487, %v2485
  %v2489 = vxor.u32 %v2488, 2147483648
  %v2490 = vsel %vm2407, %v2489, %v2488
  %v2491 = vsub.s32 4, %v2467
  %v2492 = vsel %vm2407, %v2491, %v2467
  %v2493 = vsel %vm2406, %v843, %v2490
  %v2494 = vsel %vm2406, 0, %v2492
  %v2495 = vcosq.f32.pop %v2493
  %v2496 = vsinq.f32.pop %v2493
  %vm2497 = vweird.f32 %v843
  %v2498 = vand.u32 %v2494, 3
  %vm2499 = vcmp.lt.s32.totalorder %v2498, 2
  %vm2500 = vcmp.eq.s32.totalorder %v2498, 0
  %v2501 = vxor.u32 %v2496, 2147483648
  %v2502 = vsel %vm2500, %v2495, %v2501
  %vm2503 = vcmp.eq.s32.totalorder %v2498, 2
  %v2504 = vxor.u32 %v2495, 2147483648
  %v2505 = vsel %vm2503, %v2504, %v2496
  %v2506 = vsel %vm2499, %v2502, %v2505
  %v2507 = vsel %vm2497, nan, %v2506
  %v2508 = vand.u32 2147483647, %v844
  %vm2509 = vcmp.le.f32.partialorder %v2508, 0.7853982
  %vm2510 = vcmp.lt.s32.totalorder %v844, 0
  %v2511 = vand.u32 %v844, 2139095040
  %v2512 = vshrl.u32 %v2511, 23
  %v2513 = vsub.s32 %v2512, 127
  %v2514 = vand.u32 2147483647, %v844
  %v2515 = vand.u32 %v2514, 8388607
  %v2516 = vor.u32 %v2515, 8388608
  %v2517 = vsub.s32 0, %v2516
  %v2518 = vadd.s32 %v2513, 1
  %vm2519 = vcmp.gt.s32.totalorder %v2518, 0
  %v2520 = vsel %vm2519, %v2518, 0
  %v2521 = vshrl.u32 %v2520, 5
  %v2522 = vand.u32 %v2520, 31
  %v2523 = vsub.s32 32, %v2522
  %v2524 = vshrl.u32 683565275, %v2523
  %v2525 = vshll.u32 683565275, %v2522
  %v2526 = vshrl.u32 2475754826, %v2523
  %v2527 = vor.u32 %v2525, %v2526
  %v2528 = vshll.u32 2475754826, %v2522
  %v2529 = vshrl.u32 2131351028, %v2523
  %v2530 = vor.u32 %v2528, %v2529
  %v2531 = vshll.u32 2131351028, %v2522
  %v2532 = vshrl.u32 2102212464, %v2523
  %v2533 = vor.u32 %v2531, %v2532
  %v2534 = vshll.u32 2102212464, %v2522
  %v2535 = vshrl.u32 920167782, %v2523
  %v2536 = vor.u32 %v2534, %v2535
  %v2537 = vshll.u32 920167782, %v2522
  %v2538 = vshrl.u32 1326507024, %v2523
  %v2539 = vor.u32 %v2537, %v2538
  %vm2540 = vcmp.lt.s32.totalorder %v2521, 1
  %vm2541 = vcmp.lt.s32.totalorder %v2521, 2
  %vm2542 = vcmp.lt.s32.totalorder %v2521, 3
  %vm2543 = vcmp.lt.s32.totalorder %v2521, 4
  %v2544 = vsel %vm2540, %v2524, %v2527
  %v2545 = vsel %vm2543, %v2533, 2102212464
  %v2546 = vsel %vm2542, %v2530, %v2545
  %v2547 = vsel %vm2541, %v2544, %v2546
  %v2548 = vsel %vm2540, %v2527, %v2530
  %v2549 = vsel %vm2543, %v2536, 920167782
  %v2550 = vsel %vm2542, %v2533, %v2549
  %v2551 = vsel %vm2541, %v2548, %v2550
  %v2552 = vsel %vm2540, %v2530, %v2533
  %v2553 = vsel %vm2543, %v2539, 1326507024
  %v2554 = vsel %vm2542, %v2536, %v2553
  %v2555 = vsel %vm2541, %v2552, %v2554
  %v2556 = vshll.u32 %v2516, 8
  %v2557 = vmul.u32.u64.compose %v2556, %v2555
  %v2558 = vextract.low.u32 %v2557
  %v2559 = vextract.high.u32 %v2557
  %v2560 = vmul.u32.u64.compose %v2556, %v2551
  %v2561 = vextract.low.u32 %v2560
  %v2562 = vextract.high.u32 %v2560
  %v2563 = vmul.u32 %v2556, %v2547
  %v2564 = vadd.s32 %v2559, %v2561
  %vm2565 = vc.u32 %v2559, %v2561
  %v2566 = vadd.s32 %v2562, 1
  %v2567 = vsel %vm2565, %v2566, %v2562
  %v2568 = vadd.s32 %v2563, %v2567
  %v2569 = vadd.s32 %v2568, 536870912
  %v2570 = vshrl.u32 %v2569, 30
  %v2571 = vshll.u32 %v2570, 30
  %v2572 = vsub.s32 %v2568, %v2571
  %vm2573 = vcmp.lt.s32.totalorder %v2572, 0
  %v2574 = vsub.s32 0, %v2572
  %v2575 = vsel %vm2573, %v2574, %v2572
  %v2576 = vclz %v2575
  %v2577 = vsub.s32 %v2576, 2
  %vm2578 = vcmp.gt.s32.totalorder 0, %v2577
  %v2579 = vsel %vm2578, 0, %v2577
  %v2580 = vsub.s32 32, %v2579
  %v2581 = vshll.u32 %v2572, %v2579
  %v2582 = vshrl.u32 %v2564, %v2580
  %v2583 = vor.u32 %v2581, %v2582
  %v2584 = vsub.s32 4294967266, %v2579
  %v2585 = vadd.s32 %v2584, 127
  %v2586 = vshll.u32 %v2585, 23
  %v2587 = vor.u32 4788187, %v2586
  %v2588 = vand.u32 2147483647, %v2587
  %v2590 = vcvt.s32.f32 %v2583
  %v2591 = vmul.f32 %v2590, %v2588
  %v2592 = vxor.u32 %v2591, 2147483648
  %v2593 = vsel %vm2510, %v2592, %v2591
  %v2594 = vsub.s32 4, %v2570
  %v2595 = vsel %vm2510, %v2594, %v2570
  %v2596 = vsel %vm2509, %v844, %v2593
  %v2597 = vsel %vm2509, 0, %v2595
  %v2598 = vcosq.f32.pop %v2596
  %v2599 = vsinq.f32.pop %v2596
  %vm2600 = vweird.f32 %v844
  %v2601 = vand.u32 %v2597, 3
  %vm2602 = vcmp.lt.s32.totalorder %v2601, 2
  %vm2603 = vcmp.eq.s32.totalorder %v2601, 0
  %v2604 = vxor.u32 %v2599, 2147483648
  %v2605 = vsel %vm2603, %v2598, %v2604
  %vm2606 = vcmp.eq.s32.totalorder %v2601, 2
  %v2607 = vxor.u32 %v2598, 2147483648
  %v2608 = vsel %vm2606, %v2607, %v2599
  %v2609 = vsel %vm2602, %v2605, %v2608
  %v2610 = vsel %vm2600, nan, %v2609
  %v2611 = vand.u32 2147483647, %v845
  %vm2612 = vcmp.le.f32.partialorder %v2611, 0.7853982
  %vm2613 = vcmp.lt.s32.totalorder %v845, 0
  %v2614 = vand.u32 %v845, 2139095040
  %v2615 = vshrl.u32 %v2614, 23
  %v2616 = vsub.s32 %v2615, 127
  %v2617 = vand.u32 2147483647, %v845
  %v2618 = vand.u32 %v2617, 8388607
  %v2619 = vor.u32 %v2618, 8388608
  %v2620 = vsub.s32 0, %v2619
  %v2621 = vadd.s32 %v2616, 1
  %vm2622 = vcmp.gt.s32.totalorder %v2621, 0
  %v2623 = vsel %vm2622, %v2621, 0
  %v2624 = vshrl.u32 %v2623, 5
  %v2625 = vand.u32 %v2623, 31
  %v2626 = vsub.s32 32, %v2625
  %v2627 = vshrl.u32 683565275, %v2626
  %v2628 = vshll.u32 683565275, %v2625
  %v2629 = vshrl.u32 2475754826, %v2626
  %v2630 = vor.u32 %v2628, %v2629
  %v2631 = vshll.u32 2475754826, %v2625
  %v2632 = vshrl.u32 2131351028, %v2626
  %v2633 = vor.u32 %v2631, %v2632
  %v2634 = vshll.u32 2131351028, %v2625
  %v2635 = vshrl.u32 2102212464, %v2626
  %v2636 = vor.u32 %v2634, %v2635
  %v2637 = vshll.u32 2102212464, %v2625
  %v2638 = vshrl.u32 920167782, %v2626
  %v2639 = vor.u32 %v2637, %v2638
  %v2640 = vshll.u32 920167782, %v2625
  %v2641 = vshrl.u32 1326507024, %v2626
  %v2642 = vor.u32 %v2640, %v2641
  %vm2643 = vcmp.lt.s32.totalorder %v2624, 1
  %vm2644 = vcmp.lt.s32.totalorder %v2624, 2
  %vm2645 = vcmp.lt.s32.totalorder %v2624, 3
  %vm2646 = vcmp.lt.s32.totalorder %v2624, 4
  %v2647 = vsel %vm2643, %v2627, %v2630
  %v2648 = vsel %vm2646, %v2636, 2102212464
  %v2649 = vsel %vm2645, %v2633, %v2648
  %v2650 = vsel %vm2644, %v2647, %v2649
  %v2651 = vsel %vm2643, %v2630, %v2633
  %v2652 = vsel %vm2646, %v2639, 920167782
  %v2653 = vsel %vm2645, %v2636, %v2652
  %v2654 = vsel %vm2644, %v2651, %v2653
  %v2655 = vsel %vm2643, %v2633, %v2636
  %v2656 = vsel %vm2646, %v2642, 1326507024
  %v2657 = vsel %vm2645, %v2639, %v2656
  %v2658 = vsel %vm2644, %v2655, %v2657
  %v2659 = vshll.u32 %v2619, 8
  %v2660 = vmul.u32.u64.compose %v2659, %v2658
  %v2661 = vextract.low.u32 %v2660
  %v2662 = vextract.high.u32 %v2660
  %v2663 = vmul.u32.u64.compose %v2659, %v2654
  %v2664 = vextract.low.u32 %v2663
  %v2665 = vextract.high.u32 %v2663
  %v2666 = vmul.u32 %v2659, %v2650
  %v2667 = vadd.s32 %v2662, %v2664
  %vm2668 = vc.u32 %v2662, %v2664
  %v2669 = vadd.s32 %v2665, 1
  %v2670 = vsel %vm2668, %v2669, %v2665
  %v2671 = vadd.s32 %v2666, %v2670
  %v2672 = vadd.s32 %v2671, 536870912
  %v2673 = vshrl.u32 %v2672, 30
  %v2674 = vshll.u32 %v2673, 30
  %v2675 = vsub.s32 %v2671, %v2674
  %vm2676 = vcmp.lt.s32.totalorder %v2675, 0
  %v2677 = vsub.s32 0, %v2675
  %v2678 = vsel %vm2676, %v2677, %v2675
  %v2679 = vclz %v2678
  %v2680 = vsub.s32 %v2679, 2
  %vm2681 = vcmp.gt.s32.totalorder 0, %v2680
  %v2682 = vsel %vm2681, 0, %v2680
  %v2683 = vsub.s32 32, %v2682
  %v2684 = vshll.u32 %v2675, %v2682
  %v2685 = vshrl.u32 %v2667, %v2683
  %v2686 = vor.u32 %v2684, %v2685
  %v2687 = vsub.s32 4294967266, %v2682
  %v2688 = vadd.s32 %v2687, 127
  %v2689 = vshll.u32 %v2688, 23
  %v2690 = vor.u32 4788187, %v2689
  %v2691 = vand.u32 2147483647, %v2690
  %v2693 = vcvt.s32.f32 %v2686
  %v2694 = vmul.f32 %v2693, %v2691
  %v2695 = vxor.u32 %v2694, 2147483648
  %v2696 = vsel %vm2613, %v2695, %v2694
  %v2697 = vsub.s32 4, %v2673
  %v2698 = vsel %vm2613, %v2697, %v2673
  %v2699 = vsel %vm2612, %v845, %v2696
  %v2700 = vsel %vm2612, 0, %v2698
  %v2701 = vcosq.f32.pop %v2699
  %v2702 = vsinq.f32.pop %v2699
  %vm2703 = vweird.f32 %v845
  %v2704 = vand.u32 %v2700, 3
  %vm2705 = vcmp.lt.s32.totalorder %v2704, 2
  %vm2706 = vcmp.eq.s32.totalorder %v2704, 0
  %v2707 = vxor.u32 %v2702, 2147483648
  %v2708 = vsel %vm2706, %v2701, %v2707
  %vm2709 = vcmp.eq.s32.totalorder %v2704, 2
  %v2710 = vxor.u32 %v2701, 2147483648
  %v2711 = vsel %vm2709, %v2710, %v2702
  %v2712 = vsel %vm2705, %v2708, %v2711
  %v2713 = vsel %vm2703, nan, %v2712
  %v2714 = vand.u32 2147483647, %v846
  %vm2715 = vcmp.le.f32.partialorder %v2714, 0.7853982
  %vm2716 = vcmp.lt.s32.totalorder %v846, 0
  %v2717 = vand.u32 %v846, 2139095040
  %v2718 = vshrl.u32 %v2717, 23
  %v2719 = vsub.s32 %v2718, 127
  %v2720 = vand.u32 2147483647, %v846
  %v2721 = vand.u32 %v2720, 8388607
  %v2722 = vor.u32 %v2721, 8388608
  %v2723 = vsub.s32 0, %v2722
  %v2724 = vadd.s32 %v2719, 1
  %vm2725 = vcmp.gt.s32.totalorder %v2724, 0
  %v2726 = vsel %vm2725, %v2724, 0
  %v2727 = vshrl.u32 %v2726, 5
  %v2728 = vand.u32 %v2726, 31
  %v2729 = vsub.s32 32, %v2728
  %v2730 = vshrl.u32 683565275, %v2729
  %v2731 = vshll.u32 683565275, %v2728
  %v2732 = vshrl.u32 2475754826, %v2729
  %v2733 = vor.u32 %v2731, %v2732
  %v2734 = vshll.u32 2475754826, %v2728
  %v2735 = vshrl.u32 2131351028, %v2729
  %v2736 = vor.u32 %v2734, %v2735
  %v2737 = vshll.u32 2131351028, %v2728
  %v2738 = vshrl.u32 2102212464, %v2729
  %v2739 = vor.u32 %v2737, %v2738
  %v2740 = vshll.u32 2102212464, %v2728
  %v2741 = vshrl.u32 920167782, %v2729
  %v2742 = vor.u32 %v2740, %v2741
  %v2743 = vshll.u32 920167782, %v2728
  %v2744 = vshrl.u32 1326507024, %v2729
  %v2745 = vor.u32 %v2743, %v2744
  %vm2746 = vcmp.lt.s32.totalorder %v2727, 1
  %vm2747 = vcmp.lt.s32.totalorder %v2727, 2
  %vm2748 = vcmp.lt.s32.totalorder %v2727, 3
  %vm2749 = vcmp.lt.s32.totalorder %v2727, 4
  %v2750 = vsel %vm2746, %v2730, %v2733
  %v2751 = vsel %vm2749, %v2739, 2102212464
  %v2752 = vsel %vm2748, %v2736, %v2751
  %v2753 = vsel %vm2747, %v2750, %v2752
  %v2754 = vsel %vm2746, %v2733, %v2736
  %v2755 = vsel %vm2749, %v2742, 920167782
  %v2756 = vsel %vm2748, %v2739, %v2755
  %v2757 = vsel %vm2747, %v2754, %v2756
  %v2758 = vsel %vm2746, %v2736, %v2739
  %v2759 = vsel %vm2749, %v2745, 1326507024
  %v2760 = vsel %vm2748, %v2742, %v2759
  %v2761 = vsel %vm2747, %v2758, %v2760
  %v2762 = vshll.u32 %v2722, 8
  %v2763 = vmul.u32.u64.compose %v2762, %v2761
  %v2764 = vextract.low.u32 %v2763
  %v2765 = vextract.high.u32 %v2763
  %v2766 = vmul.u32.u64.compose %v2762, %v2757
  %v2767 = vextract.low.u32 %v2766
  %v2768 = vextract.high.u32 %v2766
  %v2769 = vmul.u32 %v2762, %v2753
  %v2770 = vadd.s32 %v2765, %v2767
  %vm2771 = vc.u32 %v2765, %v2767
  %v2772 = vadd.s32 %v2768, 1
  %v2773 = vsel %vm2771, %v2772, %v2768
  %v2774 = vadd.s32 %v2769, %v2773
  %v2775 = vadd.s32 %v2774, 536870912
  %v2776 = vshrl.u32 %v2775, 30
  %v2777 = vshll.u32 %v2776, 30
  %v2778 = vsub.s32 %v2774, %v2777
  %vm2779 = vcmp.lt.s32.totalorder %v2778, 0
  %v2780 = vsub.s32 0, %v2778
  %v2781 = vsel %vm2779, %v2780, %v2778
  %v2782 = vclz %v2781
  %v2783 = vsub.s32 %v2782, 2
  %vm2784 = vcmp.gt.s32.totalorder 0, %v2783
  %v2785 = vsel %vm2784, 0, %v2783
  %v2786 = vsub.s32 32, %v2785
  %v2787 = vshll.u32 %v2778, %v2785
  %v2788 = vshrl.u32 %v2770, %v2786
  %v2789 = vor.u32 %v2787, %v2788
  %v2790 = vsub.s32 4294967266, %v2785
  %v2791 = vadd.s32 %v2790, 127
  %v2792 = vshll.u32 %v2791, 23
  %v2793 = vor.u32 4788187, %v2792
  %v2794 = vand.u32 2147483647, %v2793
  %v2796 = vcvt.s32.f32 %v2789
  %v2797 = vmul.f32 %v2796, %v2794
  %v2798 = vxor.u32 %v2797, 2147483648
  %v2799 = vsel %vm2716, %v2798, %v2797
  %v2800 = vsub.s32 4, %v2776
  %v2801 = vsel %vm2716, %v2800, %v2776
  %v2802 = vsel %vm2715, %v846, %v2799
  %v2803 = vsel %vm2715, 0, %v2801
  %v2804 = vcosq.f32.pop %v2802
  %v2805 = vsinq.f32.pop %v2802
  %vm2806 = vweird.f32 %v846
  %v2807 = vand.u32 %v2803, 3
  %vm2808 = vcmp.lt.s32.totalorder %v2807, 2
  %vm2809 = vcmp.eq.s32.totalorder %v2807, 0
  %v2810 = vxor.u32 %v2805, 2147483648
  %v2811 = vsel %vm2809, %v2804, %v2810
  %vm2812 = vcmp.eq.s32.totalorder %v2807, 2
  %v2813 = vxor.u32 %v2804, 2147483648
  %v2814 = vsel %vm2812, %v2813, %v2805
  %v2815 = vsel %vm2808, %v2811, %v2814
  %v2816 = vsel %vm2806, nan, %v2815
  %v2817 = vand.u32 2147483647, %v847
  %vm2818 = vcmp.le.f32.partialorder %v2817, 0.7853982
  %vm2819 = vcmp.lt.s32.totalorder %v847, 0
  %v2820 = vand.u32 %v847, 2139095040
  %v2821 = vshrl.u32 %v2820, 23
  %v2822 = vsub.s32 %v2821, 127
  %v2823 = vand.u32 2147483647, %v847
  %v2824 = vand.u32 %v2823, 8388607
  %v2825 = vor.u32 %v2824, 8388608
  %v2826 = vsub.s32 0, %v2825
  %v2827 = vadd.s32 %v2822, 1
  %vm2828 = vcmp.gt.s32.totalorder %v2827, 0
  %v2829 = vsel %vm2828, %v2827, 0
  %v2830 = vshrl.u32 %v2829, 5
  %v2831 = vand.u32 %v2829, 31
  %v2832 = vsub.s32 32, %v2831
  %v2833 = vshrl.u32 683565275, %v2832
  %v2834 = vshll.u32 683565275, %v2831
  %v2835 = vshrl.u32 2475754826, %v2832
  %v2836 = vor.u32 %v2834, %v2835
  %v2837 = vshll.u32 2475754826, %v2831
  %v2838 = vshrl.u32 2131351028, %v2832
  %v2839 = vor.u32 %v2837, %v2838
  %v2840 = vshll.u32 2131351028, %v2831
  %v2841 = vshrl.u32 2102212464, %v2832
  %v2842 = vor.u32 %v2840, %v2841
  %v2843 = vshll.u32 2102212464, %v2831
  %v2844 = vshrl.u32 920167782, %v2832
  %v2845 = vor.u32 %v2843, %v2844
  %v2846 = vshll.u32 920167782, %v2831
  %v2847 = vshrl.u32 1326507024, %v2832
  %v2848 = vor.u32 %v2846, %v2847
  %vm2849 = vcmp.lt.s32.totalorder %v2830, 1
  %vm2850 = vcmp.lt.s32.totalorder %v2830, 2
  %vm2851 = vcmp.lt.s32.totalorder %v2830, 3
  %vm2852 = vcmp.lt.s32.totalorder %v2830, 4
  %v2853 = vsel %vm2849, %v2833, %v2836
  %v2854 = vsel %vm2852, %v2842, 2102212464
  %v2855 = vsel %vm2851, %v2839, %v2854
  %v2856 = vsel %vm2850, %v2853, %v2855
  %v2857 = vsel %vm2849, %v2836, %v2839
  %v2858 = vsel %vm2852, %v2845, 920167782
  %v2859 = vsel %vm2851, %v2842, %v2858
  %v2860 = vsel %vm2850, %v2857, %v2859
  %v2861 = vsel %vm2849, %v2839, %v2842
  %v2862 = vsel %vm2852, %v2848, 1326507024
  %v2863 = vsel %vm2851, %v2845, %v2862
  %v2864 = vsel %vm2850, %v2861, %v2863
  %v2865 = vshll.u32 %v2825, 8
  %v2866 = vmul.u32.u64.compose %v2865, %v2864
  %v2867 = vextract.low.u32 %v2866
  %v2868 = vextract.high.u32 %v2866
  %v2869 = vmul.u32.u64.compose %v2865, %v2860
  %v2870 = vextract.low.u32 %v2869
  %v2871 = vextract.high.u32 %v2869
  %v2872 = vmul.u32 %v2865, %v2856
  %v2873 = vadd.s32 %v2868, %v2870
  %vm2874 = vc.u32 %v2868, %v2870
  %v2875 = vadd.s32 %v2871, 1
  %v2876 = vsel %vm2874, %v2875, %v2871
  %v2877 = vadd.s32 %v2872, %v2876
  %v2878 = vadd.s32 %v2877, 536870912
  %v2879 = vshrl.u32 %v2878, 30
  %v2880 = vshll.u32 %v2879, 30
  %v2881 = vsub.s32 %v2877, %v2880
  %vm2882 = vcmp.lt.s32.totalorder %v2881, 0
  %v2883 = vsub.s32 0, %v2881
  %v2884 = vsel %vm2882, %v2883, %v2881
  %v2885 = vclz %v2884
  %v2886 = vsub.s32 %v2885, 2
  %vm2887 = vcmp.gt.s32.totalorder 0, %v2886
  %v2888 = vsel %vm2887, 0, %v2886
  %v2889 = vsub.s32 32, %v2888
  %v2890 = vshll.u32 %v2881, %v2888
  %v2891 = vshrl.u32 %v2873, %v2889
  %v2892 = vor.u32 %v2890, %v2891
  %v2893 = vsub.s32 4294967266, %v2888
  %v2894 = vadd.s32 %v2893, 127
  %v2895 = vshll.u32 %v2894, 23
  %v2896 = vor.u32 4788187, %v2895
  %v2897 = vand.u32 2147483647, %v2896
  %v2899 = vcvt.s32.f32 %v2892
  %v2900 = vmul.f32 %v2899, %v2897
  %v2901 = vxor.u32 %v2900, 2147483648
  %v2902 = vsel %vm2819, %v2901, %v2900
  %v2903 = vsub.s32 4, %v2879
  %v2904 = vsel %vm2819, %v2903, %v2879
  %v2905 = vsel %vm2818, %v847, %v2902
  %v2906 = vsel %vm2818, 0, %v2904
  %v2907 = vcosq.f32.pop %v2905
  %v2908 = vsinq.f32.pop %v2905
  %vm2909 = vweird.f32 %v847
  %v2910 = vand.u32 %v2906, 3
  %vm2911 = vcmp.lt.s32.totalorder %v2910, 2
  %vm2912 = vcmp.eq.s32.totalorder %v2910, 0
  %v2913 = vxor.u32 %v2908, 2147483648
  %v2914 = vsel %vm2912, %v2907, %v2913
  %vm2915 = vcmp.eq.s32.totalorder %v2910, 2
  %v2916 = vxor.u32 %v2907, 2147483648
  %v2917 = vsel %vm2915, %v2916, %v2908
  %v2918 = vsel %vm2911, %v2914, %v2917
  %v2919 = vsel %vm2909, nan, %v2918
  %v2920 = vand.u32 2147483647, %v848
  %vm2921 = vcmp.le.f32.partialorder %v2920, 0.7853982
  %vm2922 = vcmp.lt.s32.totalorder %v848, 0
  %v2923 = vand.u32 %v848, 2139095040
  %v2924 = vshrl.u32 %v2923, 23
  %v2925 = vsub.s32 %v2924, 127
  %v2926 = vand.u32 2147483647, %v848
  %v2927 = vand.u32 %v2926, 8388607
  %v2928 = vor.u32 %v2927, 8388608
  %v2929 = vsub.s32 0, %v2928
  %v2930 = vadd.s32 %v2925, 1
  %vm2931 = vcmp.gt.s32.totalorder %v2930, 0
  %v2932 = vsel %vm2931, %v2930, 0
  %v2933 = vshrl.u32 %v2932, 5
  %v2934 = vand.u32 %v2932, 31
  %v2935 = vsub.s32 32, %v2934
  %v2936 = vshrl.u32 683565275, %v2935
  %v2937 = vshll.u32 683565275, %v2934
  %v2938 = vshrl.u32 2475754826, %v2935
  %v2939 = vor.u32 %v2937, %v2938
  %v2940 = vshll.u32 2475754826, %v2934
  %v2941 = vshrl.u32 2131351028, %v2935
  %v2942 = vor.u32 %v2940, %v2941
  %v2943 = vshll.u32 2131351028, %v2934
  %v2944 = vshrl.u32 2102212464, %v2935
  %v2945 = vor.u32 %v2943, %v2944
  %v2946 = vshll.u32 2102212464, %v2934
  %v2947 = vshrl.u32 920167782, %v2935
  %v2948 = vor.u32 %v2946, %v2947
  %v2949 = vshll.u32 920167782, %v2934
  %v2950 = vshrl.u32 1326507024, %v2935
  %v2951 = vor.u32 %v2949, %v2950
  %vm2952 = vcmp.lt.s32.totalorder %v2933, 1
  %vm2953 = vcmp.lt.s32.totalorder %v2933, 2
  %vm2954 = vcmp.lt.s32.totalorder %v2933, 3
  %vm2955 = vcmp.lt.s32.totalorder %v2933, 4
  %v2956 = vsel %vm2952, %v2936, %v2939
  %v2957 = vsel %vm2955, %v2945, 2102212464
  %v2958 = vsel %vm2954, %v2942, %v2957
  %v2959 = vsel %vm2953, %v2956, %v2958
  %v2960 = vsel %vm2952, %v2939, %v2942
  %v2961 = vsel %vm2955, %v2948, 920167782
  %v2962 = vsel %vm2954, %v2945, %v2961
  %v2963 = vsel %vm2953, %v2960, %v2962
  %v2964 = vsel %vm2952, %v2942, %v2945
  %v2965 = vsel %vm2955, %v2951, 1326507024
  %v2966 = vsel %vm2954, %v2948, %v2965
  %v2967 = vsel %vm2953, %v2964, %v2966
  %v2968 = vshll.u32 %v2928, 8
  %v2969 = vmul.u32.u64.compose %v2968, %v2967
  %v2970 = vextract.low.u32 %v2969
  %v2971 = vextract.high.u32 %v2969
  %v2972 = vmul.u32.u64.compose %v2968, %v2963
  %v2973 = vextract.low.u32 %v2972
  %v2974 = vextract.high.u32 %v2972
  %v2975 = vmul.u32 %v2968, %v2959
  %v2976 = vadd.s32 %v2971, %v2973
  %vm2977 = vc.u32 %v2971, %v2973
  %v2978 = vadd.s32 %v2974, 1
  %v2979 = vsel %vm2977, %v2978, %v2974
  %v2980 = vadd.s32 %v2975, %v2979
  %v2981 = vadd.s32 %v2980, 536870912
  %v2982 = vshrl.u32 %v2981, 30
  %v2983 = vshll.u32 %v2982, 30
  %v2984 = vsub.s32 %v2980, %v2983
  %vm2985 = vcmp.lt.s32.totalorder %v2984, 0
  %v2986 = vsub.s32 0, %v2984
  %v2987 = vsel %vm2985, %v2986, %v2984
  %v2988 = vclz %v2987
  %v2989 = vsub.s32 %v2988, 2
  %vm2990 = vcmp.gt.s32.totalorder 0, %v2989
  %v2991 = vsel %vm2990, 0, %v2989
  %v2992 = vsub.s32 32, %v2991
  %v2993 = vshll.u32 %v2984, %v2991
  %v2994 = vshrl.u32 %v2976, %v2992
  %v2995 = vor.u32 %v2993, %v2994
  %v2996 = vsub.s32 4294967266, %v2991
  %v2997 = vadd.s32 %v2996, 127
  %v2998 = vshll.u32 %v2997, 23
  %v2999 = vor.u32 4788187, %v2998
  %v3000 = vand.u32 2147483647, %v2999
  %v3002 = vcvt.s32.f32 %v2995
  %v3003 = vmul.f32 %v3002, %v3000
  %v3004 = vxor.u32 %v3003, 2147483648
  %v3005 = vsel %vm2922, %v3004, %v3003
  %v3006 = vsub.s32 4, %v2982
  %v3007 = vsel %vm2922, %v3006, %v2982
  %v3008 = vsel %vm2921, %v848, %v3005
  %v3009 = vsel %vm2921, 0, %v3007
  %v3010 = vcosq.f32.pop %v3008
  %v3011 = vsinq.f32.pop %v3008
  %vm3012 = vweird.f32 %v848
  %v3013 = vand.u32 %v3009, 3
  %vm3014 = vcmp.lt.s32.totalorder %v3013, 2
  %vm3015 = vcmp.eq.s32.totalorder %v3013, 0
  %v3016 = vxor.u32 %v3011, 2147483648
  %v3017 = vsel %vm3015, %v3010, %v3016
  %vm3018 = vcmp.eq.s32.totalorder %v3013, 2
  %v3019 = vxor.u32 %v3010, 2147483648
  %v3020 = vsel %vm3018, %v3019, %v3011
  %v3021 = vsel %vm3014, %v3017, %v3020
  %v3022 = vsel %vm3012, nan, %v3021
  %v3023 = vand.u32 2147483647, %v849
  %vm3024 = vcmp.le.f32.partialorder %v3023, 0.7853982
  %vm3025 = vcmp.lt.s32.totalorder %v849, 0
  %v3026 = vand.u32 %v849, 2139095040
  %v3027 = vshrl.u32 %v3026, 23
  %v3028 = vsub.s32 %v3027, 127
  %v3029 = vand.u32 2147483647, %v849
  %v3030 = vand.u32 %v3029, 8388607
  %v3031 = vor.u32 %v3030, 8388608
  %v3032 = vsub.s32 0, %v3031
  %v3033 = vadd.s32 %v3028, 1
  %vm3034 = vcmp.gt.s32.totalorder %v3033, 0
  %v3035 = vsel %vm3034, %v3033, 0
  %v3036 = vshrl.u32 %v3035, 5
  %v3037 = vand.u32 %v3035, 31
  %v3038 = vsub.s32 32, %v3037
  %v3039 = vshrl.u32 683565275, %v3038
  %v3040 = vshll.u32 683565275, %v3037
  %v3041 = vshrl.u32 2475754826, %v3038
  %v3042 = vor.u32 %v3040, %v3041
  %v3043 = vshll.u32 2475754826, %v3037
  %v3044 = vshrl.u32 2131351028, %v3038
  %v3045 = vor.u32 %v3043, %v3044
  %v3046 = vshll.u32 2131351028, %v3037
  %v3047 = vshrl.u32 2102212464, %v3038
  %v3048 = vor.u32 %v3046, %v3047
  %v3049 = vshll.u32 2102212464, %v3037
  %v3050 = vshrl.u32 920167782, %v3038
  %v3051 = vor.u32 %v3049, %v3050
  %v3052 = vshll.u32 920167782, %v3037
  %v3053 = vshrl.u32 1326507024, %v3038
  %v3054 = vor.u32 %v3052, %v3053
  %vm3055 = vcmp.lt.s32.totalorder %v3036, 1
  %vm3056 = vcmp.lt.s32.totalorder %v3036, 2
  %vm3057 = vcmp.lt.s32.totalorder %v3036, 3
  %vm3058 = vcmp.lt.s32.totalorder %v3036, 4
  %v3059 = vsel %vm3055, %v3039, %v3042
  %v3060 = vsel %vm3058, %v3048, 2102212464
  %v3061 = vsel %vm3057, %v3045, %v3060
  %v3062 = vsel %vm3056, %v3059, %v3061
  %v3063 = vsel %vm3055, %v3042, %v3045
  %v3064 = vsel %vm3058, %v3051, 920167782
  %v3065 = vsel %vm3057, %v3048, %v3064
  %v3066 = vsel %vm3056, %v3063, %v3065
  %v3067 = vsel %vm3055, %v3045, %v3048
  %v3068 = vsel %vm3058, %v3054, 1326507024
  %v3069 = vsel %vm3057, %v3051, %v3068
  %v3070 = vsel %vm3056, %v3067, %v3069
  %v3071 = vshll.u32 %v3031, 8
  %v3072 = vmul.u32.u64.compose %v3071, %v3070
  %v3073 = vextract.low.u32 %v3072
  %v3074 = vextract.high.u32 %v3072
  %v3075 = vmul.u32.u64.compose %v3071, %v3066
  %v3076 = vextract.low.u32 %v3075
  %v3077 = vextract.high.u32 %v3075
  %v3078 = vmul.u32 %v3071, %v3062
  %v3079 = vadd.s32 %v3074, %v3076
  %vm3080 = vc.u32 %v3074, %v3076
  %v3081 = vadd.s32 %v3077, 1
  %v3082 = vsel %vm3080, %v3081, %v3077
  %v3083 = vadd.s32 %v3078, %v3082
  %v3084 = vadd.s32 %v3083, 536870912
  %v3085 = vshrl.u32 %v3084, 30
  %v3086 = vshll.u32 %v3085, 30
  %v3087 = vsub.s32 %v3083, %v3086
  %vm3088 = vcmp.lt.s32.totalorder %v3087, 0
  %v3089 = vsub.s32 0, %v3087
  %v3090 = vsel %vm3088, %v3089, %v3087
  %v3091 = vclz %v3090
  %v3092 = vsub.s32 %v3091, 2
  %vm3093 = vcmp.gt.s32.totalorder 0, %v3092
  %v3094 = vsel %vm3093, 0, %v3092
  %v3095 = vsub.s32 32, %v3094
  %v3096 = vshll.u32 %v3087, %v3094
  %v3097 = vshrl.u32 %v3079, %v3095
  %v3098 = vor.u32 %v3096, %v3097
  %v3099 = vsub.s32 4294967266, %v3094
  %v3100 = vadd.s32 %v3099, 127
  %v3101 = vshll.u32 %v3100, 23
  %v3102 = vor.u32 4788187, %v3101
  %v3103 = vand.u32 2147483647, %v3102
  %v3105 = vcvt.s32.f32 %v3098
  %v3106 = vmul.f32 %v3105, %v3103
  %v3107 = vxor.u32 %v3106, 2147483648
  %v3108 = vsel %vm3025, %v3107, %v3106
  %v3109 = vsub.s32 4, %v3085
  %v3110 = vsel %vm3025, %v3109, %v3085
  %v3111 = vsel %vm3024, %v849, %v3108
  %v3112 = vsel %vm3024, 0, %v3110
  %v3113 = vcosq.f32.pop %v3111
  %v3114 = vsinq.f32.pop %v3111
  %vm3115 = vweird.f32 %v849
  %v3116 = vand.u32 %v3112, 3
  %vm3117 = vcmp.lt.s32.totalorder %v3116, 2
  %vm3118 = vcmp.eq.s32.totalorder %v3116, 0
  %v3119 = vxor.u32 %v3114, 2147483648
  %v3120 = vsel %vm3118, %v3113, %v3119
  %vm3121 = vcmp.eq.s32.totalorder %v3116, 2
  %v3122 = vxor.u32 %v3113, 2147483648
  %v3123 = vsel %vm3121, %v3122, %v3114
  %v3124 = vsel %vm3117, %v3120, %v3123
  %v3125 = vsel %vm3115, nan, %v3124
  %v3126 = vand.u32 2147483647, %v850
  %vm3127 = vcmp.le.f32.partialorder %v3126, 0.7853982
  %vm3128 = vcmp.lt.s32.totalorder %v850, 0
  %v3129 = vand.u32 %v850, 2139095040
  %v3130 = vshrl.u32 %v3129, 23
  %v3131 = vsub.s32 %v3130, 127
  %v3132 = vand.u32 2147483647, %v850
  %v3133 = vand.u32 %v3132, 8388607
  %v3134 = vor.u32 %v3133, 8388608
  %v3135 = vsub.s32 0, %v3134
  %v3136 = vadd.s32 %v3131, 1
  %vm3137 = vcmp.gt.s32.totalorder %v3136, 0
  %v3138 = vsel %vm3137, %v3136, 0
  %v3139 = vshrl.u32 %v3138, 5
  %v3140 = vand.u32 %v3138, 31
  %v3141 = vsub.s32 32, %v3140
  %v3142 = vshrl.u32 683565275, %v3141
  %v3143 = vshll.u32 683565275, %v3140
  %v3144 = vshrl.u32 2475754826, %v3141
  %v3145 = vor.u32 %v3143, %v3144
  %v3146 = vshll.u32 2475754826, %v3140
  %v3147 = vshrl.u32 2131351028, %v3141
  %v3148 = vor.u32 %v3146, %v3147
  %v3149 = vshll.u32 2131351028, %v3140
  %v3150 = vshrl.u32 2102212464, %v3141
  %v3151 = vor.u32 %v3149, %v3150
  %v3152 = vshll.u32 2102212464, %v3140
  %v3153 = vshrl.u32 920167782, %v3141
  %v3154 = vor.u32 %v3152, %v3153
  %v3155 = vshll.u32 920167782, %v3140
  %v3156 = vshrl.u32 1326507024, %v3141
  %v3157 = vor.u32 %v3155, %v3156
  %vm3158 = vcmp.lt.s32.totalorder %v3139, 1
  %vm3159 = vcmp.lt.s32.totalorder %v3139, 2
  %vm3160 = vcmp.lt.s32.totalorder %v3139, 3
  %vm3161 = vcmp.lt.s32.totalorder %v3139, 4
  %v3162 = vsel %vm3158, %v3142, %v3145
  %v3163 = vsel %vm3161, %v3151, 2102212464
  %v3164 = vsel %vm3160, %v3148, %v3163
  %v3165 = vsel %vm3159, %v3162, %v3164
  %v3166 = vsel %vm3158, %v3145, %v3148
  %v3167 = vsel %vm3161, %v3154, 920167782
  %v3168 = vsel %vm3160, %v3151, %v3167
  %v3169 = vsel %vm3159, %v3166, %v3168
  %v3170 = vsel %vm3158, %v3148, %v3151
  %v3171 = vsel %vm3161, %v3157, 1326507024
  %v3172 = vsel %vm3160, %v3154, %v3171
  %v3173 = vsel %vm3159, %v3170, %v3172
  %v3174 = vshll.u32 %v3134, 8
  %v3175 = vmul.u32.u64.compose %v3174, %v3173
  %v3176 = vextract.low.u32 %v3175
  %v3177 = vextract.high.u32 %v3175
  %v3178 = vmul.u32.u64.compose %v3174, %v3169
  %v3179 = vextract.low.u32 %v3178
  %v3180 = vextract.high.u32 %v3178
  %v3181 = vmul.u32 %v3174, %v3165
  %v3182 = vadd.s32 %v3177, %v3179
  %vm3183 = vc.u32 %v3177, %v3179
  %v3184 = vadd.s32 %v3180, 1
  %v3185 = vsel %vm3183, %v3184, %v3180
  %v3186 = vadd.s32 %v3181, %v3185
  %v3187 = vadd.s32 %v3186, 536870912
  %v3188 = vshrl.u32 %v3187, 30
  %v3189 = vshll.u32 %v3188, 30
  %v3190 = vsub.s32 %v3186, %v3189
  %vm3191 = vcmp.lt.s32.totalorder %v3190, 0
  %v3192 = vsub.s32 0, %v3190
  %v3193 = vsel %vm3191, %v3192, %v3190
  %v3194 = vclz %v3193
  %v3195 = vsub.s32 %v3194, 2
  %vm3196 = vcmp.gt.s32.totalorder 0, %v3195
  %v3197 = vsel %vm3196, 0, %v3195
  %v3198 = vsub.s32 32, %v3197
  %v3199 = vshll.u32 %v3190, %v3197
  %v3200 = vshrl.u32 %v3182, %v3198
  %v3201 = vor.u32 %v3199, %v3200
  %v3202 = vsub.s32 4294967266, %v3197
  %v3203 = vadd.s32 %v3202, 127
  %v3204 = vshll.u32 %v3203, 23
  %v3205 = vor.u32 4788187, %v3204
  %v3206 = vand.u32 2147483647, %v3205
  %v3208 = vcvt.s32.f32 %v3201
  %v3209 = vmul.f32 %v3208, %v3206
  %v3210 = vxor.u32 %v3209, 2147483648
  %v3211 = vsel %vm3128, %v3210, %v3209
  %v3212 = vsub.s32 4, %v3188
  %v3213 = vsel %vm3128, %v3212, %v3188
  %v3214 = vsel %vm3127, %v850, %v3211
  %v3215 = vsel %vm3127, 0, %v3213
  %v3216 = vcosq.f32.pop %v3214
  %v3217 = vsinq.f32.pop %v3214
  %vm3218 = vweird.f32 %v850
  %v3219 = vand.u32 %v3215, 3
  %vm3220 = vcmp.lt.s32.totalorder %v3219, 2
  %vm3221 = vcmp.eq.s32.totalorder %v3219, 0
  %v3222 = vxor.u32 %v3217, 2147483648
  %v3223 = vsel %vm3221, %v3216, %v3222
  %vm3224 = vcmp.eq.s32.totalorder %v3219, 2
  %v3225 = vxor.u32 %v3216, 2147483648
  %v3226 = vsel %vm3224, %v3225, %v3217
  %v3227 = vsel %vm3220, %v3223, %v3226
  %v3228 = vsel %vm3218, nan, %v3227
  %v3229 = vand.u32 2147483647, %v851
  %vm3230 = vcmp.le.f32.partialorder %v3229, 0.7853982
  %vm3231 = vcmp.lt.s32.totalorder %v851, 0
  %v3232 = vand.u32 %v851, 2139095040
  %v3233 = vshrl.u32 %v3232, 23
  %v3234 = vsub.s32 %v3233, 127
  %v3235 = vand.u32 2147483647, %v851
  %v3236 = vand.u32 %v3235, 8388607
  %v3237 = vor.u32 %v3236, 8388608
  %v3238 = vsub.s32 0, %v3237
  %v3239 = vadd.s32 %v3234, 1
  %vm3240 = vcmp.gt.s32.totalorder %v3239, 0
  %v3241 = vsel %vm3240, %v3239, 0
  %v3242 = vshrl.u32 %v3241, 5
  %v3243 = vand.u32 %v3241, 31
  %v3244 = vsub.s32 32, %v3243
  %v3245 = vshrl.u32 683565275, %v3244
  %v3246 = vshll.u32 683565275, %v3243
  %v3247 = vshrl.u32 2475754826, %v3244
  %v3248 = vor.u32 %v3246, %v3247
  %v3249 = vshll.u32 2475754826, %v3243
  %v3250 = vshrl.u32 2131351028, %v3244
  %v3251 = vor.u32 %v3249, %v3250
  %v3252 = vshll.u32 2131351028, %v3243
  %v3253 = vshrl.u32 2102212464, %v3244
  %v3254 = vor.u32 %v3252, %v3253
  %v3255 = vshll.u32 2102212464, %v3243
  %v3256 = vshrl.u32 920167782, %v3244
  %v3257 = vor.u32 %v3255, %v3256
  %v3258 = vshll.u32 920167782, %v3243
  %v3259 = vshrl.u32 1326507024, %v3244
  %v3260 = vor.u32 %v3258, %v3259
  %vm3261 = vcmp.lt.s32.totalorder %v3242, 1
  %vm3262 = vcmp.lt.s32.totalorder %v3242, 2
  %vm3263 = vcmp.lt.s32.totalorder %v3242, 3
  %vm3264 = vcmp.lt.s32.totalorder %v3242, 4
  %v3265 = vsel %vm3261, %v3245, %v3248
  %v3266 = vsel %vm3264, %v3254, 2102212464
  %v3267 = vsel %vm3263, %v3251, %v3266
  %v3268 = vsel %vm3262, %v3265, %v3267
  %v3269 = vsel %vm3261, %v3248, %v3251
  %v3270 = vsel %vm3264, %v3257, 920167782
  %v3271 = vsel %vm3263, %v3254, %v3270
  %v3272 = vsel %vm3262, %v3269, %v3271
  %v3273 = vsel %vm3261, %v3251, %v3254
  %v3274 = vsel %vm3264, %v3260, 1326507024
  %v3275 = vsel %vm3263, %v3257, %v3274
  %v3276 = vsel %vm3262, %v3273, %v3275
  %v3277 = vshll.u32 %v3237, 8
  %v3278 = vmul.u32.u64.compose %v3277, %v3276
  %v3279 = vextract.low.u32 %v3278
  %v3280 = vextract.high.u32 %v3278
  %v3281 = vmul.u32.u64.compose %v3277, %v3272
  %v3282 = vextract.low.u32 %v3281
  %v3283 = vextract.high.u32 %v3281
  %v3284 = vmul.u32 %v3277, %v3268
  %v3285 = vadd.s32 %v3280, %v3282
  %vm3286 = vc.u32 %v3280, %v3282
  %v3287 = vadd.s32 %v3283, 1
  %v3288 = vsel %vm3286, %v3287, %v3283
  %v3289 = vadd.s32 %v3284, %v3288
  %v3290 = vadd.s32 %v3289, 536870912
  %v3291 = vshrl.u32 %v3290, 30
  %v3292 = vshll.u32 %v3291, 30
  %v3293 = vsub.s32 %v3289, %v3292
  %vm3294 = vcmp.lt.s32.totalorder %v3293, 0
  %v3295 = vsub.s32 0, %v3293
  %v3296 = vsel %vm3294, %v3295, %v3293
  %v3297 = vclz %v3296
  %v3298 = vsub.s32 %v3297, 2
  %vm3299 = vcmp.gt.s32.totalorder 0, %v3298
  %v3300 = vsel %vm3299, 0, %v3298
  %v3301 = vsub.s32 32, %v3300
  %v3302 = vshll.u32 %v3293, %v3300
  %v3303 = vshrl.u32 %v3285, %v3301
  %v3304 = vor.u32 %v3302, %v3303
  %v3305 = vsub.s32 4294967266, %v3300
  %v3306 = vadd.s32 %v3305, 127
  %v3307 = vshll.u32 %v3306, 23
  %v3308 = vor.u32 4788187, %v3307
  %v3309 = vand.u32 2147483647, %v3308
  %v3311 = vcvt.s32.f32 %v3304
  %v3312 = vmul.f32 %v3311, %v3309
  %v3313 = vxor.u32 %v3312, 2147483648
  %v3314 = vsel %vm3231, %v3313, %v3312
  %v3315 = vsub.s32 4, %v3291
  %v3316 = vsel %vm3231, %v3315, %v3291
  %v3317 = vsel %vm3230, %v851, %v3314
  %v3318 = vsel %vm3230, 0, %v3316
  %v3319 = vcosq.f32.pop %v3317
  %v3320 = vsinq.f32.pop %v3317
  %vm3321 = vweird.f32 %v851
  %v3322 = vand.u32 %v3318, 3
  %vm3323 = vcmp.lt.s32.totalorder %v3322, 2
  %vm3324 = vcmp.eq.s32.totalorder %v3322, 0
  %v3325 = vxor.u32 %v3320, 2147483648
  %v3326 = vsel %vm3324, %v3319, %v3325
  %vm3327 = vcmp.eq.s32.totalorder %v3322, 2
  %v3328 = vxor.u32 %v3319, 2147483648
  %v3329 = vsel %vm3327, %v3328, %v3320
  %v3330 = vsel %vm3323, %v3326, %v3329
  %v3331 = vsel %vm3321, nan, %v3330
  %v3332 = vand.u32 2147483647, %v852
  %vm3333 = vcmp.le.f32.partialorder %v3332, 0.7853982
  %vm3334 = vcmp.lt.s32.totalorder %v852, 0
  %v3335 = vand.u32 %v852, 2139095040
  %v3336 = vshrl.u32 %v3335, 23
  %v3337 = vsub.s32 %v3336, 127
  %v3338 = vand.u32 2147483647, %v852
  %v3339 = vand.u32 %v3338, 8388607
  %v3340 = vor.u32 %v3339, 8388608
  %v3341 = vsub.s32 0, %v3340
  %v3342 = vadd.s32 %v3337, 1
  %vm3343 = vcmp.gt.s32.totalorder %v3342, 0
  %v3344 = vsel %vm3343, %v3342, 0
  %v3345 = vshrl.u32 %v3344, 5
  %v3346 = vand.u32 %v3344, 31
  %v3347 = vsub.s32 32, %v3346
  %v3348 = vshrl.u32 683565275, %v3347
  %v3349 = vshll.u32 683565275, %v3346
  %v3350 = vshrl.u32 2475754826, %v3347
  %v3351 = vor.u32 %v3349, %v3350
  %v3352 = vshll.u32 2475754826, %v3346
  %v3353 = vshrl.u32 2131351028, %v3347
  %v3354 = vor.u32 %v3352, %v3353
  %v3355 = vshll.u32 2131351028, %v3346
  %v3356 = vshrl.u32 2102212464, %v3347
  %v3357 = vor.u32 %v3355, %v3356
  %v3358 = vshll.u32 2102212464, %v3346
  %v3359 = vshrl.u32 920167782, %v3347
  %v3360 = vor.u32 %v3358, %v3359
  %v3361 = vshll.u32 920167782, %v3346
  %v3362 = vshrl.u32 1326507024, %v3347
  %v3363 = vor.u32 %v3361, %v3362
  %vm3364 = vcmp.lt.s32.totalorder %v3345, 1
  %vm3365 = vcmp.lt.s32.totalorder %v3345, 2
  %vm3366 = vcmp.lt.s32.totalorder %v3345, 3
  %vm3367 = vcmp.lt.s32.totalorder %v3345, 4
  %v3368 = vsel %vm3364, %v3348, %v3351
  %v3369 = vsel %vm3367, %v3357, 2102212464
  %v3370 = vsel %vm3366, %v3354, %v3369
  %v3371 = vsel %vm3365, %v3368, %v3370
  %v3372 = vsel %vm3364, %v3351, %v3354
  %v3373 = vsel %vm3367, %v3360, 920167782
  %v3374 = vsel %vm3366, %v3357, %v3373
  %v3375 = vsel %vm3365, %v3372, %v3374
  %v3376 = vsel %vm3364, %v3354, %v3357
  %v3377 = vsel %vm3367, %v3363, 1326507024
  %v3378 = vsel %vm3366, %v3360, %v3377
  %v3379 = vsel %vm3365, %v3376, %v3378
  %v3380 = vshll.u32 %v3340, 8
  %v3381 = vmul.u32.u64.compose %v3380, %v3379
  %v3382 = vextract.low.u32 %v3381
  %v3383 = vextract.high.u32 %v3381
  %v3384 = vmul.u32.u64.compose %v3380, %v3375
  %v3385 = vextract.low.u32 %v3384
  %v3386 = vextract.high.u32 %v3384
  %v3387 = vmul.u32 %v3380, %v3371
  %v3388 = vadd.s32 %v3383, %v3385
  %vm3389 = vc.u32 %v3383, %v3385
  %v3390 = vadd.s32 %v3386, 1
  %v3391 = vsel %vm3389, %v3390, %v3386
  %v3392 = vadd.s32 %v3387, %v3391
  %v3393 = vadd.s32 %v3392, 536870912
  %v3394 = vshrl.u32 %v3393, 30
  %v3395 = vshll.u32 %v3394, 30
  %v3396 = vsub.s32 %v3392, %v3395
  %vm3397 = vcmp.lt.s32.totalorder %v3396, 0
  %v3398 = vsub.s32 0, %v3396
  %v3399 = vsel %vm3397, %v3398, %v3396
  %v3400 = vclz %v3399
  %v3401 = vsub.s32 %v3400, 2
  %vm3402 = vcmp.gt.s32.totalorder 0, %v3401
  %v3403 = vsel %vm3402, 0, %v3401
  %v3404 = vsub.s32 32, %v3403
  %v3405 = vshll.u32 %v3396, %v3403
  %v3406 = vshrl.u32 %v3388, %v3404
  %v3407 = vor.u32 %v3405, %v3406
  %v3408 = vsub.s32 4294967266, %v3403
  %v3409 = vadd.s32 %v3408, 127
  %v3410 = vshll.u32 %v3409, 23
  %v3411 = vor.u32 4788187, %v3410
  %v3412 = vand.u32 2147483647, %v3411
  %v3414 = vcvt.s32.f32 %v3407
  %v3415 = vmul.f32 %v3414, %v3412
  %v3416 = vxor.u32 %v3415, 2147483648
  %v3417 = vsel %vm3334, %v3416, %v3415
  %v3418 = vsub.s32 4, %v3394
  %v3419 = vsel %vm3334, %v3418, %v3394
  %v3420 = vsel %vm3333, %v852, %v3417
  %v3421 = vsel %vm3333, 0, %v3419
  %v3422 = vcosq.f32.pop %v3420
  %v3423 = vsinq.f32.pop %v3420
  %vm3424 = vweird.f32 %v852
  %v3425 = vand.u32 %v3421, 3
  %vm3426 = vcmp.lt.s32.totalorder %v3425, 2
  %vm3427 = vcmp.eq.s32.totalorder %v3425, 0
  %v3428 = vxor.u32 %v3423, 2147483648
  %v3429 = vsel %vm3427, %v3422, %v3428
  %vm3430 = vcmp.eq.s32.totalorder %v3425, 2
  %v3431 = vxor.u32 %v3422, 2147483648
  %v3432 = vsel %vm3430, %v3431, %v3423
  %v3433 = vsel %vm3426, %v3429, %v3432
  %v3434 = vsel %vm3424, nan, %v3433
  %v3435 = vand.u32 2147483647, %v853
  %vm3436 = vcmp.le.f32.partialorder %v3435, 0.7853982
  %vm3437 = vcmp.lt.s32.totalorder %v853, 0
  %v3438 = vand.u32 %v853, 2139095040
  %v3439 = vshrl.u32 %v3438, 23
  %v3440 = vsub.s32 %v3439, 127
  %v3441 = vand.u32 2147483647, %v853
  %v3442 = vand.u32 %v3441, 8388607
  %v3443 = vor.u32 %v3442, 8388608
  %v3444 = vsub.s32 0, %v3443
  %v3445 = vadd.s32 %v3440, 1
  %vm3446 = vcmp.gt.s32.totalorder %v3445, 0
  %v3447 = vsel %vm3446, %v3445, 0
  %v3448 = vshrl.u32 %v3447, 5
  %v3449 = vand.u32 %v3447, 31
  %v3450 = vsub.s32 32, %v3449
  %v3451 = vshrl.u32 683565275, %v3450
  %v3452 = vshll.u32 683565275, %v3449
  %v3453 = vshrl.u32 2475754826, %v3450
  %v3454 = vor.u32 %v3452, %v3453
  %v3455 = vshll.u32 2475754826, %v3449
  %v3456 = vshrl.u32 2131351028, %v3450
  %v3457 = vor.u32 %v3455, %v3456
  %v3458 = vshll.u32 2131351028, %v3449
  %v3459 = vshrl.u32 2102212464, %v3450
  %v3460 = vor.u32 %v3458, %v3459
  %v3461 = vshll.u32 2102212464, %v3449
  %v3462 = vshrl.u32 920167782, %v3450
  %v3463 = vor.u32 %v3461, %v3462
  %v3464 = vshll.u32 920167782, %v3449
  %v3465 = vshrl.u32 1326507024, %v3450
  %v3466 = vor.u32 %v3464, %v3465
  %vm3467 = vcmp.lt.s32.totalorder %v3448, 1
  %vm3468 = vcmp.lt.s32.totalorder %v3448, 2
  %vm3469 = vcmp.lt.s32.totalorder %v3448, 3
  %vm3470 = vcmp.lt.s32.totalorder %v3448, 4
  %v3471 = vsel %vm3467, %v3451, %v3454
  %v3472 = vsel %vm3470, %v3460, 2102212464
  %v3473 = vsel %vm3469, %v3457, %v3472
  %v3474 = vsel %vm3468, %v3471, %v3473
  %v3475 = vsel %vm3467, %v3454, %v3457
  %v3476 = vsel %vm3470, %v3463, 920167782
  %v3477 = vsel %vm3469, %v3460, %v3476
  %v3478 = vsel %vm3468, %v3475, %v3477
  %v3479 = vsel %vm3467, %v3457, %v3460
  %v3480 = vsel %vm3470, %v3466, 1326507024
  %v3481 = vsel %vm3469, %v3463, %v3480
  %v3482 = vsel %vm3468, %v3479, %v3481
  %v3483 = vshll.u32 %v3443, 8
  %v3484 = vmul.u32.u64.compose %v3483, %v3482
  %v3485 = vextract.low.u32 %v3484
  %v3486 = vextract.high.u32 %v3484
  %v3487 = vmul.u32.u64.compose %v3483, %v3478
  %v3488 = vextract.low.u32 %v3487
  %v3489 = vextract.high.u32 %v3487
  %v3490 = vmul.u32 %v3483, %v3474
  %v3491 = vadd.s32 %v3486, %v3488
  %vm3492 = vc.u32 %v3486, %v3488
  %v3493 = vadd.s32 %v3489, 1
  %v3494 = vsel %vm3492, %v3493, %v3489
  %v3495 = vadd.s32 %v3490, %v3494
  %v3496 = vadd.s32 %v3495, 536870912
  %v3497 = vshrl.u32 %v3496, 30
  %v3498 = vshll.u32 %v3497, 30
  %v3499 = vsub.s32 %v3495, %v3498
  %vm3500 = vcmp.lt.s32.totalorder %v3499, 0
  %v3501 = vsub.s32 0, %v3499
  %v3502 = vsel %vm3500, %v3501, %v3499
  %v3503 = vclz %v3502
  %v3504 = vsub.s32 %v3503, 2
  %vm3505 = vcmp.gt.s32.totalorder 0, %v3504
  %v3506 = vsel %vm3505, 0, %v3504
  %v3507 = vsub.s32 32, %v3506
  %v3508 = vshll.u32 %v3499, %v3506
  %v3509 = vshrl.u32 %v3491, %v3507
  %v3510 = vor.u32 %v3508, %v3509
  %v3511 = vsub.s32 4294967266, %v3506
  %v3512 = vadd.s32 %v3511, 127
  %v3513 = vshll.u32 %v3512, 23
  %v3514 = vor.u32 4788187, %v3513
  %v3515 = vand.u32 2147483647, %v3514
  %v3517 = vcvt.s32.f32 %v3510
  %v3518 = vmul.f32 %v3517, %v3515
  %v3519 = vxor.u32 %v3518, 2147483648
  %v3520 = vsel %vm3437, %v3519, %v3518
  %v3521 = vsub.s32 4, %v3497
  %v3522 = vsel %vm3437, %v3521, %v3497
  %v3523 = vsel %vm3436, %v853, %v3520
  %v3524 = vsel %vm3436, 0, %v3522
  %v3525 = vcosq.f32.pop %v3523
  %v3526 = vsinq.f32.pop %v3523
  %vm3527 = vweird.f32 %v853
  %v3528 = vand.u32 %v3524, 3
  %vm3529 = vcmp.lt.s32.totalorder %v3528, 2
  %vm3530 = vcmp.eq.s32.totalorder %v3528, 0
  %v3531 = vxor.u32 %v3526, 2147483648
  %v3532 = vsel %vm3530, %v3525, %v3531
  %vm3533 = vcmp.eq.s32.totalorder %v3528, 2
  %v3534 = vxor.u32 %v3525, 2147483648
  %v3535 = vsel %vm3533, %v3534, %v3526
  %v3536 = vsel %vm3529, %v3532, %v3535
  %v3537 = vsel %vm3527, nan, %v3536
  %v3538 = vand.u32 2147483647, %v854
  %vm3539 = vcmp.le.f32.partialorder %v3538, 0.7853982
  %vm3540 = vcmp.lt.s32.totalorder %v854, 0
  %v3541 = vand.u32 %v854, 2139095040
  %v3542 = vshrl.u32 %v3541, 23
  %v3543 = vsub.s32 %v3542, 127
  %v3544 = vand.u32 2147483647, %v854
  %v3545 = vand.u32 %v3544, 8388607
  %v3546 = vor.u32 %v3545, 8388608
  %v3547 = vsub.s32 0, %v3546
  %v3548 = vadd.s32 %v3543, 1
  %vm3549 = vcmp.gt.s32.totalorder %v3548, 0
  %v3550 = vsel %vm3549, %v3548, 0
  %v3551 = vshrl.u32 %v3550, 5
  %v3552 = vand.u32 %v3550, 31
  %v3553 = vsub.s32 32, %v3552
  %v3554 = vshrl.u32 683565275, %v3553
  %v3555 = vshll.u32 683565275, %v3552
  %v3556 = vshrl.u32 2475754826, %v3553
  %v3557 = vor.u32 %v3555, %v3556
  %v3558 = vshll.u32 2475754826, %v3552
  %v3559 = vshrl.u32 2131351028, %v3553
  %v3560 = vor.u32 %v3558, %v3559
  %v3561 = vshll.u32 2131351028, %v3552
  %v3562 = vshrl.u32 2102212464, %v3553
  %v3563 = vor.u32 %v3561, %v3562
  %v3564 = vshll.u32 2102212464, %v3552
  %v3565 = vshrl.u32 920167782, %v3553
  %v3566 = vor.u32 %v3564, %v3565
  %v3567 = vshll.u32 920167782, %v3552
  %v3568 = vshrl.u32 1326507024, %v3553
  %v3569 = vor.u32 %v3567, %v3568
  %vm3570 = vcmp.lt.s32.totalorder %v3551, 1
  %vm3571 = vcmp.lt.s32.totalorder %v3551, 2
  %vm3572 = vcmp.lt.s32.totalorder %v3551, 3
  %vm3573 = vcmp.lt.s32.totalorder %v3551, 4
  %v3574 = vsel %vm3570, %v3554, %v3557
  %v3575 = vsel %vm3573, %v3563, 2102212464
  %v3576 = vsel %vm3572, %v3560, %v3575
  %v3577 = vsel %vm3571, %v3574, %v3576
  %v3578 = vsel %vm3570, %v3557, %v3560
  %v3579 = vsel %vm3573, %v3566, 920167782
  %v3580 = vsel %vm3572, %v3563, %v3579
  %v3581 = vsel %vm3571, %v3578, %v3580
  %v3582 = vsel %vm3570, %v3560, %v3563
  %v3583 = vsel %vm3573, %v3569, 1326507024
  %v3584 = vsel %vm3572, %v3566, %v3583
  %v3585 = vsel %vm3571, %v3582, %v3584
  %v3586 = vshll.u32 %v3546, 8
  %v3587 = vmul.u32.u64.compose %v3586, %v3585
  %v3588 = vextract.low.u32 %v3587
  %v3589 = vextract.high.u32 %v3587
  %v3590 = vmul.u32.u64.compose %v3586, %v3581
  %v3591 = vextract.low.u32 %v3590
  %v3592 = vextract.high.u32 %v3590
  %v3593 = vmul.u32 %v3586, %v3577
  %v3594 = vadd.s32 %v3589, %v3591
  %vm3595 = vc.u32 %v3589, %v3591
  %v3596 = vadd.s32 %v3592, 1
  %v3597 = vsel %vm3595, %v3596, %v3592
  %v3598 = vadd.s32 %v3593, %v3597
  %v3599 = vadd.s32 %v3598, 536870912
  %v3600 = vshrl.u32 %v3599, 30
  %v3601 = vshll.u32 %v3600, 30
  %v3602 = vsub.s32 %v3598, %v3601
  %vm3603 = vcmp.lt.s32.totalorder %v3602, 0
  %v3604 = vsub.s32 0, %v3602
  %v3605 = vsel %vm3603, %v3604, %v3602
  %v3606 = vclz %v3605
  %v3607 = vsub.s32 %v3606, 2
  %vm3608 = vcmp.gt.s32.totalorder 0, %v3607
  %v3609 = vsel %vm3608, 0, %v3607
  %v3610 = vsub.s32 32, %v3609
  %v3611 = vshll.u32 %v3602, %v3609
  %v3612 = vshrl.u32 %v3594, %v3610
  %v3613 = vor.u32 %v3611, %v3612
  %v3614 = vsub.s32 4294967266, %v3609
  %v3615 = vadd.s32 %v3614, 127
  %v3616 = vshll.u32 %v3615, 23
  %v3617 = vor.u32 4788187, %v3616
  %v3618 = vand.u32 2147483647, %v3617
  %v3620 = vcvt.s32.f32 %v3613
  %v3621 = vmul.f32 %v3620, %v3618
  %v3622 = vxor.u32 %v3621, 2147483648
  %v3623 = vsel %vm3540, %v3622, %v3621
  %v3624 = vsub.s32 4, %v3600
  %v3625 = vsel %vm3540, %v3624, %v3600
  %v3626 = vsel %vm3539, %v854, %v3623
  %v3627 = vsel %vm3539, 0, %v3625
  %v3628 = vcosq.f32.pop %v3626
  %v3629 = vsinq.f32.pop %v3626
  %vm3630 = vweird.f32 %v854
  %v3631 = vand.u32 %v3627, 3
  %vm3632 = vcmp.lt.s32.totalorder %v3631, 2
  %vm3633 = vcmp.eq.s32.totalorder %v3631, 0
  %v3634 = vxor.u32 %v3629, 2147483648
  %v3635 = vsel %vm3633, %v3628, %v3634
  %vm3636 = vcmp.eq.s32.totalorder %v3631, 2
  %v3637 = vxor.u32 %v3628, 2147483648
  %v3638 = vsel %vm3636, %v3637, %v3629
  %v3639 = vsel %vm3632, %v3635, %v3638
  %v3640 = vsel %vm3630, nan, %v3639
  %v3641 = vand.u32 2147483647, %v855
  %vm3642 = vcmp.le.f32.partialorder %v3641, 0.7853982
  %vm3643 = vcmp.lt.s32.totalorder %v855, 0
  %v3644 = vand.u32 %v855, 2139095040
  %v3645 = vshrl.u32 %v3644, 23
  %v3646 = vsub.s32 %v3645, 127
  %v3647 = vand.u32 2147483647, %v855
  %v3648 = vand.u32 %v3647, 8388607
  %v3649 = vor.u32 %v3648, 8388608
  %v3650 = vsub.s32 0, %v3649
  %v3651 = vadd.s32 %v3646, 1
  %vm3652 = vcmp.gt.s32.totalorder %v3651, 0
  %v3653 = vsel %vm3652, %v3651, 0
  %v3654 = vshrl.u32 %v3653, 5
  %v3655 = vand.u32 %v3653, 31
  %v3656 = vsub.s32 32, %v3655
  %v3657 = vshrl.u32 683565275, %v3656
  %v3658 = vshll.u32 683565275, %v3655
  %v3659 = vshrl.u32 2475754826, %v3656
  %v3660 = vor.u32 %v3658, %v3659
  %v3661 = vshll.u32 2475754826, %v3655
  %v3662 = vshrl.u32 2131351028, %v3656
  %v3663 = vor.u32 %v3661, %v3662
  %v3664 = vshll.u32 2131351028, %v3655
  %v3665 = vshrl.u32 2102212464, %v3656
  %v3666 = vor.u32 %v3664, %v3665
  %v3667 = vshll.u32 2102212464, %v3655
  %v3668 = vshrl.u32 920167782, %v3656
  %v3669 = vor.u32 %v3667, %v3668
  %v3670 = vshll.u32 920167782, %v3655
  %v3671 = vshrl.u32 1326507024, %v3656
  %v3672 = vor.u32 %v3670, %v3671
  %vm3673 = vcmp.lt.s32.totalorder %v3654, 1
  %vm3674 = vcmp.lt.s32.totalorder %v3654, 2
  %vm3675 = vcmp.lt.s32.totalorder %v3654, 3
  %vm3676 = vcmp.lt.s32.totalorder %v3654, 4
  %v3677 = vsel %vm3673, %v3657, %v3660
  %v3678 = vsel %vm3676, %v3666, 2102212464
  %v3679 = vsel %vm3675, %v3663, %v3678
  %v3680 = vsel %vm3674, %v3677, %v3679
  %v3681 = vsel %vm3673, %v3660, %v3663
  %v3682 = vsel %vm3676, %v3669, 920167782
  %v3683 = vsel %vm3675, %v3666, %v3682
  %v3684 = vsel %vm3674, %v3681, %v3683
  %v3685 = vsel %vm3673, %v3663, %v3666
  %v3686 = vsel %vm3676, %v3672, 1326507024
  %v3687 = vsel %vm3675, %v3669, %v3686
  %v3688 = vsel %vm3674, %v3685, %v3687
  %v3689 = vshll.u32 %v3649, 8
  %v3690 = vmul.u32.u64.compose %v3689, %v3688
  %v3691 = vextract.low.u32 %v3690
  %v3692 = vextract.high.u32 %v3690
  %v3693 = vmul.u32.u64.compose %v3689, %v3684
  %v3694 = vextract.low.u32 %v3693
  %v3695 = vextract.high.u32 %v3693
  %v3696 = vmul.u32 %v3689, %v3680
  %v3697 = vadd.s32 %v3692, %v3694
  %vm3698 = vc.u32 %v3692, %v3694
  %v3699 = vadd.s32 %v3695, 1
  %v3700 = vsel %vm3698, %v3699, %v3695
  %v3701 = vadd.s32 %v3696, %v3700
  %v3702 = vadd.s32 %v3701, 536870912
  %v3703 = vshrl.u32 %v3702, 30
  %v3704 = vshll.u32 %v3703, 30
  %v3705 = vsub.s32 %v3701, %v3704
  %vm3706 = vcmp.lt.s32.totalorder %v3705, 0
  %v3707 = vsub.s32 0, %v3705
  %v3708 = vsel %vm3706, %v3707, %v3705
  %v3709 = vclz %v3708
  %v3710 = vsub.s32 %v3709, 2
  %vm3711 = vcmp.gt.s32.totalorder 0, %v3710
  %v3712 = vsel %vm3711, 0, %v3710
  %v3713 = vsub.s32 32, %v3712
  %v3714 = vshll.u32 %v3705, %v3712
  %v3715 = vshrl.u32 %v3697, %v3713
  %v3716 = vor.u32 %v3714, %v3715
  %v3717 = vsub.s32 4294967266, %v3712
  %v3718 = vadd.s32 %v3717, 127
  %v3719 = vshll.u32 %v3718, 23
  %v3720 = vor.u32 4788187, %v3719
  %v3721 = vand.u32 2147483647, %v3720
  %v3723 = vcvt.s32.f32 %v3716
  %v3724 = vmul.f32 %v3723, %v3721
  %v3725 = vxor.u32 %v3724, 2147483648
  %v3726 = vsel %vm3643, %v3725, %v3724
  %v3727 = vsub.s32 4, %v3703
  %v3728 = vsel %vm3643, %v3727, %v3703
  %v3729 = vsel %vm3642, %v855, %v3726
  %v3730 = vsel %vm3642, 0, %v3728
  %v3731 = vcosq.f32.pop %v3729
  %v3732 = vsinq.f32.pop %v3729
  %vm3733 = vweird.f32 %v855
  %v3734 = vand.u32 %v3730, 3
  %vm3735 = vcmp.lt.s32.totalorder %v3734, 2
  %vm3736 = vcmp.eq.s32.totalorder %v3734, 0
  %v3737 = vxor.u32 %v3732, 2147483648
  %v3738 = vsel %vm3736, %v3731, %v3737
  %vm3739 = vcmp.eq.s32.totalorder %v3734, 2
  %v3740 = vxor.u32 %v3731, 2147483648
  %v3741 = vsel %vm3739, %v3740, %v3732
  %v3742 = vsel %vm3735, %v3738, %v3741
  %v3743 = vsel %vm3733, nan, %v3742
  %v3744 = vand.u32 2147483647, %v856
  %vm3745 = vcmp.le.f32.partialorder %v3744, 0.7853982
  %vm3746 = vcmp.lt.s32.totalorder %v856, 0
  %v3747 = vand.u32 %v856, 2139095040
  %v3748 = vshrl.u32 %v3747, 23
  %v3749 = vsub.s32 %v3748, 127
  %v3750 = vand.u32 2147483647, %v856
  %v3751 = vand.u32 %v3750, 8388607
  %v3752 = vor.u32 %v3751, 8388608
  %v3753 = vsub.s32 0, %v3752
  %v3754 = vadd.s32 %v3749, 1
  %vm3755 = vcmp.gt.s32.totalorder %v3754, 0
  %v3756 = vsel %vm3755, %v3754, 0
  %v3757 = vshrl.u32 %v3756, 5
  %v3758 = vand.u32 %v3756, 31
  %v3759 = vsub.s32 32, %v3758
  %v3760 = vshrl.u32 683565275, %v3759
  %v3761 = vshll.u32 683565275, %v3758
  %v3762 = vshrl.u32 2475754826, %v3759
  %v3763 = vor.u32 %v3761, %v3762
  %v3764 = vshll.u32 2475754826, %v3758
  %v3765 = vshrl.u32 2131351028, %v3759
  %v3766 = vor.u32 %v3764, %v3765
  %v3767 = vshll.u32 2131351028, %v3758
  %v3768 = vshrl.u32 2102212464, %v3759
  %v3769 = vor.u32 %v3767, %v3768
  %v3770 = vshll.u32 2102212464, %v3758
  %v3771 = vshrl.u32 920167782, %v3759
  %v3772 = vor.u32 %v3770, %v3771
  %v3773 = vshll.u32 920167782, %v3758
  %v3774 = vshrl.u32 1326507024, %v3759
  %v3775 = vor.u32 %v3773, %v3774
  %vm3776 = vcmp.lt.s32.totalorder %v3757, 1
  %vm3777 = vcmp.lt.s32.totalorder %v3757, 2
  %vm3778 = vcmp.lt.s32.totalorder %v3757, 3
  %vm3779 = vcmp.lt.s32.totalorder %v3757, 4
  %v3780 = vsel %vm3776, %v3760, %v3763
  %v3781 = vsel %vm3779, %v3769, 2102212464
  %v3782 = vsel %vm3778, %v3766, %v3781
  %v3783 = vsel %vm3777, %v3780, %v3782
  %v3784 = vsel %vm3776, %v3763, %v3766
  %v3785 = vsel %vm3779, %v3772, 920167782
  %v3786 = vsel %vm3778, %v3769, %v3785
  %v3787 = vsel %vm3777, %v3784, %v3786
  %v3788 = vsel %vm3776, %v3766, %v3769
  %v3789 = vsel %vm3779, %v3775, 1326507024
  %v3790 = vsel %vm3778, %v3772, %v3789
  %v3791 = vsel %vm3777, %v3788, %v3790
  %v3792 = vshll.u32 %v3752, 8
  %v3793 = vmul.u32.u64.compose %v3792, %v3791
  %v3794 = vextract.low.u32 %v3793
  %v3795 = vextract.high.u32 %v3793
  %v3796 = vmul.u32.u64.compose %v3792, %v3787
  %v3797 = vextract.low.u32 %v3796
  %v3798 = vextract.high.u32 %v3796
  %v3799 = vmul.u32 %v3792, %v3783
  %v3800 = vadd.s32 %v3795, %v3797
  %vm3801 = vc.u32 %v3795, %v3797
  %v3802 = vadd.s32 %v3798, 1
  %v3803 = vsel %vm3801, %v3802, %v3798
  %v3804 = vadd.s32 %v3799, %v3803
  %v3805 = vadd.s32 %v3804, 536870912
  %v3806 = vshrl.u32 %v3805, 30
  %v3807 = vshll.u32 %v3806, 30
  %v3808 = vsub.s32 %v3804, %v3807
  %vm3809 = vcmp.lt.s32.totalorder %v3808, 0
  %v3810 = vsub.s32 0, %v3808
  %v3811 = vsel %vm3809, %v3810, %v3808
  %v3812 = vclz %v3811
  %v3813 = vsub.s32 %v3812, 2
  %vm3814 = vcmp.gt.s32.totalorder 0, %v3813
  %v3815 = vsel %vm3814, 0, %v3813
  %v3816 = vsub.s32 32, %v3815
  %v3817 = vshll.u32 %v3808, %v3815
  %v3818 = vshrl.u32 %v3800, %v3816
  %v3819 = vor.u32 %v3817, %v3818
  %v3820 = vsub.s32 4294967266, %v3815
  %v3821 = vadd.s32 %v3820, 127
  %v3822 = vshll.u32 %v3821, 23
  %v3823 = vor.u32 4788187, %v3822
  %v3824 = vand.u32 2147483647, %v3823
  %v3826 = vcvt.s32.f32 %v3819
  %v3827 = vmul.f32 %v3826, %v3824
  %v3828 = vxor.u32 %v3827, 2147483648
  %v3829 = vsel %vm3746, %v3828, %v3827
  %v3830 = vsub.s32 4, %v3806
  %v3831 = vsel %vm3746, %v3830, %v3806
  %v3832 = vsel %vm3745, %v856, %v3829
  %v3833 = vsel %vm3745, 0, %v3831
  %v3834 = vcosq.f32.pop %v3832
  %v3835 = vsinq.f32.pop %v3832
  %vm3836 = vweird.f32 %v856
  %v3837 = vand.u32 %v3833, 3
  %vm3838 = vcmp.lt.s32.totalorder %v3837, 2
  %vm3839 = vcmp.eq.s32.totalorder %v3837, 0
  %v3840 = vxor.u32 %v3835, 2147483648
  %v3841 = vsel %vm3839, %v3834, %v3840
  %vm3842 = vcmp.eq.s32.totalorder %v3837, 2
  %v3843 = vxor.u32 %v3834, 2147483648
  %v3844 = vsel %vm3842, %v3843, %v3835
  %v3845 = vsel %vm3838, %v3841, %v3844
  %v3846 = vsel %vm3836, nan, %v3845
  %v3847 = vand.u32 2147483647, %v857
  %vm3848 = vcmp.le.f32.partialorder %v3847, 0.7853982
  %vm3849 = vcmp.lt.s32.totalorder %v857, 0
  %v3850 = vand.u32 %v857, 2139095040
  %v3851 = vshrl.u32 %v3850, 23
  %v3852 = vsub.s32 %v3851, 127
  %v3853 = vand.u32 2147483647, %v857
  %v3854 = vand.u32 %v3853, 8388607
  %v3855 = vor.u32 %v3854, 8388608
  %v3856 = vsub.s32 0, %v3855
  %v3857 = vadd.s32 %v3852, 1
  %vm3858 = vcmp.gt.s32.totalorder %v3857, 0
  %v3859 = vsel %vm3858, %v3857, 0
  %v3860 = vshrl.u32 %v3859, 5
  %v3861 = vand.u32 %v3859, 31
  %v3862 = vsub.s32 32, %v3861
  %v3863 = vshrl.u32 683565275, %v3862
  %v3864 = vshll.u32 683565275, %v3861
  %v3865 = vshrl.u32 2475754826, %v3862
  %v3866 = vor.u32 %v3864, %v3865
  %v3867 = vshll.u32 2475754826, %v3861
  %v3868 = vshrl.u32 2131351028, %v3862
  %v3869 = vor.u32 %v3867, %v3868
  %v3870 = vshll.u32 2131351028, %v3861
  %v3871 = vshrl.u32 2102212464, %v3862
  %v3872 = vor.u32 %v3870, %v3871
  %v3873 = vshll.u32 2102212464, %v3861
  %v3874 = vshrl.u32 920167782, %v3862
  %v3875 = vor.u32 %v3873, %v3874
  %v3876 = vshll.u32 920167782, %v3861
  %v3877 = vshrl.u32 1326507024, %v3862
  %v3878 = vor.u32 %v3876, %v3877
  %vm3879 = vcmp.lt.s32.totalorder %v3860, 1
  %vm3880 = vcmp.lt.s32.totalorder %v3860, 2
  %vm3881 = vcmp.lt.s32.totalorder %v3860, 3
  %vm3882 = vcmp.lt.s32.totalorder %v3860, 4
  %v3883 = vsel %vm3879, %v3863, %v3866
  %v3884 = vsel %vm3882, %v3872, 2102212464
  %v3885 = vsel %vm3881, %v3869, %v3884
  %v3886 = vsel %vm3880, %v3883, %v3885
  %v3887 = vsel %vm3879, %v3866, %v3869
  %v3888 = vsel %vm3882, %v3875, 920167782
  %v3889 = vsel %vm3881, %v3872, %v3888
  %v3890 = vsel %vm3880, %v3887, %v3889
  %v3891 = vsel %vm3879, %v3869, %v3872
  %v3892 = vsel %vm3882, %v3878, 1326507024
  %v3893 = vsel %vm3881, %v3875, %v3892
  %v3894 = vsel %vm3880, %v3891, %v3893
  %v3895 = vshll.u32 %v3855, 8
  %v3896 = vmul.u32.u64.compose %v3895, %v3894
  %v3897 = vextract.low.u32 %v3896
  %v3898 = vextract.high.u32 %v3896
  %v3899 = vmul.u32.u64.compose %v3895, %v3890
  %v3900 = vextract.low.u32 %v3899
  %v3901 = vextract.high.u32 %v3899
  %v3902 = vmul.u32 %v3895, %v3886
  %v3903 = vadd.s32 %v3898, %v3900
  %vm3904 = vc.u32 %v3898, %v3900
  %v3905 = vadd.s32 %v3901, 1
  %v3906 = vsel %vm3904, %v3905, %v3901
  %v3907 = vadd.s32 %v3902, %v3906
  %v3908 = vadd.s32 %v3907, 536870912
  %v3909 = vshrl.u32 %v3908, 30
  %v3910 = vshll.u32 %v3909, 30
  %v3911 = vsub.s32 %v3907, %v3910
  %vm3912 = vcmp.lt.s32.totalorder %v3911, 0
  %v3913 = vsub.s32 0, %v3911
  %v3914 = vsel %vm3912, %v3913, %v3911
  %v3915 = vclz %v3914
  %v3916 = vsub.s32 %v3915, 2
  %vm3917 = vcmp.gt.s32.totalorder 0, %v3916
  %v3918 = vsel %vm3917, 0, %v3916
  %v3919 = vsub.s32 32, %v3918
  %v3920 = vshll.u32 %v3911, %v3918
  %v3921 = vshrl.u32 %v3903, %v3919
  %v3922 = vor.u32 %v3920, %v3921
  %v3923 = vsub.s32 4294967266, %v3918
  %v3924 = vadd.s32 %v3923, 127
  %v3925 = vshll.u32 %v3924, 23
  %v3926 = vor.u32 4788187, %v3925
  %v3927 = vand.u32 2147483647, %v3926
  %v3929 = vcvt.s32.f32 %v3922
  %v3930 = vmul.f32 %v3929, %v3927
  %v3931 = vxor.u32 %v3930, 2147483648
  %v3932 = vsel %vm3849, %v3931, %v3930
  %v3933 = vsub.s32 4, %v3909
  %v3934 = vsel %vm3849, %v3933, %v3909
  %v3935 = vsel %vm3848, %v857, %v3932
  %v3936 = vsel %vm3848, 0, %v3934
  %v3937 = vcosq.f32.pop %v3935
  %v3938 = vsinq.f32.pop %v3935
  %vm3939 = vweird.f32 %v857
  %v3940 = vand.u32 %v3936, 3
  %vm3941 = vcmp.lt.s32.totalorder %v3940, 2
  %vm3942 = vcmp.eq.s32.totalorder %v3940, 0
  %v3943 = vxor.u32 %v3938, 2147483648
  %v3944 = vsel %vm3942, %v3937, %v3943
  %vm3945 = vcmp.eq.s32.totalorder %v3940, 2
  %v3946 = vxor.u32 %v3937, 2147483648
  %v3947 = vsel %vm3945, %v3946, %v3938
  %v3948 = vsel %vm3941, %v3944, %v3947
  %v3949 = vsel %vm3939, nan, %v3948
  %v3950 = vand.u32 2147483647, %v858
  %vm3951 = vcmp.le.f32.partialorder %v3950, 0.7853982
  %vm3952 = vcmp.lt.s32.totalorder %v858, 0
  %v3953 = vand.u32 %v858, 2139095040
  %v3954 = vshrl.u32 %v3953, 23
  %v3955 = vsub.s32 %v3954, 127
  %v3956 = vand.u32 2147483647, %v858
  %v3957 = vand.u32 %v3956, 8388607
  %v3958 = vor.u32 %v3957, 8388608
  %v3959 = vsub.s32 0, %v3958
  %v3960 = vadd.s32 %v3955, 1
  %vm3961 = vcmp.gt.s32.totalorder %v3960, 0
  %v3962 = vsel %vm3961, %v3960, 0
  %v3963 = vshrl.u32 %v3962, 5
  %v3964 = vand.u32 %v3962, 31
  %v3965 = vsub.s32 32, %v3964
  %v3966 = vshrl.u32 683565275, %v3965
  %v3967 = vshll.u32 683565275, %v3964
  %v3968 = vshrl.u32 2475754826, %v3965
  %v3969 = vor.u32 %v3967, %v3968
  %v3970 = vshll.u32 2475754826, %v3964
  %v3971 = vshrl.u32 2131351028, %v3965
  %v3972 = vor.u32 %v3970, %v3971
  %v3973 = vshll.u32 2131351028, %v3964
  %v3974 = vshrl.u32 2102212464, %v3965
  %v3975 = vor.u32 %v3973, %v3974
  %v3976 = vshll.u32 2102212464, %v3964
  %v3977 = vshrl.u32 920167782, %v3965
  %v3978 = vor.u32 %v3976, %v3977
  %v3979 = vshll.u32 920167782, %v3964
  %v3980 = vshrl.u32 1326507024, %v3965
  %v3981 = vor.u32 %v3979, %v3980
  %vm3982 = vcmp.lt.s32.totalorder %v3963, 1
  %vm3983 = vcmp.lt.s32.totalorder %v3963, 2
  %vm3984 = vcmp.lt.s32.totalorder %v3963, 3
  %vm3985 = vcmp.lt.s32.totalorder %v3963, 4
  %v3986 = vsel %vm3982, %v3966, %v3969
  %v3987 = vsel %vm3985, %v3975, 2102212464
  %v3988 = vsel %vm3984, %v3972, %v3987
  %v3989 = vsel %vm3983, %v3986, %v3988
  %v3990 = vsel %vm3982, %v3969, %v3972
  %v3991 = vsel %vm3985, %v3978, 920167782
  %v3992 = vsel %vm3984, %v3975, %v3991
  %v3993 = vsel %vm3983, %v3990, %v3992
  %v3994 = vsel %vm3982, %v3972, %v3975
  %v3995 = vsel %vm3985, %v3981, 1326507024
  %v3996 = vsel %vm3984, %v3978, %v3995
  %v3997 = vsel %vm3983, %v3994, %v3996
  %v3998 = vshll.u32 %v3958, 8
  %v3999 = vmul.u32.u64.compose %v3998, %v3997
  %v4000 = vextract.low.u32 %v3999
  %v4001 = vextract.high.u32 %v3999
  %v4002 = vmul.u32.u64.compose %v3998, %v3993
  %v4003 = vextract.low.u32 %v4002
  %v4004 = vextract.high.u32 %v4002
  %v4005 = vmul.u32 %v3998, %v3989
  %v4006 = vadd.s32 %v4001, %v4003
  %vm4007 = vc.u32 %v4001, %v4003
  %v4008 = vadd.s32 %v4004, 1
  %v4009 = vsel %vm4007, %v4008, %v4004
  %v4010 = vadd.s32 %v4005, %v4009
  %v4011 = vadd.s32 %v4010, 536870912
  %v4012 = vshrl.u32 %v4011, 30
  %v4013 = vshll.u32 %v4012, 30
  %v4014 = vsub.s32 %v4010, %v4013
  %vm4015 = vcmp.lt.s32.totalorder %v4014, 0
  %v4016 = vsub.s32 0, %v4014
  %v4017 = vsel %vm4015, %v4016, %v4014
  %v4018 = vclz %v4017
  %v4019 = vsub.s32 %v4018, 2
  %vm4020 = vcmp.gt.s32.totalorder 0, %v4019
  %v4021 = vsel %vm4020, 0, %v4019
  %v4022 = vsub.s32 32, %v4021
  %v4023 = vshll.u32 %v4014, %v4021
  %v4024 = vshrl.u32 %v4006, %v4022
  %v4025 = vor.u32 %v4023, %v4024
  %v4026 = vsub.s32 4294967266, %v4021
  %v4027 = vadd.s32 %v4026, 127
  %v4028 = vshll.u32 %v4027, 23
  %v4029 = vor.u32 4788187, %v4028
  %v4030 = vand.u32 2147483647, %v4029
  %v4032 = vcvt.s32.f32 %v4025
  %v4033 = vmul.f32 %v4032, %v4030
  %v4034 = vxor.u32 %v4033, 2147483648
  %v4035 = vsel %vm3952, %v4034, %v4033
  %v4036 = vsub.s32 4, %v4012
  %v4037 = vsel %vm3952, %v4036, %v4012
  %v4038 = vsel %vm3951, %v858, %v4035
  %v4039 = vsel %vm3951, 0, %v4037
  %v4040 = vcosq.f32.pop %v4038
  %v4041 = vsinq.f32.pop %v4038
  %vm4042 = vweird.f32 %v858
  %v4043 = vand.u32 %v4039, 3
  %vm4044 = vcmp.lt.s32.totalorder %v4043, 2
  %vm4045 = vcmp.eq.s32.totalorder %v4043, 0
  %v4046 = vxor.u32 %v4041, 2147483648
  %v4047 = vsel %vm4045, %v4040, %v4046
  %vm4048 = vcmp.eq.s32.totalorder %v4043, 2
  %v4049 = vxor.u32 %v4040, 2147483648
  %v4050 = vsel %vm4048, %v4049, %v4041
  %v4051 = vsel %vm4044, %v4047, %v4050
  %v4052 = vsel %vm4042, nan, %v4051
  %v4053 = vand.u32 2147483647, %v859
  %vm4054 = vcmp.le.f32.partialorder %v4053, 0.7853982
  %vm4055 = vcmp.lt.s32.totalorder %v859, 0
  %v4056 = vand.u32 %v859, 2139095040
  %v4057 = vshrl.u32 %v4056, 23
  %v4058 = vsub.s32 %v4057, 127
  %v4059 = vand.u32 2147483647, %v859
  %v4060 = vand.u32 %v4059, 8388607
  %v4061 = vor.u32 %v4060, 8388608
  %v4062 = vsub.s32 0, %v4061
  %v4063 = vadd.s32 %v4058, 1
  %vm4064 = vcmp.gt.s32.totalorder %v4063, 0
  %v4065 = vsel %vm4064, %v4063, 0
  %v4066 = vshrl.u32 %v4065, 5
  %v4067 = vand.u32 %v4065, 31
  %v4068 = vsub.s32 32, %v4067
  %v4069 = vshrl.u32 683565275, %v4068
  %v4070 = vshll.u32 683565275, %v4067
  %v4071 = vshrl.u32 2475754826, %v4068
  %v4072 = vor.u32 %v4070, %v4071
  %v4073 = vshll.u32 2475754826, %v4067
  %v4074 = vshrl.u32 2131351028, %v4068
  %v4075 = vor.u32 %v4073, %v4074
  %v4076 = vshll.u32 2131351028, %v4067
  %v4077 = vshrl.u32 2102212464, %v4068
  %v4078 = vor.u32 %v4076, %v4077
  %v4079 = vshll.u32 2102212464, %v4067
  %v4080 = vshrl.u32 920167782, %v4068
  %v4081 = vor.u32 %v4079, %v4080
  %v4082 = vshll.u32 920167782, %v4067
  %v4083 = vshrl.u32 1326507024, %v4068
  %v4084 = vor.u32 %v4082, %v4083
  %vm4085 = vcmp.lt.s32.totalorder %v4066, 1
  %vm4086 = vcmp.lt.s32.totalorder %v4066, 2
  %vm4087 = vcmp.lt.s32.totalorder %v4066, 3
  %vm4088 = vcmp.lt.s32.totalorder %v4066, 4
  %v4089 = vsel %vm4085, %v4069, %v4072
  %v4090 = vsel %vm4088, %v4078, 2102212464
  %v4091 = vsel %vm4087, %v4075, %v4090
  %v4092 = vsel %vm4086, %v4089, %v4091
  %v4093 = vsel %vm4085, %v4072, %v4075
  %v4094 = vsel %vm4088, %v4081, 920167782
  %v4095 = vsel %vm4087, %v4078, %v4094
  %v4096 = vsel %vm4086, %v4093, %v4095
  %v4097 = vsel %vm4085, %v4075, %v4078
  %v4098 = vsel %vm4088, %v4084, 1326507024
  %v4099 = vsel %vm4087, %v4081, %v4098
  %v4100 = vsel %vm4086, %v4097, %v4099
  %v4101 = vshll.u32 %v4061, 8
  %v4102 = vmul.u32.u64.compose %v4101, %v4100
  %v4103 = vextract.low.u32 %v4102
  %v4104 = vextract.high.u32 %v4102
  %v4105 = vmul.u32.u64.compose %v4101, %v4096
  %v4106 = vextract.low.u32 %v4105
  %v4107 = vextract.high.u32 %v4105
  %v4108 = vmul.u32 %v4101, %v4092
  %v4109 = vadd.s32 %v4104, %v4106
  %vm4110 = vc.u32 %v4104, %v4106
  %v4111 = vadd.s32 %v4107, 1
  %v4112 = vsel %vm4110, %v4111, %v4107
  %v4113 = vadd.s32 %v4108, %v4112
  %v4114 = vadd.s32 %v4113, 536870912
  %v4115 = vshrl.u32 %v4114, 30
  %v4116 = vshll.u32 %v4115, 30
  %v4117 = vsub.s32 %v4113, %v4116
  %vm4118 = vcmp.lt.s32.totalorder %v4117, 0
  %v4119 = vsub.s32 0, %v4117
  %v4120 = vsel %vm4118, %v4119, %v4117
  %v4121 = vclz %v4120
  %v4122 = vsub.s32 %v4121, 2
  %vm4123 = vcmp.gt.s32.totalorder 0, %v4122
  %v4124 = vsel %vm4123, 0, %v4122
  %v4125 = vsub.s32 32, %v4124
  %v4126 = vshll.u32 %v4117, %v4124
  %v4127 = vshrl.u32 %v4109, %v4125
  %v4128 = vor.u32 %v4126, %v4127
  %v4129 = vsub.s32 4294967266, %v4124
  %v4130 = vadd.s32 %v4129, 127
  %v4131 = vshll.u32 %v4130, 23
  %v4132 = vor.u32 4788187, %v4131
  %v4133 = vand.u32 2147483647, %v4132
  %v4135 = vcvt.s32.f32 %v4128
  %v4136 = vmul.f32 %v4135, %v4133
  %v4137 = vxor.u32 %v4136, 2147483648
  %v4138 = vsel %vm4055, %v4137, %v4136
  %v4139 = vsub.s32 4, %v4115
  %v4140 = vsel %vm4055, %v4139, %v4115
  %v4141 = vsel %vm4054, %v859, %v4138
  %v4142 = vsel %vm4054, 0, %v4140
  %v4143 = vcosq.f32.pop %v4141
  %v4144 = vsinq.f32.pop %v4141
  %vm4145 = vweird.f32 %v859
  %v4146 = vand.u32 %v4142, 3
  %vm4147 = vcmp.lt.s32.totalorder %v4146, 2
  %vm4148 = vcmp.eq.s32.totalorder %v4146, 0
  %v4149 = vxor.u32 %v4144, 2147483648
  %v4150 = vsel %vm4148, %v4143, %v4149
  %vm4151 = vcmp.eq.s32.totalorder %v4146, 2
  %v4152 = vxor.u32 %v4143, 2147483648
  %v4153 = vsel %vm4151, %v4152, %v4144
  %v4154 = vsel %vm4147, %v4150, %v4153
  %v4155 = vsel %vm4145, nan, %v4154
  %4156 = vst [vmem:[#allocation2] sm:$0xff] %v962
  %4157 = vst [vmem:[#allocation2 + $0x8] sm:$0xff] %v1065
  %4158 = vst [vmem:[#allocation2 + $0x10] sm:$0xff] %v1168
  %4159 = vst [vmem:[#allocation2 + $0x18] sm:$0xff] %v1271
  %4160 = vst [vmem:[#allocation2 + $0x20] sm:$0xff] %v1374
  %4161 = vst [vmem:[#allocation2 + $0x28] sm:$0xff] %v1477
  %4162 = vst [vmem:[#allocation2 + $0x30] sm:$0xff] %v1580
  %4163 = vst [vmem:[#allocation2 + $0x38] sm:$0xff] %v1683
  %4164 = vst [vmem:[#allocation2 + $0x40] sm:$0xff] %v1786
  %4165 = vst [vmem:[#allocation2 + $0x48] sm:$0xff] %v1889
  %4166 = vst [vmem:[#allocation2 + $0x50] sm:$0xff] %v1992
  %4167 = vst [vmem:[#allocation2 + $0x58] sm:$0xff] %v2095
  %4168 = vst [vmem:[#allocation2 + $0x60] sm:$0xff] %v2198
  %4169 = vst [vmem:[#allocation2 + $0x68] sm:$0xff] %v2301
  %4170 = vst [vmem:[#allocation2 + $0x70] sm:$0xff] %v2404
  %4171 = vst [vmem:[#allocation2 + $0x78] sm:$0xff] %v2507
  %4172 = vst [vmem:[#allocation2 + $0x80] sm:$0xff] %v2610
  %4173 = vst [vmem:[#allocation2 + $0x88] sm:$0xff] %v2713
  %4174 = vst [vmem:[#allocation2 + $0x90] sm:$0xff] %v2816
  %4175 = vst [vmem:[#allocation2 + $0x98] sm:$0xff] %v2919
  %4176 = vst [vmem:[#allocation2 + $0xa0] sm:$0xff] %v3022
  %4177 = vst [vmem:[#allocation2 + $0xa8] sm:$0xff] %v3125
  %4178 = vst [vmem:[#allocation2 + $0xb0] sm:$0xff] %v3228
  %4179 = vst [vmem:[#allocation2 + $0xb8] sm:$0xff] %v3331
  %4180 = vst [vmem:[#allocation2 + $0xc0] sm:$0xff] %v3434
  %4181 = vst [vmem:[#allocation2 + $0xc8] sm:$0xff] %v3537
  %4182 = vst [vmem:[#allocation2 + $0xd0] sm:$0xff] %v3640
  %4183 = vst [vmem:[#allocation2 + $0xd8] sm:$0xff] %v3743
  %4184 = vst [vmem:[#allocation2 + $0xe0] sm:$0xff] %v3846
  %4185 = vst [vmem:[#allocation2 + $0xe8] sm:$0xff] %v3949
  %4186 = vst [vmem:[#allocation2 + $0xf0] sm:$0xff] %v4052
  %4187 = vst [vmem:[#allocation2 + $0xf8] sm:$0xff] %v4155
  %v4188 = vlaneseq
  %v4189 = vand.u32 %v4188, 127
  loop: start=0, step=1, limit=128
  $region30: #{_lambda_.1} parent=0 // loop_pre_header
    _
  $region31: #{_lambda_.1} parent=0 // loop_header
    %s4191 = sphi 0, %s4195
    %p4192 = scmp.ge.s32.totalorder %s4191, 128
    %v4196 = vphi %v674, %v4234
  $region32: #{_lambda_.1} parent=0 // loop_header_branch
    %4194 = sbr.rel (%p4192) target = $region36
  $region33: #{_lambda_.1} parent=0 // loop_body
    %s4197 = sadd.s32 %s33, %s4191
    %s4198 = sld [smem:[#allocation4 + %s4197]]
    %s4199 = smul.u32 %s4198, 2
    %s4200 = smul.addr %s4199, 8
    %s4201 = scalar_lea.vmem %s7, %s4200
    %v4202 = vld [vmem:[%s4201] sm:$0xff]
    %v4203 = vld [vmem:[%s4201 + $0x8] sm:$0xff]
    %s4204 = sshra.s32 %s4191, 3
    %s4205 = sand.u32 %s4191, 7
    %s4206 = sshra.s32 %s4191, 3
    %s4207 = sand.u32 %s4191, 7
    %s4208 = smul.u32 %s4204, 2
    %s4209 = smul.u32 %s4208, 8
    %s4210 = sadd.s32 %s4209, %s4207
    %s4211 = scalar_lea.vmem [#allocation2], %s4210
    %v4212 = vld [vmem:[%s4211] ss:$8 sm:$0x3]
    %v4214 = vlaneseq
    %v4215 = vshrl.u32 %v4214, 7
    %v4216 = vsub.s32 0, %v4215
    %v4217 = vrot.slane %v4212, %v4216
    %v4218 = vlaneseq
    %v4219 = vshrl.u32 %v4218, 7
    %v4220 = vsub.s32 1, %v4219
    %v4221 = vrot.slane %v4212, %v4220
    %v4224 = vmul.f32 %v4202, %v4217
    %v4225 = vmul.f32 %v4203, %v4221
    %v4226 = vadd.f32 %v4224, %v4225
    %4227 = vadd.xlane.f32.xlu0 %v4226
    %v4228 = vpop.xlane.xlu0 %4227
    %v4229 = vstv %s4191
    %vm4230 = vcmp.eq.s32.totalorder %v4189, %v4229
    %v4231 = vsel %vm4230, 1, 0
    %v4232 = vcvt.s32.f32 %v4231
    %v4233 = vmul.f32 %v4228, %v4232
    %v4234 = vadd.f32 %v4196, %v4233
  $region34: #{_lambda_.1} parent=0 // loop_footer
    %s4195 = sadd.s32 1, %s4191
  $region35: #{_lambda_.1} parent=0 // loop_footer_branch
    %4190 = sbr.rel target = $region31
  $region36: #{_lambda_.1} parent=0 // loop_exit
    _
  %4235 = vst [vmem:[%s8] sm:$0xff] %v4196
  // Predicated region
  $region37: #{_lambda_.1} parent=0 // pred_check
    _
  $region38: #{_lambda_.1} parent=0 // pred_check_branch
    %4237 = sbr.rel (0) target = $region40
  $region39: #{_lambda_.1} parent=0 // pred_region
    _
  $region40: #{_lambda_.1} parent=0 // pred_fallthru
    _
  // Predicated region
  $region41: #{_lambda_.1} parent=0 // pred_check
    _
  $region42: #{_lambda_.1} parent=0 // pred_check_branch
    %4239 = sbr.rel (0) target = $region44
  $region43: #{_lambda_.1} parent=0 // pred_region
    _
  $region44: #{_lambda_.1} parent=0 // pred_fallthru
    _

</llo_original>
